<compile_context>
chip_gen: v7x
topology: tpu7x:2x2x1
jax: 0.10.0
libtpu: 0.0.40
codegen_flags: <defaults>
</compile_context>

<pallas_src>
import math
import numpy as np

import jax
import jax.numpy as jnp
from jax.experimental import pallas as pl
from jax.experimental.pallas import tpu as pltpu

# ------------------------- model hyper-parameters (BiFormer defaults) --------
TCR_NUM = 100
AA_NUM = 24
FEATURE_NUM = 15
KERNEL_SIZE = [2, 3, 4, 5, 6, 7]
FILTER_NUM = [3, 3, 3, 2, 2, 1]
ALL_FILTER = sum(FILTER_NUM)               # 14
HEADS = 1
HID = 10                                   # attention_hidden_size
HEAD_SIZE = HID // HEADS                   # 10
TOPK = int(TCR_NUM * 0.05)                 # 5

D_IN = FEATURE_NUM * AA_NUM                # 360 flattened per-TCR input
D_INP = 384                                # padded to 3*128
POS_PAD = 32                               # conv output positions padded (max real = 23)
N_FILT_PAD = 16                            # 14 filters + 2 dummy (power of 2 for folding)
SLAB_COLS = POS_PAD * N_FILT_PAD           # 512 = 4*128 (lane = t*16 + f)
HIDP = 16                                  # per-tensor Q/K/V segment width (HID=10 zero-padded)
TP = 128                                   # TCR axis padded to a full tile
NEG_INF = -1e30                            # python float -> jaxpr literal
TIE_EPS = 1e-5                             # deterministic key tie-break (min index wins)


# ------------------------------- fused kernel --------------------------------
def biformer_kernel(x_ref, wslab_ref, bmask_ref, wqkv_ref, bqkv_ref,
                    keybias_ref, rowmask_ref, wam_ref, bam_ref,
                    logits_ref, probs_ref):
    bb = x_ref.shape[0]                    # batch elements per grid step
    rows = bb * TP

    # ---- stage 1: all Conv1d as one wide bf16 matmul -------------------------
    x2 = x_ref[...].reshape(rows, D_INP)                                     # bf16
    y = jnp.dot(x2, wslab_ref[...], preferred_element_type=jnp.float32)      # (rows, 512) f32
    y = y + bmask_ref[...]                       # conv bias; -1e30 at invalid/dummy columns

    # ReLU + AdaptiveMaxPool1d(1): columns are position-major / filter-minor
    # (lane = t*16 + f), so folding the lane axis in half 5 times reduces over
    # positions only (all slices static, first folds 128-lane aligned).
    for half in (256, 128, 64, 32, 16):
        y = jnp.maximum(y[:, :half], y[:, half:2 * half])
    feat = jnp.maximum(y, 0.0).astype(jnp.bfloat16)                          # (rows, 16)  relu(max)==max(relu)

    # ---- stage 2: fused Q/K/V projection (1/sqrt(head_size) folded into Q) ---
    qkv = (jnp.dot(feat, wqkv_ref[...], preferred_element_type=jnp.float32)
           + bqkv_ref[...]).astype(jnp.bfloat16)                             # (rows, 48)
    qkv = qkv.reshape(bb, TP, 3 * HIDP)
    qb = qkv[:, :, 0 * HIDP:1 * HIDP]          # padded lanes are exactly zero,
    kb = qkv[:, :, 1 * HIDP:2 * HIDP]          # so contracting over 16 == over 10
    vb = qkv[:, :, 2 * HIDP:3 * HIDP]

    scores = jnp.einsum('bqh,bkh->bqk', qb, kb,
                        preferred_element_type=jnp.float32)                  # (bb, TP, TP) f32
    # additive key bias: -j*eps tie-break on valid keys, -1e30 on padded keys
    masked = scores + keybias_ref[...]

    # iterative top-k (descending); single XLU reduce per rank, unique one-hot
    # via the tie-break bias.  Selection state kept f32 (v5e-safe).
    m0 = None
    u = None
    e_cols = []
    for j in range(TOPK):
        m = jnp.max(masked, axis=-1, keepdims=True)                          # (bb, TP, 1)
        oh = masked == m                                                     # unique one-hot
        if j == 0:
            m0 = m                                                           # rank-0 max
        e = jnp.exp(m - m0)                                                  # <= 1
        e_cols.append(e)
        contrib = jnp.where(oh, e, 0.0)
        u = contrib if u is None else u + contrib
        if j + 1 < TOPK:
            masked = jnp.where(oh, NEG_INF, masked)

    denom = e_cols[0]
    for e in e_cols[1:]:
        denom = denom + e
    # fold the padded-query-row mask into the softmax normalizer (EUP reciprocal)
    inv = pl.reciprocal(denom, approx=True) * rowmask_ref[...]               # (bb, TP, 1)

    # context: normalize AFTER the matmul (row-wise scalar, exact)
    ctx = jnp.einsum('bqk,bkh->bqh', u.astype(jnp.bfloat16), vb,
                     preferred_element_type=jnp.float32) * inv               # (bb, TP, HIDP)

    # fused attn_fc∘mil_fc applied after the masked row-sum (exact rewrite)
    ctx_sum = jnp.sum(ctx, axis=1)                                           # (bb, HIDP)
    logits = jnp.dot(ctx_sum, wam_ref[...], preferred_element_type=jnp.float32)
    logits_ref[...] = (logits * (1.0 / TCR_NUM) + bam_ref[...]).reshape(1, bb, 2)

    # lane-dense attention-prob output: (TOPK, bb*TP)
    probs3 = jnp.concatenate(e_cols, axis=-1) * inv                          # (bb, TP, TOPK)
    probs_ref[...] = jnp.transpose(probs3.reshape(rows, TOPK), (1, 0))


# ----------------------------- parameter setup -------------------------------
def init_params(key):
    params = {}

    # Conv1d weights per kernel size (PyTorch-style uniform init bounds).
    conv_w, conv_b = [], []
    for idx, h in enumerate(KERNEL_SIZE):
        key, k1, k2 = jax.random.split(key, 3)
        bound = 1.0 / math.sqrt(FEATURE_NUM * h)
        conv_w.append(np.asarray(jax.random.uniform(
            k1, (FILTER_NUM[idx], FEATURE_NUM, h), minval=-bound, maxval=bound,
            dtype=jnp.float32)))
        conv_b.append(np.asarray(jax.random.uniform(
            k2, (FILTER_NUM[idx],), minval=-bound, maxval=bound, dtype=jnp.float32)))

    # Unfold all convs into one (384, 512) slab.  Column t*16 + f holds the
    # weights producing output position t of filter f; invalid positions and the
    # two dummy filters carry a -1e30 "bias" so they can never win the max-pool.
    w_slab = np.zeros((D_INP, SLAB_COLS), np.float32)
    b_mask = np.full((1, SLAB_COLS), NEG_INF, np.float32)
    fg = 0
    for idx, h in enumerate(KERNEL_SIZE):
        L = AA_NUM - h + 1
        for fo in range(FILTER_NUM[idx]):
            w = conv_w[idx][fo]                              # (FEATURE_NUM, h)
            for t in range(L):
                col = t * N_FILT_PAD + fg
                b_mask[0, col] = conv_b[idx][fo]
                for c in range(FEATURE_NUM):
                    for kk in range(h):
                        w_slab[c * AA_NUM + t + kk, col] = w[c, kk]
            fg += 1
    params["conv_w_slab"] = jnp.asarray(w_slab).astype(jnp.bfloat16)   # bf16 MXU path
    params["conv_b_mask"] = jnp.asarray(b_mask)                        # f32 bias / -1e30 mask

    def linear(k, fan_in, fan_out):
        k1, k2 = jax.random.split(k)
        bound = 1.0 / math.sqrt(fan_in)
        w = np.asarray(jax.random.uniform(k1, (fan_in, fan_out),
                                          minval=-bound, maxval=bound, dtype=jnp.float32))
        b = np.asarray(jax.random.uniform(k2, (fan_out,),
                                          minval=-bound, maxval=bound, dtype=jnp.float32))
        return w, b

    key, kq, kk_, kv, ka, km = jax.random.split(key, 6)
    wq, bq = linear(kq, ALL_FILTER, HID)
    wk, bk = linear(kk_, ALL_FILTER, HID)
    wv, bv = linear(kv, ALL_FILTER, HID)
    wa, ba = linear(ka, HID, ALL_FILTER)
    wm, bm = linear(km, ALL_FILTER, 2)

    # fused Q/K/V slab: 16-lane aligned segments, score scale folded into Q
    scale = 1.0 / math.sqrt(HEAD_SIZE)
    wqkv = np.zeros((N_FILT_PAD, 3 * HIDP), np.float32)
    bqkv = np.zeros((1, 3 * HIDP), np.float32)
    wqkv[:ALL_FILTER, 0 * HIDP:0 * HIDP + HID] = wq * scale
    wqkv[:ALL_FILTER, 1 * HIDP:1 * HIDP + HID] = wk
    wqkv[:ALL_FILTER, 2 * HIDP:2 * HIDP + HID] = wv
    bqkv[0, 0 * HIDP:0 * HIDP + HID] = bq * scale
    bqkv[0, 1 * HIDP:1 * HIDP + HID] = bk
    bqkv[0, 2 * HIDP:2 * HIDP + HID] = bv
    params["wqkv"] = jnp.asarray(wqkv).astype(jnp.bfloat16)
    params["bqkv"] = jnp.asarray(bqkv)

    # fused attn_fc @ mil_fc (both affine, no nonlinearity in between)
    wam = np.zeros((HIDP, 2), np.float32)
    wam[:HID, :] = wa @ wm
    bam = (ba[None, :] @ wm + bm[None, :]).astype(np.float32)
    params["wam"] = jnp.asarray(wam)
    params["bam"] = jnp.asarray(bam)

    # additive key bias: deterministic min-index tie-break on valid keys,
    # -1e30 on padded key columns
    kb_arr = np.full((1, TP), NEG_INF, np.float32)
    kb_arr[0, :TCR_NUM] = -TIE_EPS * np.arange(TCR_NUM, dtype=np.float32)
    params["key_bias"] = jnp.asarray(kb_arr)

    # valid query-row mask (folded into the softmax reciprocal)
    rm = np.zeros((TP, 1), np.float32)
    rm[:TCR_NUM, 0] = 1.0
    params["row_mask"] = jnp.asarray(rm)
    return params


# --------------------------------- wrapper ------------------------------------
def biformer_forward(x, params):
    B = x.shape[0]
    if B >= 16:
        bb = 8
    else:
        bb = max(1, B // 2)                 # >=2 parallel grid steps (v7x: both TCs busy)
    b_pad = ((B + bb - 1) // bb) * bb
    n_steps = b_pad // bb

    # flatten per-TCR features, cast bf16, pad features 360->384, TCRs 100->128
    x2 = x.reshape(B, TCR_NUM, D_IN).astype(jnp.bfloat16)
    x2 = jnp.pad(x2, ((0, b_pad - B), (0, TP - TCR_NUM), (0, D_INP - D_IN)))

    const2 = lambda b: (0, 0)
    in_specs = [
        pl.BlockSpec((bb, TP, D_INP), lambda b: (b, 0, 0)),   # x (bf16)
        pl.BlockSpec((D_INP, SLAB_COLS), const2),             # conv weight slab (bf16)
        pl.BlockSpec((1, SLAB_COLS), const2),                 # conv bias / -inf mask (f32)
        pl.BlockSpec((N_FILT_PAD, 3 * HIDP), const2),         # fused QKV weights (bf16)
        pl.BlockSpec((1, 3 * HIDP), const2),                  # fused QKV bias (f32)
        pl.BlockSpec((1, TP), const2),                        # key bias (tie-break / -inf)
        pl.BlockSpec((TP, 1), const2),                        # valid query-row mask
        pl.BlockSpec((HIDP, 2), const2),                      # fused attn_fc@mil_fc weight
        pl.BlockSpec((1, 2), const2),                         # fused bias
    ]
    out_specs = [
        pl.BlockSpec((1, bb, 2), lambda b: (b, 0, 0)),        # logits per grid step
        pl.BlockSpec((TOPK, bb * TP), lambda b: (0, b)),      # lane-dense attention probs
    ]

    logits3, probs_t = pl.pallas_call(
        biformer_kernel,
        grid=(n_steps,),
        in_specs=in_specs,
        out_specs=out_specs,
        out_shape=(
            jax.ShapeDtypeStruct((n_steps, bb, 2), jnp.float32),
            jax.ShapeDtypeStruct((TOPK, b_pad * TP), jnp.float32),
        ),
        compiler_params=pltpu.CompilerParams(
            dimension_semantics=("parallel",),
            vmem_limit_bytes=32 * 1024 * 1024,
        ),
    )(x2, params["conv_w_slab"], params["conv_b_mask"],
      params["wqkv"], params["bqkv"], params["key_bias"], params["row_mask"],
      params["wam"], params["bam"])

    out = logits3.reshape(b_pad, 2)[:B]                                     # (B, 2)
    probs3 = probs_t.reshape(TOPK, b_pad, TP)[:, :B, :TCR_NUM]              # (K, B, T)
    probs = jnp.transpose(probs3, (1, 2, 0))                                # (B, T, K)
    attn_probs = probs.reshape(B, HEADS, TCR_NUM, 1, TOPK)                  # torch (B,1,T,1,K)
    return out, attn_probs


biformer_forward_jit = jax.jit(biformer_forward)


# ----------------------------------- main --------------------------------------
if __name__ == "__main__":
    key = jax.random.PRNGKey(0)
    kx, kp = jax.random.split(key)

    B = 2
    x = jax.random.normal(kx, (B, TCR_NUM, FEATURE_NUM, AA_NUM), dtype=jnp.float32)
    params = init_params(kp)

    out, attn_probs = biformer_forward_jit(x, params)
    out = jax.block_until_ready(out)
    attn_probs = jax.block_until_ready(attn_probs)

    assert out.shape == (B, 2)
    assert attn_probs.shape == (B, HEADS, TCR_NUM, 1, TOPK)
    assert bool(jnp.all(jnp.isfinite(out)))
    # attention probabilities should sum to ~1 over the top-k axis
    # (approx EUP reciprocal -> loose tolerance)
    assert bool(jnp.allclose(jnp.sum(attn_probs, axis=-1), 1.0, atol=1e-2))

    print("KERNEL_OK")
</pallas_src>

<mosaic_0001>
module attributes {stable_mosaic.version = 11 : i64} {
  func.func @biformer_kernel(%arg0: i32, %arg1: memref<1x128x384xbf16, #tpu.memory_space<vmem>>, %arg2: memref<384x512xbf16, #tpu.memory_space<vmem>>, %arg3: memref<1x512xf32, #tpu.memory_space<vmem>>, %arg4: memref<16x48xbf16, #tpu.memory_space<vmem>>, %arg5: memref<1x48xf32, #tpu.memory_space<vmem>>, %arg6: memref<1x128xf32, #tpu.memory_space<vmem>>, %arg7: memref<128x1xf32, #tpu.memory_space<vmem>>, %arg8: memref<16x2xf32, #tpu.memory_space<vmem>>, %arg9: memref<1x2xf32, #tpu.memory_space<vmem>>, %arg10: memref<1x1x2xf32, #tpu.memory_space<vmem>>, %arg11: memref<5x128xf32, #tpu.memory_space<vmem>>) attributes {dimension_semantics = [#tpu.dimension_semantics<parallel>], iteration_bounds = array<i64: 2>, scalar_prefetch = 0 : i64, scratch_operands = 0 : i64, tpu.core_type = #tpu.core_type<tc>, window_params = [{transform_indices = @transform_0, window_bounds = array<i64: 1, 128, 384>}, {pipeline_mode = #tpu.pipeline_mode<synchronous>, transform_indices = @transform_1, window_bounds = array<i64: 384, 512>}, {pipeline_mode = #tpu.pipeline_mode<synchronous>, transform_indices = @transform_2, window_bounds = array<i64: 1, 512>}, {pipeline_mode = #tpu.pipeline_mode<synchronous>, transform_indices = @transform_3, window_bounds = array<i64: 16, 48>}, {pipeline_mode = #tpu.pipeline_mode<synchronous>, transform_indices = @transform_4, window_bounds = array<i64: 1, 48>}, {pipeline_mode = #tpu.pipeline_mode<synchronous>, transform_indices = @transform_5, window_bounds = array<i64: 1, 128>}, {pipeline_mode = #tpu.pipeline_mode<synchronous>, transform_indices = @transform_6, window_bounds = array<i64: 128, 1>}, {pipeline_mode = #tpu.pipeline_mode<synchronous>, transform_indices = @transform_7, window_bounds = array<i64: 16, 2>}, {pipeline_mode = #tpu.pipeline_mode<synchronous>, transform_indices = @transform_8, window_bounds = array<i64: 1, 2>}, {transform_indices = @transform_9, window_bounds = array<i64: 1, 1, 2>}, {transform_indices = @transform_10, window_bounds = array<i64: 5, 128>}]} {
    %c0 = arith.constant 0 : index
    %c0_0 = arith.constant 0 : index
    %c0_1 = arith.constant 0 : index
    %0 = vector.load %arg1[%c0, %c0_0, %c0_1] : memref<1x128x384xbf16, #tpu.memory_space<vmem>>, vector<1x128x384xbf16>
    %1 = vector.shape_cast %0 : vector<1x128x384xbf16> to vector<128x384xbf16>
    %c0_2 = arith.constant 0 : index
    %c0_3 = arith.constant 0 : index
    %2 = vector.load %arg2[%c0_2, %c0_3] : memref<384x512xbf16, #tpu.memory_space<vmem>>, vector<384x512xbf16>
    %cst = arith.constant dense<0.000000e+00> : vector<128x512xf32>
    %3 = tpu.matmul %1, %2, %cst {dimension_numbers = #tpu.dot_dimension_numbers<[1], [0], [0], [1], [0, 0, 1, 1], [], []>} : vector<128x384xbf16>, vector<384x512xbf16>, vector<128x512xf32> -> vector<128x512xf32>
    %c0_4 = arith.constant 0 : index
    %c0_5 = arith.constant 0 : index
    %4 = vector.load %arg3[%c0_4, %c0_5] : memref<1x512xf32, #tpu.memory_space<vmem>>, vector<1x512xf32>
    %5 = vector.broadcast %4 : vector<1x512xf32> to vector<128x512xf32>
    %6 = arith.addf %3, %5 : vector<128x512xf32>
    %7 = vector.extract_strided_slice %6 {offsets = [0, 0], sizes = [128, 256], strides = [1, 1]} : vector<128x512xf32> to vector<128x256xf32>
    %8 = vector.extract_strided_slice %6 {offsets = [0, 256], sizes = [128, 256], strides = [1, 1]} : vector<128x512xf32> to vector<128x256xf32>
    %9 = arith.maximumf %7, %8 : vector<128x256xf32>
    %10 = vector.extract_strided_slice %9 {offsets = [0, 0], sizes = [128, 128], strides = [1, 1]} : vector<128x256xf32> to vector<128x128xf32>
    %11 = vector.extract_strided_slice %9 {offsets = [0, 128], sizes = [128, 128], strides = [1, 1]} : vector<128x256xf32> to vector<128x128xf32>
    %12 = arith.maximumf %10, %11 : vector<128x128xf32>
    %13 = vector.extract_strided_slice %12 {offsets = [0, 0], sizes = [128, 64], strides = [1, 1]} : vector<128x128xf32> to vector<128x64xf32>
    %14 = vector.extract_strided_slice %12 {offsets = [0, 64], sizes = [128, 64], strides = [1, 1]} : vector<128x128xf32> to vector<128x64xf32>
    %15 = arith.maximumf %13, %14 : vector<128x64xf32>
    %16 = vector.extract_strided_slice %15 {offsets = [0, 0], sizes = [128, 32], strides = [1, 1]} : vector<128x64xf32> to vector<128x32xf32>
    %17 = vector.extract_strided_slice %15 {offsets = [0, 32], sizes = [128, 32], strides = [1, 1]} : vector<128x64xf32> to vector<128x32xf32>
    %18 = arith.maximumf %16, %17 : vector<128x32xf32>
    %19 = vector.extract_strided_slice %18 {offsets = [0, 0], sizes = [128, 16], strides = [1, 1]} : vector<128x32xf32> to vector<128x16xf32>
    %20 = vector.extract_strided_slice %18 {offsets = [0, 16], sizes = [128, 16], strides = [1, 1]} : vector<128x32xf32> to vector<128x16xf32>
    %21 = arith.maximumf %19, %20 : vector<128x16xf32>
    %cst_6 = arith.constant 0.000000e+00 : f32
    %22 = vector.broadcast %cst_6 : f32 to vector<128x16xf32>
    %23 = arith.maximumf %21, %22 : vector<128x16xf32>
    %24 = arith.truncf %23 : vector<128x16xf32> to vector<128x16xbf16>
    %c0_7 = arith.constant 0 : index
    %c0_8 = arith.constant 0 : index
    %25 = vector.load %arg4[%c0_7, %c0_8] : memref<16x48xbf16, #tpu.memory_space<vmem>>, vector<16x48xbf16>
    %cst_9 = arith.constant dense<0.000000e+00> : vector<128x48xf32>
    %26 = tpu.matmul %24, %25, %cst_9 {dimension_numbers = #tpu.dot_dimension_numbers<[1], [0], [0], [1], [0, 0, 1, 1], [], []>} : vector<128x16xbf16>, vector<16x48xbf16>, vector<128x48xf32> -> vector<128x48xf32>
    %c0_10 = arith.constant 0 : index
    %c0_11 = arith.constant 0 : index
    %27 = vector.load %arg5[%c0_10, %c0_11] : memref<1x48xf32, #tpu.memory_space<vmem>>, vector<1x48xf32>
    %28 = vector.broadcast %27 : vector<1x48xf32> to vector<128x48xf32>
    %29 = arith.addf %26, %28 : vector<128x48xf32>
    %30 = arith.truncf %29 : vector<128x48xf32> to vector<128x48xbf16>
    %31 = vector.shape_cast %30 : vector<128x48xbf16> to vector<1x128x48xbf16>
    %32 = vector.extract_strided_slice %31 {offsets = [0, 0, 0], sizes = [1, 128, 16], strides = [1, 1, 1]} : vector<1x128x48xbf16> to vector<1x128x16xbf16>
    %33 = vector.extract_strided_slice %31 {offsets = [0, 0, 16], sizes = [1, 128, 16], strides = [1, 1, 1]} : vector<1x128x48xbf16> to vector<1x128x16xbf16>
    %34 = vector.extract_strided_slice %31 {offsets = [0, 0, 32], sizes = [1, 128, 16], strides = [1, 1, 1]} : vector<1x128x48xbf16> to vector<1x128x16xbf16>
    "tpu.trace_start"() <{level = 10 : i32, message = "bqh,bkh->bqk"}> : () -> ()
    %cst_12 = arith.constant dense<0.000000e+00> : vector<1x128x128xf32>
    %35 = tpu.matmul %32, %33, %cst_12 {dimension_numbers = #tpu.dot_dimension_numbers<[2], [2], [1], [1], [0, 0, 0, 1, 1, 1], [0], [0]>} : vector<1x128x16xbf16>, vector<1x128x16xbf16>, vector<1x128x128xf32> -> vector<1x128x128xf32>
    "tpu.trace_stop"() : () -> ()
    %c0_13 = arith.constant 0 : index
    %c0_14 = arith.constant 0 : index
    %36 = vector.load %arg6[%c0_13, %c0_14] : memref<1x128xf32, #tpu.memory_space<vmem>>, vector<1x128xf32>
    %37 = vector.shape_cast %36 : vector<1x128xf32> to vector<1x1x128xf32>
    %38 = vector.broadcast %37 : vector<1x1x128xf32> to vector<1x128x128xf32>
    %39 = arith.addf %35, %38 : vector<1x128x128xf32>
    %cst_15 = arith.constant dense<0xFF800000> : vector<1x128xf32>
    %40 = vector.multi_reduction <maximumf>, %39, %cst_15 [2] : vector<1x128x128xf32> to vector<1x128xf32>
    %41 = vector.shape_cast %40 : vector<1x128xf32> to vector<1x128x1xf32>
    %42 = vector.broadcast %41 : vector<1x128x1xf32> to vector<1x128x128xf32>
    %43 = arith.cmpf oeq, %39, %42 : vector<1x128x128xf32>
    %44 = arith.subf %41, %41 : vector<1x128x1xf32>
    %45 = math.exp %44 : vector<1x128x1xf32>
    %cst_16 = arith.constant 0.000000e+00 : f32
    %46 = vector.shape_cast %45 : vector<1x128x1xf32> to vector<1x128x1xf32>
    %47 = vector.broadcast %46 : vector<1x128x1xf32> to vector<1x128x128xf32>
    %48 = vector.broadcast %cst_16 : f32 to vector<1x128x128xf32>
    %49 = arith.select %43, %47, %48 : vector<1x128x128xi1>, vector<1x128x128xf32>
    %cst_17 = arith.constant -1.000000e+30 : f32
    %50 = vector.broadcast %cst_17 : f32 to vector<1x128x128xf32>
    %51 = arith.select %43, %50, %39 : vector<1x128x128xi1>, vector<1x128x128xf32>
    %cst_18 = arith.constant dense<0xFF800000> : vector<1x128xf32>
    %52 = vector.multi_reduction <maximumf>, %51, %cst_18 [2] : vector<1x128x128xf32> to vector<1x128xf32>
    %53 = vector.shape_cast %52 : vector<1x128xf32> to vector<1x128x1xf32>
    %54 = vector.broadcast %53 : vector<1x128x1xf32> to vector<1x128x128xf32>
    %55 = arith.cmpf oeq, %51, %54 : vector<1x128x128xf32>
    %56 = arith.subf %53, %41 : vector<1x128x1xf32>
    %57 = math.exp %56 : vector<1x128x1xf32>
    %cst_19 = arith.constant 0.000000e+00 : f32
    %58 = vector.shape_cast %57 : vector<1x128x1xf32> to vector<1x128x1xf32>
    %59 = vector.broadcast %58 : vector<1x128x1xf32> to vector<1x128x128xf32>
    %60 = vector.broadcast %cst_19 : f32 to vector<1x128x128xf32>
    %61 = arith.select %55, %59, %60 : vector<1x128x128xi1>, vector<1x128x128xf32>
    %62 = arith.addf %49, %61 : vector<1x128x128xf32>
    %cst_20 = arith.constant -1.000000e+30 : f32
    %63 = vector.broadcast %cst_20 : f32 to vector<1x128x128xf32>
    %64 = arith.select %55, %63, %51 : vector<1x128x128xi1>, vector<1x128x128xf32>
    %cst_21 = arith.constant dense<0xFF800000> : vector<1x128xf32>
    %65 = vector.multi_reduction <maximumf>, %64, %cst_21 [2] : vector<1x128x128xf32> to vector<1x128xf32>
    %66 = vector.shape_cast %65 : vector<1x128xf32> to vector<1x128x1xf32>
    %67 = vector.broadcast %66 : vector<1x128x1xf32> to vector<1x128x128xf32>
    %68 = arith.cmpf oeq, %64, %67 : vector<1x128x128xf32>
    %69 = arith.subf %66, %41 : vector<1x128x1xf32>
    %70 = math.exp %69 : vector<1x128x1xf32>
    %cst_22 = arith.constant 0.000000e+00 : f32
    %71 = vector.shape_cast %70 : vector<1x128x1xf32> to vector<1x128x1xf32>
    %72 = vector.broadcast %71 : vector<1x128x1xf32> to vector<1x128x128xf32>
    %73 = vector.broadcast %cst_22 : f32 to vector<1x128x128xf32>
    %74 = arith.select %68, %72, %73 : vector<1x128x128xi1>, vector<1x128x128xf32>
    %75 = arith.addf %62, %74 : vector<1x128x128xf32>
    %cst_23 = arith.constant -1.000000e+30 : f32
    %76 = vector.broadcast %cst_23 : f32 to vector<1x128x128xf32>
    %77 = arith.select %68, %76, %64 : vector<1x128x128xi1>, vector<1x128x128xf32>
    %cst_24 = arith.constant dense<0xFF800000> : vector<1x128xf32>
    %78 = vector.multi_reduction <maximumf>, %77, %cst_24 [2] : vector<1x128x128xf32> to vector<1x128xf32>
    %79 = vector.shape_cast %78 : vector<1x128xf32> to vector<1x128x1xf32>
    %80 = vector.broadcast %79 : vector<1x128x1xf32> to vector<1x128x128xf32>
    %81 = arith.cmpf oeq, %77, %80 : vector<1x128x128xf32>
    %82 = arith.subf %79, %41 : vector<1x128x1xf32>
    %83 = math.exp %82 : vector<1x128x1xf32>
    %cst_25 = arith.constant 0.000000e+00 : f32
    %84 = vector.shape_cast %83 : vector<1x128x1xf32> to vector<1x128x1xf32>
    %85 = vector.broadcast %84 : vector<1x128x1xf32> to vector<1x128x128xf32>
    %86 = vector.broadcast %cst_25 : f32 to vector<1x128x128xf32>
    %87 = arith.select %81, %85, %86 : vector<1x128x128xi1>, vector<1x128x128xf32>
    %88 = arith.addf %75, %87 : vector<1x128x128xf32>
    %cst_26 = arith.constant -1.000000e+30 : f32
    %89 = vector.broadcast %cst_26 : f32 to vector<1x128x128xf32>
    %90 = arith.select %81, %89, %77 : vector<1x128x128xi1>, vector<1x128x128xf32>
    %cst_27 = arith.constant dense<0xFF800000> : vector<1x128xf32>
    %91 = vector.multi_reduction <maximumf>, %90, %cst_27 [2] : vector<1x128x128xf32> to vector<1x128xf32>
    %92 = vector.shape_cast %91 : vector<1x128xf32> to vector<1x128x1xf32>
    %93 = vector.broadcast %92 : vector<1x128x1xf32> to vector<1x128x128xf32>
    %94 = arith.cmpf oeq, %90, %93 : vector<1x128x128xf32>
    %95 = arith.subf %92, %41 : vector<1x128x1xf32>
    %96 = math.exp %95 : vector<1x128x1xf32>
    %cst_28 = arith.constant 0.000000e+00 : f32
    %97 = vector.shape_cast %96 : vector<1x128x1xf32> to vector<1x128x1xf32>
    %98 = vector.broadcast %97 : vector<1x128x1xf32> to vector<1x128x128xf32>
    %99 = vector.broadcast %cst_28 : f32 to vector<1x128x128xf32>
    %100 = arith.select %94, %98, %99 : vector<1x128x128xi1>, vector<1x128x128xf32>
    %101 = arith.addf %88, %100 : vector<1x128x128xf32>
    %102 = arith.addf %45, %57 : vector<1x128x1xf32>
    %103 = arith.addf %102, %70 : vector<1x128x1xf32>
    %104 = arith.addf %103, %83 : vector<1x128x1xf32>
    %105 = arith.addf %104, %96 : vector<1x128x1xf32>
    %106 = tpu.reciprocal %105 {approx = true} : vector<1x128x1xf32> -> vector<1x128x1xf32>
    %c0_29 = arith.constant 0 : index
    %c0_30 = arith.constant 0 : index
    %107 = vector.load %arg7[%c0_29, %c0_30] : memref<128x1xf32, #tpu.memory_space<vmem>>, vector<128x1xf32>
    %108 = vector.shape_cast %107 : vector<128x1xf32> to vector<1x128x1xf32>
    %109 = arith.mulf %106, %108 : vector<1x128x1xf32>
    %110 = arith.truncf %101 : vector<1x128x128xf32> to vector<1x128x128xbf16>
    "tpu.trace_start"() <{level = 10 : i32, message = "bqk,bkh->bqh"}> : () -> ()
    %cst_31 = arith.constant dense<0.000000e+00> : vector<1x128x16xf32>
    %111 = tpu.matmul %110, %34, %cst_31 {dimension_numbers = #tpu.dot_dimension_numbers<[2], [1], [1], [2], [0, 0, 0, 1, 1, 2], [0], [0]>} : vector<1x128x128xbf16>, vector<1x128x16xbf16>, vector<1x128x16xf32> -> vector<1x128x16xf32>
    "tpu.trace_stop"() : () -> ()
    %112 = vector.broadcast %109 : vector<1x128x1xf32> to vector<1x128x16xf32>
    %113 = arith.mulf %111, %112 : vector<1x128x16xf32>
    %cst_32 = arith.constant dense<0.000000e+00> : vector<1x16xf32>
    %114 = vector.multi_reduction <add>, %113, %cst_32 [1] : vector<1x128x16xf32> to vector<1x16xf32>
    %c0_33 = arith.constant 0 : index
    %c0_34 = arith.constant 0 : index
    %115 = vector.load %arg8[%c0_33, %c0_34] : memref<16x2xf32, #tpu.memory_space<vmem>>, vector<16x2xf32>
    %cst_35 = arith.constant dense<0.000000e+00> : vector<1x2xf32>
    %116 = tpu.matmul %114, %115, %cst_35 {dimension_numbers = #tpu.dot_dimension_numbers<[1], [0], [0], [1], [0, 0, 1, 1], [], []>} : vector<1x16xf32>, vector<16x2xf32>, vector<1x2xf32> -> vector<1x2xf32>
    %cst_36 = arith.constant 0.00999999977 : f32
    %117 = vector.broadcast %cst_36 : f32 to vector<1x2xf32>
    %118 = arith.mulf %116, %117 : vector<1x2xf32>
    %c0_37 = arith.constant 0 : index
    %c0_38 = arith.constant 0 : index
    %119 = vector.load %arg9[%c0_37, %c0_38] : memref<1x2xf32, #tpu.memory_space<vmem>>, vector<1x2xf32>
    %120 = arith.addf %118, %119 : vector<1x2xf32>
    %121 = vector.shape_cast %120 : vector<1x2xf32> to vector<1x1x2xf32>
    %c0_39 = arith.constant 0 : index
    %c0_40 = arith.constant 0 : index
    %c0_41 = arith.constant 0 : index
    %122 = vector.load %arg10[%c0_39, %c0_40, %c0_41] : memref<1x1x2xf32, #tpu.memory_space<vmem>>, vector<1x1x2xf32>
    tpu.vector_store %arg10[%c0_39, %c0_40, %c0_41], %121 {strides = array<i32>} : memref<1x1x2xf32, #tpu.memory_space<vmem>>, vector<1x1x2xf32>,
    %123 = tpu.concatenate %45, %57, %70, %83, %96 in 2 : vector<1x128x1xf32>, vector<1x128x1xf32>, vector<1x128x1xf32>, vector<1x128x1xf32>, vector<1x128x1xf32> -> vector<1x128x5xf32>
    %124 = vector.broadcast %109 : vector<1x128x1xf32> to vector<1x128x5xf32>
    %125 = arith.mulf %123, %124 : vector<1x128x5xf32>
    %126 = vector.shape_cast %125 : vector<1x128x5xf32> to vector<128x5xf32>
    %127 = tpu.transpose %126, [1, 0] : vector<128x5xf32> -> vector<5x128xf32>
    %c0_42 = arith.constant 0 : index
    %c0_43 = arith.constant 0 : index
    %128 = vector.load %arg11[%c0_42, %c0_43] : memref<5x128xf32, #tpu.memory_space<vmem>>, vector<5x128xf32>
    tpu.vector_store %arg11[%c0_42, %c0_43], %127 {strides = array<i32>} : memref<5x128xf32, #tpu.memory_space<vmem>>, vector<5x128xf32>,
    return
  }
  func.func @transform_0(%arg0: i32) -> (i32, i32, i32) {
    %c0_i32 = arith.constant 0 : i32
    %c0_i32_0 = arith.constant 0 : i32
    %c0_i32_1 = arith.constant 0 : i32
    return %arg0, %c0_i32, %c0_i32_0 : i32, i32, i32
  }
  func.func @transform_1(%arg0: i32) -> (i32, i32) {
    %c0_i32 = arith.constant 0 : i32
    %c0_i32_0 = arith.constant 0 : i32
    %c0_i32_1 = arith.constant 0 : i32
    return %c0_i32, %c0_i32_0 : i32, i32
  }
  func.func @transform_2(%arg0: i32) -> (i32, i32) {
    %c0_i32 = arith.constant 0 : i32
    %c0_i32_0 = arith.constant 0 : i32
    %c0_i32_1 = arith.constant 0 : i32
    return %c0_i32, %c0_i32_0 : i32, i32
  }
  func.func @transform_3(%arg0: i32) -> (i32, i32) {
    %c0_i32 = arith.constant 0 : i32
    %c0_i32_0 = arith.constant 0 : i32
    %c0_i32_1 = arith.constant 0 : i32
    return %c0_i32, %c0_i32_0 : i32, i32
  }
  func.func @transform_4(%arg0: i32) -> (i32, i32) {
    %c0_i32 = arith.constant 0 : i32
    %c0_i32_0 = arith.constant 0 : i32
    %c0_i32_1 = arith.constant 0 : i32
    return %c0_i32, %c0_i32_0 : i32, i32
  }
  func.func @transform_5(%arg0: i32) -> (i32, i32) {
    %c0_i32 = arith.constant 0 : i32
    %c0_i32_0 = arith.constant 0 : i32
    %c0_i32_1 = arith.constant 0 : i32
    return %c0_i32, %c0_i32_0 : i32, i32
  }
  func.func @transform_6(%arg0: i32) -> (i32, i32) {
    %c0_i32 = arith.constant 0 : i32
    %c0_i32_0 = arith.constant 0 : i32
    %c0_i32_1 = arith.constant 0 : i32
    return %c0_i32, %c0_i32_0 : i32, i32
  }
  func.func @transform_7(%arg0: i32) -> (i32, i32) {
    %c0_i32 = arith.constant 0 : i32
    %c0_i32_0 = arith.constant 0 : i32
    %c0_i32_1 = arith.constant 0 : i32
    return %c0_i32, %c0_i32_0 : i32, i32
  }
  func.func @transform_8(%arg0: i32) -> (i32, i32) {
    %c0_i32 = arith.constant 0 : i32
    %c0_i32_0 = arith.constant 0 : i32
    %c0_i32_1 = arith.constant 0 : i32
    return %c0_i32, %c0_i32_0 : i32, i32
  }
  func.func @transform_9(%arg0: i32) -> (i32, i32, i32) {
    %c0_i32 = arith.constant 0 : i32
    %c0_i32_0 = arith.constant 0 : i32
    %c0_i32_1 = arith.constant 0 : i32
    return %arg0, %c0_i32, %c0_i32_0 : i32, i32, i32
  }
  func.func @transform_10(%arg0: i32) -> (i32, i32) {
    %c0_i32 = arith.constant 0 : i32
    %c0_i32_0 = arith.constant 0 : i32
    return %c0_i32, %arg0 : i32, i32
  }
}

</mosaic_0001>

<llo_original>
// kernel: biformer_forward.1
$region0: #{biformer_forward.1}
  #allocation0 [shape = 'u32[]', space=smem, size = 0x4, offset = 0x4, fixed_abs, tag = 'smem constant byte address 0x4 - core index']
  #allocation1 [shape = 'u32[144,128]{1,0:T(1,128)}', space=vmem, size = 0x12000, scoped, tag = 'internal scratch']
  %s0 = inlined_call_operand.vmem [shape: bf16[2,128,384], index: 0, kind: input, shape index: {}]
  %s1 = inlined_call_operand.vmem [shape: bf16[384,512], index: 1, kind: input, shape index: {}]
  %s2 = inlined_call_operand.vmem [shape: f32[1,512], index: 2, kind: input, shape index: {}]
  %s3 = inlined_call_operand.vmem [shape: bf16[16,48], index: 3, kind: input, shape index: {}]
  %s4 = inlined_call_operand.vmem [shape: f32[1,48], index: 4, kind: input, shape index: {}]
  %s5 = inlined_call_operand.vmem [shape: f32[1,128], index: 5, kind: input, shape index: {}]
  %s6 = inlined_call_operand.vmem [shape: f32[128,1], index: 6, kind: input, shape index: {}]
  %s7 = inlined_call_operand.vmem [shape: f32[16,2], index: 7, kind: input, shape index: {}]
  %s8 = inlined_call_operand.vmem [shape: f32[1,2], index: 8, kind: input, shape index: {}]
  %s9 = inlined_call_operand.hbm [shape: f32[2,1,2], index: 9, kind: output, shape index: {0}]
  %s10 = inlined_call_operand.vmem [shape: f32[5,256], index: 10, kind: output, shape index: {1}]
  %11 = xla_tuple %s9, %s10
  %s12 = sld [smem:[#allocation0]]
  $region77: #{biformer_forward.1} parent=0
    _
  %s14 = ssub.s32 1, %s12
  %s15 = scalar_select 0, %s14, %s12
  $region1: #{biformer_forward.1} parent=0
    #allocation2 [shape = 'u8[1024]{0}', space=vmem, size = 0x400, scoped, tag = 'output window, operand 0']
    #allocation3 [shape = 's32[2]{0}', space=sflag, size = 0x8, scoped, tag = 'scoped memory for biformer_forward.1']
    %16 = vsyncpa [#allocation3], 0
    %s17 = scalar_lea.sflag [#allocation3], 1
    %18 = vsyncpa %s17, 0
    loop: start=0, step=1, limit=4
    $region2: #{biformer_forward.1} parent=1 // loop_pre_header
      _
    $region3: #{biformer_forward.1} parent=1 // loop_header
      %s20 = sphi 0, %s24
      %p21 = scmp.ge.s32.totalorder %s20, 4
      %s30 = sphi 0, %s32
      %s33 = sphi 0, %s30
      %s34 = sphi 0, %s33
      %s50 = sphi 0, %s34
      %s54 = sphi 0, %s54
      %s56 = sphi 0, %s54
      %s57 = sphi 0, %s56
      %s71 = sphi 0, %s57
      %s75 = sphi 0, %s75
      %s77 = sphi 0, %s75
      %s78 = sphi 0, %s77
      %s92 = sphi 0, %s78
      %s96 = sphi 0, %s96
      %s98 = sphi 0, %s96
      %s99 = sphi 0, %s98
      %s113 = sphi 0, %s99
      %s117 = sphi 0, %s117
      %s119 = sphi 0, %s117
      %s120 = sphi 0, %s119
      %s134 = sphi 0, %s120
      %s138 = sphi 0, %s138
      %s140 = sphi 0, %s138
      %s141 = sphi 0, %s140
      %s155 = sphi 0, %s141
      %s159 = sphi 0, %s159
      %s161 = sphi 0, %s159
      %s162 = sphi 0, %s161
      %s176 = sphi 0, %s162
      %s180 = sphi 0, %s180
      %s182 = sphi 0, %s180
      %s183 = sphi 0, %s182
      %s197 = sphi 0, %s183
      %s201 = sphi 0, %s201
      %s203 = sphi 0, %s201
      %s204 = sphi 0, %s203
      %s218 = sphi 0, %s204
      %s224 = sphi 0, %s226
      %s227 = sphi 0, %s224
      %s228 = sphi 0, %s227
      %s244 = sphi 0, %s228
      %s250 = sphi 0, %s252
      %s253 = sphi 0, %s250
      %s254 = sphi 0, %s253
      %s270 = sphi 0, %s254
    $region4: #{biformer_forward.1} parent=1 // loop_header_branch
      %23 = sbr.rel (%p21) target = $region8
    $region5: #{biformer_forward.1} parent=1 // loop_body
      %s25 = ssub.s32 %s20, 1
      %s26 = ssub.s32 %s20, 2
      %s27 = sadd.s32 %s20, 1
      %s28 = ssub.s32 %s20, %s27
      %p29 = scmp.eq.s32.totalorder %s28, 0
      %s31 = sadd.s32 %s30, 1
      %s32 = scalar_select %p29, %s30, %s31
      %p35 = pneg %p29
      %p36 = scmp.eq.s32.totalorder %s20, 1
      %p37 = por %p35, %p36
      %p38 = scmp.ne.s32.totalorder %s30, %s33
      %p39 = scmp.eq.s32.totalorder %s20, 0
      %p40 = por %p38, %p39
      %p41 = scmp.ne.s32.totalorder %s30, %s33
      %p42 = scmp.eq.s32.totalorder %s25, 1
      %p43 = por %p41, %p42
      %p44 = scmp.ne.s32.totalorder %s33, %s34
      %p45 = scmp.eq.s32.totalorder %s25, 0
      %p46 = por %p44, %p45
      %p47 = scmp.ne.s32.totalorder %s33, %s34
      %p48 = scmp.eq.s32.totalorder %s26, 1
      %p49 = por %p47, %p48
      %p51 = scmp.ne.s32.totalorder %s34, %s50
      %p52 = scmp.eq.s32.totalorder %s26, 0
      %p53 = por %p51, %p52
      %s55 = sadd.s32 %s54, 1
      %p58 = scmp.eq.s32.totalorder %s20, 1
      %p59 = scmp.ne.s32.totalorder %s54, %s56
      %p60 = scmp.eq.s32.totalorder %s20, 0
      %p61 = por %p59, %p60
      %p62 = scmp.ne.s32.totalorder %s54, %s56
      %p63 = scmp.eq.s32.totalorder %s25, 1
      %p64 = por %p62, %p63
      %p65 = scmp.ne.s32.totalorder %s56, %s57
      %p66 = scmp.eq.s32.totalorder %s25, 0
      %p67 = por %p65, %p66
      %p68 = scmp.ne.s32.totalorder %s56, %s57
      %p69 = scmp.eq.s32.totalorder %s26, 1
      %p70 = por %p68, %p69
      %p72 = scmp.ne.s32.totalorder %s57, %s71
      %p73 = scmp.eq.s32.totalorder %s26, 0
      %p74 = por %p72, %p73
      %s76 = sadd.s32 %s75, 1
      %p79 = scmp.eq.s32.totalorder %s20, 1
      %p80 = scmp.ne.s32.totalorder %s75, %s77
      %p81 = scmp.eq.s32.totalorder %s20, 0
      %p82 = por %p80, %p81
      %p83 = scmp.ne.s32.totalorder %s75, %s77
      %p84 = scmp.eq.s32.totalorder %s25, 1
      %p85 = por %p83, %p84
      %p86 = scmp.ne.s32.totalorder %s77, %s78
      %p87 = scmp.eq.s32.totalorder %s25, 0
      %p88 = por %p86, %p87
      %p89 = scmp.ne.s32.totalorder %s77, %s78
      %p90 = scmp.eq.s32.totalorder %s26, 1
      %p91 = por %p89, %p90
      %p93 = scmp.ne.s32.totalorder %s78, %s92
      %p94 = scmp.eq.s32.totalorder %s26, 0
      %p95 = por %p93, %p94
      %s97 = sadd.s32 %s96, 1
      %p100 = scmp.eq.s32.totalorder %s20, 1
      %p101 = scmp.ne.s32.totalorder %s96, %s98
      %p102 = scmp.eq.s32.totalorder %s20, 0
      %p103 = por %p101, %p102
      %p104 = scmp.ne.s32.totalorder %s96, %s98
      %p105 = scmp.eq.s32.totalorder %s25, 1
      %p106 = por %p104, %p105
      %p107 = scmp.ne.s32.totalorder %s98, %s99
      %p108 = scmp.eq.s32.totalorder %s25, 0
      %p109 = por %p107, %p108
      %p110 = scmp.ne.s32.totalorder %s98, %s99
      %p111 = scmp.eq.s32.totalorder %s26, 1
      %p112 = por %p110, %p111
      %p114 = scmp.ne.s32.totalorder %s99, %s113
      %p115 = scmp.eq.s32.totalorder %s26, 0
      %p116 = por %p114, %p115
      %s118 = sadd.s32 %s117, 1
      %p121 = scmp.eq.s32.totalorder %s20, 1
      %p122 = scmp.ne.s32.totalorder %s117, %s119
      %p123 = scmp.eq.s32.totalorder %s20, 0
      %p124 = por %p122, %p123
      %p125 = scmp.ne.s32.totalorder %s117, %s119
      %p126 = scmp.eq.s32.totalorder %s25, 1
      %p127 = por %p125, %p126
      %p128 = scmp.ne.s32.totalorder %s119, %s120
      %p129 = scmp.eq.s32.totalorder %s25, 0
      %p130 = por %p128, %p129
      %p131 = scmp.ne.s32.totalorder %s119, %s120
      %p132 = scmp.eq.s32.totalorder %s26, 1
      %p133 = por %p131, %p132
      %p135 = scmp.ne.s32.totalorder %s120, %s134
      %p136 = scmp.eq.s32.totalorder %s26, 0
      %p137 = por %p135, %p136
      %s139 = sadd.s32 %s138, 1
      %p142 = scmp.eq.s32.totalorder %s20, 1
      %p143 = scmp.ne.s32.totalorder %s138, %s140
      %p144 = scmp.eq.s32.totalorder %s20, 0
      %p145 = por %p143, %p144
      %p146 = scmp.ne.s32.totalorder %s138, %s140
      %p147 = scmp.eq.s32.totalorder %s25, 1
      %p148 = por %p146, %p147
      %p149 = scmp.ne.s32.totalorder %s140, %s141
      %p150 = scmp.eq.s32.totalorder %s25, 0
      %p151 = por %p149, %p150
      %p152 = scmp.ne.s32.totalorder %s140, %s141
      %p153 = scmp.eq.s32.totalorder %s26, 1
      %p154 = por %p152, %p153
      %p156 = scmp.ne.s32.totalorder %s141, %s155
      %p157 = scmp.eq.s32.totalorder %s26, 0
      %p158 = por %p156, %p157
      %s160 = sadd.s32 %s159, 1
      %p163 = scmp.eq.s32.totalorder %s20, 1
      %p164 = scmp.ne.s32.totalorder %s159, %s161
      %p165 = scmp.eq.s32.totalorder %s20, 0
      %p166 = por %p164, %p165
      %p167 = scmp.ne.s32.totalorder %s159, %s161
      %p168 = scmp.eq.s32.totalorder %s25, 1
      %p169 = por %p167, %p168
      %p170 = scmp.ne.s32.totalorder %s161, %s162
      %p171 = scmp.eq.s32.totalorder %s25, 0
      %p172 = por %p170, %p171
      %p173 = scmp.ne.s32.totalorder %s161, %s162
      %p174 = scmp.eq.s32.totalorder %s26, 1
      %p175 = por %p173, %p174
      %p177 = scmp.ne.s32.totalorder %s162, %s176
      %p178 = scmp.eq.s32.totalorder %s26, 0
      %p179 = por %p177, %p178
      %s181 = sadd.s32 %s180, 1
      %p184 = scmp.eq.s32.totalorder %s20, 1
      %p185 = scmp.ne.s32.totalorder %s180, %s182
      %p186 = scmp.eq.s32.totalorder %s20, 0
      %p187 = por %p185, %p186
      %p188 = scmp.ne.s32.totalorder %s180, %s182
      %p189 = scmp.eq.s32.totalorder %s25, 1
      %p190 = por %p188, %p189
      %p191 = scmp.ne.s32.totalorder %s182, %s183
      %p192 = scmp.eq.s32.totalorder %s25, 0
      %p193 = por %p191, %p192
      %p194 = scmp.ne.s32.totalorder %s182, %s183
      %p195 = scmp.eq.s32.totalorder %s26, 1
      %p196 = por %p194, %p195
      %p198 = scmp.ne.s32.totalorder %s183, %s197
      %p199 = scmp.eq.s32.totalorder %s26, 0
      %p200 = por %p198, %p199
      %s202 = sadd.s32 %s201, 1
      %p205 = scmp.eq.s32.totalorder %s20, 1
      %p206 = scmp.ne.s32.totalorder %s201, %s203
      %p207 = scmp.eq.s32.totalorder %s20, 0
      %p208 = por %p206, %p207
      %p209 = scmp.ne.s32.totalorder %s201, %s203
      %p210 = scmp.eq.s32.totalorder %s25, 1
      %p211 = por %p209, %p210
      %p212 = scmp.ne.s32.totalorder %s203, %s204
      %p213 = scmp.eq.s32.totalorder %s25, 0
      %p214 = por %p212, %p213
      %p215 = scmp.ne.s32.totalorder %s203, %s204
      %p216 = scmp.eq.s32.totalorder %s26, 1
      %p217 = por %p215, %p216
      %p219 = scmp.ne.s32.totalorder %s204, %s218
      %p220 = scmp.eq.s32.totalorder %s26, 0
      %p221 = por %p219, %p220
      %s222 = ssub.s32 %s20, %s27
      %p223 = scmp.eq.s32.totalorder %s222, 0
      %s225 = sadd.s32 %s224, 1
      %s226 = scalar_select %p223, %s224, %s225
      %p229 = pneg %p223
      %p230 = scmp.eq.s32.totalorder %s20, 1
      %p231 = por %p229, %p230
      %p232 = scmp.ne.s32.totalorder %s224, %s227
      %p233 = scmp.eq.s32.totalorder %s20, 0
      %p234 = por %p232, %p233
      %p235 = scmp.ne.s32.totalorder %s224, %s227
      %p236 = scmp.eq.s32.totalorder %s25, 1
      %p237 = por %p235, %p236
      %p238 = scmp.ne.s32.totalorder %s227, %s228
      %p239 = scmp.eq.s32.totalorder %s25, 0
      %p240 = por %p238, %p239
      %p241 = scmp.ne.s32.totalorder %s227, %s228
      %p242 = scmp.eq.s32.totalorder %s26, 1
      %p243 = por %p241, %p242
      %p245 = scmp.ne.s32.totalorder %s228, %s244
      %p246 = scmp.eq.s32.totalorder %s26, 0
      %p247 = por %p245, %p246
      %s248 = ssub.s32 %s20, %s27
      %p249 = scmp.eq.s32.totalorder %s248, 0
      %s251 = sadd.s32 %s250, 1
      %s252 = scalar_select %p249, %s250, %s251
      %p255 = pneg %p249
      %p256 = scmp.eq.s32.totalorder %s20, 1
      %p257 = por %p255, %p256
      %p258 = scmp.ne.s32.totalorder %s250, %s253
      %p259 = scmp.eq.s32.totalorder %s20, 0
      %p260 = por %p258, %p259
      %p261 = scmp.ne.s32.totalorder %s250, %s253
      %p262 = scmp.eq.s32.totalorder %s25, 1
      %p263 = por %p261, %p262
      %p264 = scmp.ne.s32.totalorder %s253, %s254
      %p265 = scmp.eq.s32.totalorder %s25, 0
      %p266 = por %p264, %p265
      %p267 = scmp.ne.s32.totalorder %s253, %s254
      %p268 = scmp.eq.s32.totalorder %s26, 1
      %p269 = por %p267, %p268
      %p271 = scmp.ne.s32.totalorder %s254, %s270
      %p272 = scmp.eq.s32.totalorder %s26, 0
      %p273 = por %p271, %p272
      %p274 = scmp.le.s32.totalorder 1, %s20
      %p275 = scmp.lt.s32.totalorder %s20, 3
      %p276 = pnand %p274, %p275
      %p277 = pneg %p276
      // Predicated region
      $region9: #{biformer_forward.1} parent=5 // pred_check
        _
      $region10: #{biformer_forward.1} parent=5 // pred_check_branch
        %279 = sbr.rel (%p276) target = $region12
      $region11: #{biformer_forward.1} parent=5 // pred_region
        %s280 = ssub.s32 %s20, 1
        // Predicated region
        $region13: #{biformer_forward.1} parent=11 // pred_check
          %p281 = pneg %p67
        $region14: #{biformer_forward.1} parent=11 // pred_check_branch
          %283 = sbr.rel (%p281) target = $region16
        $region15: #{biformer_forward.1} parent=11 // pred_region
          _
        $region16: #{biformer_forward.1} parent=11 // pred_fallthru
          _
        // Predicated region
        $region17: #{biformer_forward.1} parent=11 // pred_check
          %p284 = pneg %p88
        $region18: #{biformer_forward.1} parent=11 // pred_check_branch
          %286 = sbr.rel (%p284) target = $region20
        $region19: #{biformer_forward.1} parent=11 // pred_region
          _
        $region20: #{biformer_forward.1} parent=11 // pred_fallthru
          _
        // Predicated region
        $region21: #{biformer_forward.1} parent=11 // pred_check
          %p287 = pneg %p109
        $region22: #{biformer_forward.1} parent=11 // pred_check_branch
          %289 = sbr.rel (%p287) target = $region24
        $region23: #{biformer_forward.1} parent=11 // pred_region
          _
        $region24: #{biformer_forward.1} parent=11 // pred_fallthru
          _
        // Predicated region
        $region25: #{biformer_forward.1} parent=11 // pred_check
          %p290 = pneg %p130
        $region26: #{biformer_forward.1} parent=11 // pred_check_branch
          %292 = sbr.rel (%p290) target = $region28
        $region27: #{biformer_forward.1} parent=11 // pred_region
          _
        $region28: #{biformer_forward.1} parent=11 // pred_fallthru
          _
        // Predicated region
        $region29: #{biformer_forward.1} parent=11 // pred_check
          %p293 = pneg %p151
        $region30: #{biformer_forward.1} parent=11 // pred_check_branch
          %295 = sbr.rel (%p293) target = $region32
        $region31: #{biformer_forward.1} parent=11 // pred_region
          _
        $region32: #{biformer_forward.1} parent=11 // pred_fallthru
          _
        // Predicated region
        $region33: #{biformer_forward.1} parent=11 // pred_check
          %p296 = pneg %p172
        $region34: #{biformer_forward.1} parent=11 // pred_check_branch
          %298 = sbr.rel (%p296) target = $region36
        $region35: #{biformer_forward.1} parent=11 // pred_region
          _
        $region36: #{biformer_forward.1} parent=11 // pred_fallthru
          _
        // Predicated region
        $region37: #{biformer_forward.1} parent=11 // pred_check
          %p299 = pneg %p193
        $region38: #{biformer_forward.1} parent=11 // pred_check_branch
          %301 = sbr.rel (%p299) target = $region40
        $region39: #{biformer_forward.1} parent=11 // pred_region
          _
        $region40: #{biformer_forward.1} parent=11 // pred_fallthru
          _
        // Predicated region
        $region41: #{biformer_forward.1} parent=11 // pred_check
          %p302 = pneg %p214
        $region42: #{biformer_forward.1} parent=11 // pred_check_branch
          %304 = sbr.rel (%p302) target = $region44
        $region43: #{biformer_forward.1} parent=11 // pred_region
          _
        $region44: #{biformer_forward.1} parent=11 // pred_fallthru
          _
      $region12: #{biformer_forward.1} parent=5 // pred_fallthru
        _
      %p305 = scmp.lt.s32.totalorder %s20, 2
      // Predicated region
      $region45: #{biformer_forward.1} parent=5 // pred_check
        %p306 = pneg %p305
      $region46: #{biformer_forward.1} parent=5 // pred_check_branch
        %308 = sbr.rel (%p306) target = $region48
      $region47: #{biformer_forward.1} parent=5 // pred_region
        // Predicated region
        $region49: #{biformer_forward.1} parent=47 // pred_check
          %p309 = pneg %p40
        $region50: #{biformer_forward.1} parent=47 // pred_check_branch
          %311 = sbr.rel (%p309) target = $region52
        $region51: #{biformer_forward.1} parent=47 // pred_region
          %p312 = scmp.lt.s32.totalorder %s20, 1
          %s313 = scalar_select %p312, %s20, 1
          %s314 = smul.addr %s313, 48
          %s315 = smul.addr %s314, 4
          %s316 = scalar_lea.vmem %s0, %s315
        $region52: #{biformer_forward.1} parent=47 // pred_fallthru
          _
      $region48: #{biformer_forward.1} parent=5 // pred_fallthru
        _
      %p317 = scmp.le.s32.totalorder 1, %s20
      %p318 = scmp.lt.s32.totalorder %s20, 3
      %p319 = pnand %p317, %p318
      %p320 = pneg %p319
      // Predicated region
      $region53: #{biformer_forward.1} parent=5 // pred_check
        _
      $region54: #{biformer_forward.1} parent=5 // pred_check_branch
        %322 = sbr.rel (%p319) target = $region56
      $region55: #{biformer_forward.1} parent=5 // pred_region
        %s323 = ssub.s32 %s20, 1
        %p324 = scmp.lt.s32.totalorder %s25, 1
        %s325 = scalar_select %p324, %s25, 1
        %s326 = smul.addr %s325, 48
        %s327 = smul.addr %s326, 4
        %s328 = scalar_lea.vmem %s0, %s327
        %p329 = pneg %p46
        %p330 = pneg %p43
        %p331 = pneg %p67
        %p332 = pneg %p64
        %p333 = pneg %p88
        %p334 = pneg %p85
        %p335 = pneg %p109
        %p336 = pneg %p106
        %p337 = pneg %p130
        %p338 = pneg %p127
        %p339 = pneg %p151
        %p340 = pneg %p148
        %p341 = pneg %p172
        %p342 = pneg %p169
        %p343 = pneg %p193
        %p344 = pneg %p190
        %p345 = pneg %p214
        %p346 = pneg %p211
        %p347 = pneg %p240
        %p348 = pneg %p237
        %s349 = sand.u32 %s227, 1
        %s350 = scalar_lea.sflag [#allocation3], %s349
        %s351 = sand.u32 %s227, 1
        %s352 = scalar_lea.vmem [#allocation2], %s351
        %p353 = pneg %p266
        %p354 = pneg %p263
        %p355 = scmp.lt.s32.totalorder %s25, 1
        %s356 = scalar_select %p355, %s25, 1
        %s357 = smul.addr %s356, 8
        %s358 = scalar_lea.vmem %s10, %s357
        %p359 = scmp.lt.s32.totalorder %s25, 1
        %s360 = scalar_select %p359, %s25, 1
        %s361 = smul.addr %s360, 48
        %s362 = smul.addr %s361, 4
        %s363 = scalar_lea.vmem %s0, %s362
        %p364 = scmp.lt.s32.totalorder %s25, 1
        %s365 = scalar_select %p364, %s25, 1
        %s366 = smul.addr %s365, 8
        %s367 = scalar_lea.vmem %s10, %s366
        %v369 = vld [vmem:[%s363] sm:$0xff]
        %v370 = vld [vmem:[%s363 + $0x8] sm:$0xf]
        %v371 = vld [vmem:[%s363 + $0xc] sm:$0xff]
        %v372 = vld [vmem:[%s363 + $0x14] sm:$0xf]
        %v373 = vld [vmem:[%s363 + $0x18] sm:$0xff]
        %v374 = vld [vmem:[%s363 + $0x20] sm:$0xf]
        %v375 = vld [vmem:[%s363 + $0x24] sm:$0xff]
        %v376 = vld [vmem:[%s363 + $0x2c] sm:$0xf]
        %v377 = vld [vmem:[%s363 + $0x30] sm:$0xff]
        %v378 = vld [vmem:[%s363 + $0x38] sm:$0xf]
        %v379 = vld [vmem:[%s363 + $0x3c] sm:$0xff]
        %v380 = vld [vmem:[%s363 + $0x44] sm:$0xf]
        %v381 = vld [vmem:[%s363 + $0x48] sm:$0xff]
        %v382 = vld [vmem:[%s363 + $0x50] sm:$0xf]
        %v383 = vld [vmem:[%s363 + $0x54] sm:$0xff]
        %v384 = vld [vmem:[%s363 + $0x5c] sm:$0xf]
        %v385 = vld [vmem:[%s363 + $0x60] sm:$0xff]
        %v386 = vld [vmem:[%s363 + $0x68] sm:$0xf]
        %v387 = vld [vmem:[%s363 + $0x6c] sm:$0xff]
        %v388 = vld [vmem:[%s363 + $0x74] sm:$0xf]
        %v389 = vld [vmem:[%s363 + $0x78] sm:$0xff]
        %v390 = vld [vmem:[%s363 + $0x80] sm:$0xf]
        %v391 = vld [vmem:[%s363 + $0x84] sm:$0xff]
        %v392 = vld [vmem:[%s363 + $0x8c] sm:$0xf]
        %v393 = vld [vmem:[%s363 + $0x90] sm:$0xff]
        %v394 = vld [vmem:[%s363 + $0x98] sm:$0xf]
        %v395 = vld [vmem:[%s363 + $0x9c] sm:$0xff]
        %v396 = vld [vmem:[%s363 + $0xa4] sm:$0xf]
        %v397 = vld [vmem:[%s363 + $0xa8] sm:$0xff]
        %v398 = vld [vmem:[%s363 + $0xb0] sm:$0xf]
        %v399 = vld [vmem:[%s363 + $0xb4] sm:$0xff]
        %v400 = vld [vmem:[%s363 + $0xbc] sm:$0xf]
        %v401 = vld [vmem:[%s1] sm:$0xff]
        %v402 = vld [vmem:[%s1 + $0x8] sm:$0xff]
        %v403 = vld [vmem:[%s1 + $0x10] sm:$0xff]
        %v404 = vld [vmem:[%s1 + $0x18] sm:$0xff]
        %v405 = vld [vmem:[%s1 + $0x20] sm:$0xff]
        %v406 = vld [vmem:[%s1 + $0x28] sm:$0xff]
        %v407 = vld [vmem:[%s1 + $0x30] sm:$0xff]
        %v408 = vld [vmem:[%s1 + $0x38] sm:$0xff]
        %v409 = vld [vmem:[%s1 + $0x40] sm:$0xff]
        %v410 = vld [vmem:[%s1 + $0x48] sm:$0xff]
        %v411 = vld [vmem:[%s1 + $0x50] sm:$0xff]
        %v412 = vld [vmem:[%s1 + $0x58] sm:$0xff]
        %v413 = vld [vmem:[%s1 + $0x60] sm:$0xff]
        %v414 = vld [vmem:[%s1 + $0x68] sm:$0xff]
        %v415 = vld [vmem:[%s1 + $0x70] sm:$0xff]
        %v416 = vld [vmem:[%s1 + $0x78] sm:$0xff]
        %v417 = vld [vmem:[%s1 + $0x80] sm:$0xff]
        %v418 = vld [vmem:[%s1 + $0x88] sm:$0xff]
        %v419 = vld [vmem:[%s1 + $0x90] sm:$0xff]
        %v420 = vld [vmem:[%s1 + $0x98] sm:$0xff]
        %v421 = vld [vmem:[%s1 + $0xa0] sm:$0xff]
        %v422 = vld [vmem:[%s1 + $0xa8] sm:$0xff]
        %v423 = vld [vmem:[%s1 + $0xb0] sm:$0xff]
        %v424 = vld [vmem:[%s1 + $0xb8] sm:$0xff]
        %v425 = vld [vmem:[%s1 + $0xc0] sm:$0xff]
        %v426 = vld [vmem:[%s1 + $0xc8] sm:$0xff]
        %v427 = vld [vmem:[%s1 + $0xd0] sm:$0xff]
        %v428 = vld [vmem:[%s1 + $0xd8] sm:$0xff]
        %v429 = vld [vmem:[%s1 + $0xe0] sm:$0xff]
        %v430 = vld [vmem:[%s1 + $0xe8] sm:$0xff]
        %v431 = vld [vmem:[%s1 + $0xf0] sm:$0xff]
        %v432 = vld [vmem:[%s1 + $0xf8] sm:$0xff]
        %v433 = vld [vmem:[%s1 + $0x100] sm:$0xff]
        %v434 = vld [vmem:[%s1 + $0x108] sm:$0xff]
        %v435 = vld [vmem:[%s1 + $0x110] sm:$0xff]
        %v436 = vld [vmem:[%s1 + $0x118] sm:$0xff]
        %v437 = vld [vmem:[%s1 + $0x120] sm:$0xff]
        %v438 = vld [vmem:[%s1 + $0x128] sm:$0xff]
        %v439 = vld [vmem:[%s1 + $0x130] sm:$0xff]
        %v440 = vld [vmem:[%s1 + $0x138] sm:$0xff]
        %v441 = vld [vmem:[%s1 + $0x140] sm:$0xff]
        %v442 = vld [vmem:[%s1 + $0x148] sm:$0xff]
        %v443 = vld [vmem:[%s1 + $0x150] sm:$0xff]
        %v444 = vld [vmem:[%s1 + $0x158] sm:$0xff]
        %v445 = vld [vmem:[%s1 + $0x160] sm:$0xff]
        %v446 = vld [vmem:[%s1 + $0x168] sm:$0xff]
        %v447 = vld [vmem:[%s1 + $0x170] sm:$0xff]
        %v448 = vld [vmem:[%s1 + $0x178] sm:$0xff]
        %v449 = vld [vmem:[%s1 + $0x180] sm:$0xff]
        %v450 = vld [vmem:[%s1 + $0x188] sm:$0xff]
        %v451 = vld [vmem:[%s1 + $0x190] sm:$0xff]
        %v452 = vld [vmem:[%s1 + $0x198] sm:$0xff]
        %v453 = vld [vmem:[%s1 + $0x1a0] sm:$0xff]
        %v454 = vld [vmem:[%s1 + $0x1a8] sm:$0xff]
        %v455 = vld [vmem:[%s1 + $0x1b0] sm:$0xff]
        %v456 = vld [vmem:[%s1 + $0x1b8] sm:$0xff]
        %v457 = vld [vmem:[%s1 + $0x1c0] sm:$0xff]
        %v458 = vld [vmem:[%s1 + $0x1c8] sm:$0xff]
        %v459 = vld [vmem:[%s1 + $0x1d0] sm:$0xff]
        %v460 = vld [vmem:[%s1 + $0x1d8] sm:$0xff]
        %v461 = vld [vmem:[%s1 + $0x1e0] sm:$0xff]
        %v462 = vld [vmem:[%s1 + $0x1e8] sm:$0xff]
        %v463 = vld [vmem:[%s1 + $0x1f0] sm:$0xff]
        %v464 = vld [vmem:[%s1 + $0x1f8] sm:$0xff]
        %v465 = vld [vmem:[%s1 + $0x200] sm:$0xff]
        %v466 = vld [vmem:[%s1 + $0x208] sm:$0xff]
        %v467 = vld [vmem:[%s1 + $0x210] sm:$0xff]
        %v468 = vld [vmem:[%s1 + $0x218] sm:$0xff]
        %v469 = vld [vmem:[%s1 + $0x220] sm:$0xff]
        %v470 = vld [vmem:[%s1 + $0x228] sm:$0xff]
        %v471 = vld [vmem:[%s1 + $0x230] sm:$0xff]
        %v472 = vld [vmem:[%s1 + $0x238] sm:$0xff]
        %v473 = vld [vmem:[%s1 + $0x240] sm:$0xff]
        %v474 = vld [vmem:[%s1 + $0x248] sm:$0xff]
        %v475 = vld [vmem:[%s1 + $0x250] sm:$0xff]
        %v476 = vld [vmem:[%s1 + $0x258] sm:$0xff]
        %v477 = vld [vmem:[%s1 + $0x260] sm:$0xff]
        %v478 = vld [vmem:[%s1 + $0x268] sm:$0xff]
        %v479 = vld [vmem:[%s1 + $0x270] sm:$0xff]
        %v480 = vld [vmem:[%s1 + $0x278] sm:$0xff]
        %v481 = vld [vmem:[%s1 + $0x280] sm:$0xff]
        %v482 = vld [vmem:[%s1 + $0x288] sm:$0xff]
        %v483 = vld [vmem:[%s1 + $0x290] sm:$0xff]
        %v484 = vld [vmem:[%s1 + $0x298] sm:$0xff]
        %v485 = vld [vmem:[%s1 + $0x2a0] sm:$0xff]
        %v486 = vld [vmem:[%s1 + $0x2a8] sm:$0xff]
        %v487 = vld [vmem:[%s1 + $0x2b0] sm:$0xff]
        %v488 = vld [vmem:[%s1 + $0x2b8] sm:$0xff]
        %v489 = vld [vmem:[%s1 + $0x2c0] sm:$0xff]
        %v490 = vld [vmem:[%s1 + $0x2c8] sm:$0xff]
        %v491 = vld [vmem:[%s1 + $0x2d0] sm:$0xff]
        %v492 = vld [vmem:[%s1 + $0x2d8] sm:$0xff]
        %v493 = vld [vmem:[%s1 + $0x2e0] sm:$0xff]
        %v494 = vld [vmem:[%s1 + $0x2e8] sm:$0xff]
        %v495 = vld [vmem:[%s1 + $0x2f0] sm:$0xff]
        %v496 = vld [vmem:[%s1 + $0x2f8] sm:$0xff]
        %v497 = vld [vmem:[%s2] sm:$0xf]
        %v499 = vlaneseq
        %v500 = vshrl.u32 %v499, 7
        %v501 = vsub.s32 0, %v500
        %v502 = vrot.slane %v497, %v501
        %v503 = vlaneseq
        %v504 = vshrl.u32 %v503, 7
        %v505 = vsub.s32 1, %v504
        %v506 = vrot.slane %v497, %v505
        %v507 = vlaneseq
        %v508 = vshrl.u32 %v507, 7
        %v509 = vsub.s32 2, %v508
        %v510 = vrot.slane %v497, %v509
        %v511 = vlaneseq
        %v512 = vshrl.u32 %v511, 7
        %v513 = vsub.s32 3, %v512
        %v514 = vrot.slane %v497, %v513
        %v551 = vunpack.c.l.b16 %v369
        %v552 = vunpack.c.h.b16 %v369
        %v553 = vunpack.c.l.b16 %v370
        %v554 = vunpack.c.l.b16 %v371
        %v555 = vunpack.c.h.b16 %v371
        %v556 = vunpack.c.l.b16 %v372
        %v557 = vunpack.c.l.b16 %v373
        %v558 = vunpack.c.h.b16 %v373
        %v559 = vunpack.c.l.b16 %v374
        %v560 = vunpack.c.l.b16 %v375
        %v561 = vunpack.c.h.b16 %v375
        %v562 = vunpack.c.l.b16 %v376
        %v563 = vunpack.c.l.b16 %v377
        %v564 = vunpack.c.h.b16 %v377
        %v565 = vunpack.c.l.b16 %v378
        %v566 = vunpack.c.l.b16 %v379
        %v567 = vunpack.c.h.b16 %v379
        %v568 = vunpack.c.l.b16 %v380
        %v569 = vunpack.c.l.b16 %v381
        %v570 = vunpack.c.h.b16 %v381
        %v571 = vunpack.c.l.b16 %v382
        %v572 = vunpack.c.l.b16 %v383
        %v573 = vunpack.c.h.b16 %v383
        %v574 = vunpack.c.l.b16 %v384
        %v575 = vunpack.c.l.b16 %v385
        %v576 = vunpack.c.h.b16 %v385
        %v577 = vunpack.c.l.b16 %v386
        %v578 = vunpack.c.l.b16 %v387
        %v579 = vunpack.c.h.b16 %v387
        %v580 = vunpack.c.l.b16 %v388
        %v581 = vunpack.c.l.b16 %v389
        %v582 = vunpack.c.h.b16 %v389
        %v583 = vunpack.c.l.b16 %v390
        %v584 = vunpack.c.l.b16 %v391
        %v585 = vunpack.c.h.b16 %v391
        %v586 = vunpack.c.l.b16 %v392
        %v587 = vunpack.c.l.b16 %v393
        %v588 = vunpack.c.h.b16 %v393
        %v589 = vunpack.c.l.b16 %v394
        %v590 = vunpack.c.l.b16 %v395
        %v591 = vunpack.c.h.b16 %v395
        %v592 = vunpack.c.l.b16 %v396
        %v593 = vunpack.c.l.b16 %v397
        %v594 = vunpack.c.h.b16 %v397
        %v595 = vunpack.c.l.b16 %v398
        %v596 = vunpack.c.l.b16 %v399
        %v597 = vunpack.c.h.b16 %v399
        %v598 = vunpack.c.l.b16 %v400
        %v599 = vpack.c.b16 %v554, %v551
        %v600 = vpack.c.b16 %v555, %v552
        %v601 = vpack.c.b16 %v556, %v553
        %v602 = vpack.c.b16 %v560, %v557
        %v603 = vpack.c.b16 %v561, %v558
        %v604 = vpack.c.b16 %v562, %v559
        %v605 = vpack.c.b16 %v566, %v563
        %v606 = vpack.c.b16 %v567, %v564
        %v607 = vpack.c.b16 %v568, %v565
        %v608 = vpack.c.b16 %v572, %v569
        %v609 = vpack.c.b16 %v573, %v570
        %v610 = vpack.c.b16 %v574, %v571
        %v611 = vpack.c.b16 %v578, %v575
        %v612 = vpack.c.b16 %v579, %v576
        %v613 = vpack.c.b16 %v580, %v577
        %v614 = vpack.c.b16 %v584, %v581
        %v615 = vpack.c.b16 %v585, %v582
        %v616 = vpack.c.b16 %v586, %v583
        %v617 = vpack.c.b16 %v590, %v587
        %v618 = vpack.c.b16 %v591, %v588
        %v619 = vpack.c.b16 %v592, %v589
        %v620 = vpack.c.b16 %v596, %v593
        %v621 = vpack.c.b16 %v597, %v594
        %v622 = vpack.c.b16 %v598, %v595
        %v743 = vunpack.c.l.b16 %v401
        %v744 = vunpack.c.h.b16 %v401
        %v745 = vunpack.c.l.b16 %v402
        %v746 = vunpack.c.h.b16 %v402
        %v747 = vunpack.c.l.b16 %v403
        %v748 = vunpack.c.h.b16 %v403
        %v749 = vunpack.c.l.b16 %v404
        %v750 = vunpack.c.h.b16 %v404
        %v751 = vunpack.c.l.b16 %v405
        %v752 = vunpack.c.h.b16 %v405
        %v753 = vunpack.c.l.b16 %v406
        %v754 = vunpack.c.h.b16 %v406
        %v755 = vunpack.c.l.b16 %v407
        %v756 = vunpack.c.h.b16 %v407
        %v757 = vunpack.c.l.b16 %v408
        %v758 = vunpack.c.h.b16 %v408
        %v759 = vunpack.c.l.b16 %v409
        %v760 = vunpack.c.h.b16 %v409
        %v761 = vunpack.c.l.b16 %v410
        %v762 = vunpack.c.h.b16 %v410
        %v763 = vunpack.c.l.b16 %v411
        %v764 = vunpack.c.h.b16 %v411
        %v765 = vunpack.c.l.b16 %v412
        %v766 = vunpack.c.h.b16 %v412
        %v767 = vunpack.c.l.b16 %v413
        %v768 = vunpack.c.h.b16 %v413
        %v769 = vunpack.c.l.b16 %v414
        %v770 = vunpack.c.h.b16 %v414
        %v771 = vunpack.c.l.b16 %v415
        %v772 = vunpack.c.h.b16 %v415
        %v773 = vunpack.c.l.b16 %v416
        %v774 = vunpack.c.h.b16 %v416
        %v775 = vunpack.c.l.b16 %v417
        %v776 = vunpack.c.h.b16 %v417
        %v777 = vunpack.c.l.b16 %v418
        %v778 = vunpack.c.h.b16 %v418
        %v779 = vunpack.c.l.b16 %v419
        %v780 = vunpack.c.h.b16 %v419
        %v781 = vunpack.c.l.b16 %v420
        %v782 = vunpack.c.h.b16 %v420
        %v783 = vunpack.c.l.b16 %v421
        %v784 = vunpack.c.h.b16 %v421
        %v785 = vunpack.c.l.b16 %v422
        %v786 = vunpack.c.h.b16 %v422
        %v787 = vunpack.c.l.b16 %v423
        %v788 = vunpack.c.h.b16 %v423
        %v789 = vunpack.c.l.b16 %v424
        %v790 = vunpack.c.h.b16 %v424
        %v791 = vunpack.c.l.b16 %v425
        %v792 = vunpack.c.h.b16 %v425
        %v793 = vunpack.c.l.b16 %v426
        %v794 = vunpack.c.h.b16 %v426
        %v795 = vunpack.c.l.b16 %v427
        %v796 = vunpack.c.h.b16 %v427
        %v797 = vunpack.c.l.b16 %v428
        %v798 = vunpack.c.h.b16 %v428
        %v799 = vunpack.c.l.b16 %v429
        %v800 = vunpack.c.h.b16 %v429
        %v801 = vunpack.c.l.b16 %v430
        %v802 = vunpack.c.h.b16 %v430
        %v803 = vunpack.c.l.b16 %v431
        %v804 = vunpack.c.h.b16 %v431
        %v805 = vunpack.c.l.b16 %v432
        %v806 = vunpack.c.h.b16 %v432
        %v807 = vunpack.c.l.b16 %v433
        %v808 = vunpack.c.h.b16 %v433
        %v809 = vunpack.c.l.b16 %v434
        %v810 = vunpack.c.h.b16 %v434
        %v811 = vunpack.c.l.b16 %v435
        %v812 = vunpack.c.h.b16 %v435
        %v813 = vunpack.c.l.b16 %v436
        %v814 = vunpack.c.h.b16 %v436
        %v815 = vunpack.c.l.b16 %v437
        %v816 = vunpack.c.h.b16 %v437
        %v817 = vunpack.c.l.b16 %v438
        %v818 = vunpack.c.h.b16 %v438
        %v819 = vunpack.c.l.b16 %v439
        %v820 = vunpack.c.h.b16 %v439
        %v821 = vunpack.c.l.b16 %v440
        %v822 = vunpack.c.h.b16 %v440
        %v823 = vunpack.c.l.b16 %v441
        %v824 = vunpack.c.h.b16 %v441
        %v825 = vunpack.c.l.b16 %v442
        %v826 = vunpack.c.h.b16 %v442
        %v827 = vunpack.c.l.b16 %v443
        %v828 = vunpack.c.h.b16 %v443
        %v829 = vunpack.c.l.b16 %v444
        %v830 = vunpack.c.h.b16 %v444
        %v831 = vunpack.c.l.b16 %v445
        %v832 = vunpack.c.h.b16 %v445
        %v833 = vunpack.c.l.b16 %v446
        %v834 = vunpack.c.h.b16 %v446
        %v835 = vunpack.c.l.b16 %v447
        %v836 = vunpack.c.h.b16 %v447
        %v837 = vunpack.c.l.b16 %v448
        %v838 = vunpack.c.h.b16 %v448
        %v839 = vunpack.c.l.b16 %v449
        %v840 = vunpack.c.h.b16 %v449
        %v841 = vunpack.c.l.b16 %v450
        %v842 = vunpack.c.h.b16 %v450
        %v843 = vunpack.c.l.b16 %v451
        %v844 = vunpack.c.h.b16 %v451
        %v845 = vunpack.c.l.b16 %v452
        %v846 = vunpack.c.h.b16 %v452
        %v847 = vunpack.c.l.b16 %v453
        %v848 = vunpack.c.h.b16 %v453
        %v849 = vunpack.c.l.b16 %v454
        %v850 = vunpack.c.h.b16 %v454
        %v851 = vunpack.c.l.b16 %v455
        %v852 = vunpack.c.h.b16 %v455
        %v853 = vunpack.c.l.b16 %v456
        %v854 = vunpack.c.h.b16 %v456
        %v855 = vunpack.c.l.b16 %v457
        %v856 = vunpack.c.h.b16 %v457
        %v857 = vunpack.c.l.b16 %v458
        %v858 = vunpack.c.h.b16 %v458
        %v859 = vunpack.c.l.b16 %v459
        %v860 = vunpack.c.h.b16 %v459
        %v861 = vunpack.c.l.b16 %v460
        %v862 = vunpack.c.h.b16 %v460
        %v863 = vunpack.c.l.b16 %v461
        %v864 = vunpack.c.h.b16 %v461
        %v865 = vunpack.c.l.b16 %v462
        %v866 = vunpack.c.h.b16 %v462
        %v867 = vunpack.c.l.b16 %v463
        %v868 = vunpack.c.h.b16 %v463
        %v869 = vunpack.c.l.b16 %v464
        %v870 = vunpack.c.h.b16 %v464
        %v871 = vunpack.c.l.b16 %v465
        %v872 = vunpack.c.h.b16 %v465
        %v873 = vunpack.c.l.b16 %v466
        %v874 = vunpack.c.h.b16 %v466
        %v875 = vunpack.c.l.b16 %v467
        %v876 = vunpack.c.h.b16 %v467
        %v877 = vunpack.c.l.b16 %v468
        %v878 = vunpack.c.h.b16 %v468
        %v879 = vunpack.c.l.b16 %v469
        %v880 = vunpack.c.h.b16 %v469
        %v881 = vunpack.c.l.b16 %v470
        %v882 = vunpack.c.h.b16 %v470
        %v883 = vunpack.c.l.b16 %v471
        %v884 = vunpack.c.h.b16 %v471
        %v885 = vunpack.c.l.b16 %v472
        %v886 = vunpack.c.h.b16 %v472
        %v887 = vunpack.c.l.b16 %v473
        %v888 = vunpack.c.h.b16 %v473
        %v889 = vunpack.c.l.b16 %v474
        %v890 = vunpack.c.h.b16 %v474
        %v891 = vunpack.c.l.b16 %v475
        %v892 = vunpack.c.h.b16 %v475
        %v893 = vunpack.c.l.b16 %v476
        %v894 = vunpack.c.h.b16 %v476
        %v895 = vunpack.c.l.b16 %v477
        %v896 = vunpack.c.h.b16 %v477
        %v897 = vunpack.c.l.b16 %v478
        %v898 = vunpack.c.h.b16 %v478
        %v899 = vunpack.c.l.b16 %v479
        %v900 = vunpack.c.h.b16 %v479
        %v901 = vunpack.c.l.b16 %v480
        %v902 = vunpack.c.h.b16 %v480
        %v903 = vunpack.c.l.b16 %v481
        %v904 = vunpack.c.h.b16 %v481
        %v905 = vunpack.c.l.b16 %v482
        %v906 = vunpack.c.h.b16 %v482
        %v907 = vunpack.c.l.b16 %v483
        %v908 = vunpack.c.h.b16 %v483
        %v909 = vunpack.c.l.b16 %v484
        %v910 = vunpack.c.h.b16 %v484
        %v911 = vunpack.c.l.b16 %v485
        %v912 = vunpack.c.h.b16 %v485
        %v913 = vunpack.c.l.b16 %v486
        %v914 = vunpack.c.h.b16 %v486
        %v915 = vunpack.c.l.b16 %v487
        %v916 = vunpack.c.h.b16 %v487
        %v917 = vunpack.c.l.b16 %v488
        %v918 = vunpack.c.h.b16 %v488
        %v919 = vunpack.c.l.b16 %v489
        %v920 = vunpack.c.h.b16 %v489
        %v921 = vunpack.c.l.b16 %v490
        %v922 = vunpack.c.h.b16 %v490
        %v923 = vunpack.c.l.b16 %v491
        %v924 = vunpack.c.h.b16 %v491
        %v925 = vunpack.c.l.b16 %v492
        %v926 = vunpack.c.h.b16 %v492
        %v927 = vunpack.c.l.b16 %v493
        %v928 = vunpack.c.h.b16 %v493
        %v929 = vunpack.c.l.b16 %v494
        %v930 = vunpack.c.h.b16 %v494
        %v931 = vunpack.c.l.b16 %v495
        %v932 = vunpack.c.h.b16 %v495
        %v933 = vunpack.c.l.b16 %v496
        %v934 = vunpack.c.h.b16 %v496
        %v935 = vpack.c.b16 %v747, %v743
        %v936 = vpack.c.b16 %v748, %v744
        %v937 = vpack.c.b16 %v749, %v745
        %v938 = vpack.c.b16 %v750, %v746
        %v939 = vpack.c.b16 %v755, %v751
        %v940 = vpack.c.b16 %v756, %v752
        %v941 = vpack.c.b16 %v757, %v753
        %v942 = vpack.c.b16 %v758, %v754
        %v943 = vpack.c.b16 %v763, %v759
        %v944 = vpack.c.b16 %v764, %v760
        %v945 = vpack.c.b16 %v765, %v761
        %v946 = vpack.c.b16 %v766, %v762
        %v947 = vpack.c.b16 %v771, %v767
        %v948 = vpack.c.b16 %v772, %v768
        %v949 = vpack.c.b16 %v773, %v769
        %v950 = vpack.c.b16 %v774, %v770
        %v951 = vpack.c.b16 %v779, %v775
        %v952 = vpack.c.b16 %v780, %v776
        %v953 = vpack.c.b16 %v781, %v777
        %v954 = vpack.c.b16 %v782, %v778
        %v955 = vpack.c.b16 %v787, %v783
        %v956 = vpack.c.b16 %v788, %v784
        %v957 = vpack.c.b16 %v789, %v785
        %v958 = vpack.c.b16 %v790, %v786
        %v959 = vpack.c.b16 %v795, %v791
        %v960 = vpack.c.b16 %v796, %v792
        %v961 = vpack.c.b16 %v797, %v793
        %v962 = vpack.c.b16 %v798, %v794
        %v963 = vpack.c.b16 %v803, %v799
        %v964 = vpack.c.b16 %v804, %v800
        %v965 = vpack.c.b16 %v805, %v801
        %v966 = vpack.c.b16 %v806, %v802
        %v967 = vpack.c.b16 %v811, %v807
        %v968 = vpack.c.b16 %v812, %v808
        %v969 = vpack.c.b16 %v813, %v809
        %v970 = vpack.c.b16 %v814, %v810
        %v971 = vpack.c.b16 %v819, %v815
        %v972 = vpack.c.b16 %v820, %v816
        %v973 = vpack.c.b16 %v821, %v817
        %v974 = vpack.c.b16 %v822, %v818
        %v975 = vpack.c.b16 %v827, %v823
        %v976 = vpack.c.b16 %v828, %v824
        %v977 = vpack.c.b16 %v829, %v825
        %v978 = vpack.c.b16 %v830, %v826
        %v979 = vpack.c.b16 %v835, %v831
        %v980 = vpack.c.b16 %v836, %v832
        %v981 = vpack.c.b16 %v837, %v833
        %v982 = vpack.c.b16 %v838, %v834
        %v983 = vpack.c.b16 %v843, %v839
        %v984 = vpack.c.b16 %v844, %v840
        %v985 = vpack.c.b16 %v845, %v841
        %v986 = vpack.c.b16 %v846, %v842
        %v987 = vpack.c.b16 %v851, %v847
        %v988 = vpack.c.b16 %v852, %v848
        %v989 = vpack.c.b16 %v853, %v849
        %v990 = vpack.c.b16 %v854, %v850
        %v991 = vpack.c.b16 %v859, %v855
        %v992 = vpack.c.b16 %v860, %v856
        %v993 = vpack.c.b16 %v861, %v857
        %v994 = vpack.c.b16 %v862, %v858
        %v995 = vpack.c.b16 %v867, %v863
        %v996 = vpack.c.b16 %v868, %v864
        %v997 = vpack.c.b16 %v869, %v865
        %v998 = vpack.c.b16 %v870, %v866
        %v999 = vpack.c.b16 %v875, %v871
        %v1000 = vpack.c.b16 %v876, %v872
        %v1001 = vpack.c.b16 %v877, %v873
        %v1002 = vpack.c.b16 %v878, %v874
        %v1003 = vpack.c.b16 %v883, %v879
        %v1004 = vpack.c.b16 %v884, %v880
        %v1005 = vpack.c.b16 %v885, %v881
        %v1006 = vpack.c.b16 %v886, %v882
        %v1007 = vpack.c.b16 %v891, %v887
        %v1008 = vpack.c.b16 %v892, %v888
        %v1009 = vpack.c.b16 %v893, %v889
        %v1010 = vpack.c.b16 %v894, %v890
        %v1011 = vpack.c.b16 %v899, %v895
        %v1012 = vpack.c.b16 %v900, %v896
        %v1013 = vpack.c.b16 %v901, %v897
        %v1014 = vpack.c.b16 %v902, %v898
        %v1015 = vpack.c.b16 %v907, %v903
        %v1016 = vpack.c.b16 %v908, %v904
        %v1017 = vpack.c.b16 %v909, %v905
        %v1018 = vpack.c.b16 %v910, %v906
        %v1019 = vpack.c.b16 %v915, %v911
        %v1020 = vpack.c.b16 %v916, %v912
        %v1021 = vpack.c.b16 %v917, %v913
        %v1022 = vpack.c.b16 %v918, %v914
        %v1023 = vpack.c.b16 %v923, %v919
        %v1024 = vpack.c.b16 %v924, %v920
        %v1025 = vpack.c.b16 %v925, %v921
        %v1026 = vpack.c.b16 %v926, %v922
        %v1027 = vpack.c.b16 %v931, %v927
        %v1028 = vpack.c.b16 %v932, %v928
        %v1029 = vpack.c.b16 %v933, %v929
        %v1030 = vpack.c.b16 %v934, %v930
        %1127 = vmatprep.subr.bf16.mxu0 %v936
        %1128 = vmatpush1.bf16.msra.mxu0 %v935
        %1129 = vmatprep.subr.bf16.mxu0 %v940
        %1130 = vmatpush1.bf16.msra.mxu0 %v939
        %1131 = vmatprep.subr.bf16.mxu0 %v944
        %1132 = vmatpush1.bf16.msra.mxu0 %v943
        %1133 = vmatprep.subr.bf16.mxu0 %v948
        %1134 = vmatpush1.bf16.msra.mxu0 %v947
        %1135 = vmatprep.subr.bf16.mxu0 %v952
        %1136 = vmatpush1.bf16.msra.mxu0 %v951
        %1137 = vmatprep.subr.bf16.mxu0 %v956
        %1138 = vmatpush1.bf16.msra.mxu0 %v955
        %1139 = vmatprep.subr.bf16.mxu0 %v960
        %1140 = vmatpush1.bf16.msra.mxu0 %v959
        %1141 = vmatprep.subr.bf16.mxu0 %v964
        %1142 = vmatpush1.bf16.msra.mxu0 %v963
        %1143 = vmatprep.subr.bf16.mxu0 %v968
        %1144 = vmatpush1.bf16.msra.mxu0 %v967
        %1145 = vmatprep.subr.bf16.mxu0 %v972
        %1146 = vmatpush1.bf16.msra.mxu0 %v971
        %1147 = vmatprep.subr.bf16.mxu0 %v976
        %1148 = vmatpush1.bf16.msra.mxu0 %v975
        %1149 = vmatprep.subr.bf16.mxu0 %v980
        %1150 = vmatpush1.bf16.msra.mxu0 %v979
        %1151 = vmatprep.subr.bf16.mxu0 %v984
        %1152 = vmatpush1.bf16.msra.mxu0 %v983
        %1153 = vmatprep.subr.bf16.mxu0 %v988
        %1154 = vmatpush1.bf16.msra.mxu0 %v987
        %1155 = vmatprep.subr.bf16.mxu0 %v992
        %1156 = vmatpush1.bf16.msra.mxu0 %v991
        %1157 = vmatprep.subr.bf16.mxu0 %v996
        %1158 = vmatpush1.bf16.msra.mxu0 %v995
        %1159 = vmatprep.mubr.bf16.mxu0 %v600
        %1160 = vmatmul.mubr.bf16.gmra.mrb[0].mxu0 %v599
        %v1161 = vpop.f32.mrb[0].mxu0
        %v1162 = vadd.f32 %v502, %v1161
        %v1163 = vpop.f32.mrb[0].mxu0
        %v1164 = vadd.f32 %v506, %v1163
        %v1165 = vpop.f32.mrb[0].mxu0
        %v1166 = vadd.f32 %v502, %v1165
        %v1167 = vpop.f32.mrb[0].mxu0
        %v1168 = vadd.f32 %v506, %v1167
        %1169 = vmatprep.mubr.bf16.mxu0 %v603
        %1170 = vmatmul.mubr.bf16.gmra.mrb[0].mxu0 %v602
        %v1171 = vpop.f32.mrb[0].mxu0
        %v1172 = vadd.f32 %v502, %v1171
        %v1173 = vpop.f32.mrb[0].mxu0
        %v1174 = vadd.f32 %v506, %v1173
        %v1175 = vpop.f32.mrb[0].mxu0
        %v1176 = vadd.f32 %v502, %v1175
        %v1177 = vpop.f32.mrb[0].mxu0
        %v1178 = vadd.f32 %v506, %v1177
        %1179 = vmatprep.mubr.bf16.mxu0 %v606
        %1180 = vmatmul.mubr.bf16.gmra.mrb[0].mxu0 %v605
        %v1181 = vpop.f32.mrb[0].mxu0
        %v1182 = vadd.f32 %v502, %v1181
        %v1183 = vpop.f32.mrb[0].mxu0
        %v1184 = vadd.f32 %v506, %v1183
        %v1185 = vpop.f32.mrb[0].mxu0
        %v1186 = vadd.f32 %v502, %v1185
        %v1187 = vpop.f32.mrb[0].mxu0
        %v1188 = vadd.f32 %v506, %v1187
        %1189 = vmatprep.mubr.bf16.mxu0 %v609
        %1190 = vmatmul.mubr.bf16.gmra.mrb[0].mxu0 %v608
        %v1191 = vpop.f32.mrb[0].mxu0
        %v1192 = vadd.f32 %v502, %v1191
        %v1193 = vpop.f32.mrb[0].mxu0
        %v1194 = vadd.f32 %v506, %v1193
        %v1195 = vpop.f32.mrb[0].mxu0
        %v1196 = vadd.f32 %v502, %v1195
        %v1197 = vpop.f32.mrb[0].mxu0
        %v1198 = vadd.f32 %v506, %v1197
        %1199 = vmatprep.mubr.bf16.mxu0 %v612
        %1200 = vmatmul.mubr.bf16.gmra.mrb[0].mxu0 %v611
        %v1201 = vpop.f32.mrb[0].mxu0
        %v1202 = vadd.f32 %v502, %v1201
        %v1203 = vpop.f32.mrb[0].mxu0
        %v1204 = vadd.f32 %v506, %v1203
        %v1205 = vpop.f32.mrb[0].mxu0
        %v1206 = vadd.f32 %v502, %v1205
        %v1207 = vpop.f32.mrb[0].mxu0
        %v1208 = vadd.f32 %v506, %v1207
        %1209 = vmatprep.mubr.bf16.mxu0 %v615
        %1210 = vmatmul.mubr.bf16.gmra.mrb[0].mxu0 %v614
        %v1211 = vpop.f32.mrb[0].mxu0
        %v1212 = vadd.f32 %v502, %v1211
        %v1213 = vpop.f32.mrb[0].mxu0
        %v1214 = vadd.f32 %v506, %v1213
        %v1215 = vpop.f32.mrb[0].mxu0
        %v1216 = vadd.f32 %v502, %v1215
        %v1217 = vpop.f32.mrb[0].mxu0
        %v1218 = vadd.f32 %v506, %v1217
        %1219 = vmatprep.mubr.bf16.mxu0 %v618
        %1220 = vmatmul.mubr.bf16.gmra.mrb[0].mxu0 %v617
        %v1221 = vpop.f32.mrb[0].mxu0
        %v1222 = vadd.f32 %v502, %v1221
        %v1223 = vpop.f32.mrb[0].mxu0
        %v1224 = vadd.f32 %v506, %v1223
        %v1225 = vpop.f32.mrb[0].mxu0
        %v1226 = vadd.f32 %v502, %v1225
        %v1227 = vpop.f32.mrb[0].mxu0
        %v1228 = vadd.f32 %v506, %v1227
        %1229 = vmatprep.mubr.bf16.mxu0 %v621
        %1230 = vmatmul.mubr.bf16.gmra.mrb[0].mxu0 %v620
        %v1231 = vpop.f32.mrb[0].mxu0
        %v1232 = vadd.f32 %v502, %v1231
        %v1233 = vpop.f32.mrb[0].mxu0
        %v1234 = vadd.f32 %v506, %v1233
        %v1235 = vpop.f32.mrb[0].mxu0
        %v1236 = vadd.f32 %v502, %v1235
        %v1237 = vpop.f32.mrb[0].mxu0
        %v1238 = vadd.f32 %v506, %v1237
        %1239 = vdwg.mxu0
        %1240 = vmatprep.subr.bf16.mxu0 %v1000
        %1241 = vmatpush1.bf16.msra.mxu0 %v999
        %1242 = vmatprep.subr.bf16.mxu0 %v1004
        %1243 = vmatpush1.bf16.msra.mxu0 %v1003
        %1244 = vmatprep.subr.bf16.mxu0 %v1008
        %1245 = vmatpush1.bf16.msra.mxu0 %v1007
        %1246 = vmatprep.subr.bf16.mxu0 %v1012
        %1247 = vmatpush1.bf16.msra.mxu0 %v1011
        %1248 = vmatprep.subr.bf16.mxu0 %v1016
        %1249 = vmatpush1.bf16.msra.mxu0 %v1015
        %1250 = vmatprep.subr.bf16.mxu0 %v1020
        %1251 = vmatpush1.bf16.msra.mxu0 %v1019
        %1252 = vmatprep.subr.bf16.mxu0 %v1024
        %1253 = vmatpush1.bf16.msra.mxu0 %v1023
        %1254 = vmatprep.subr.bf16.mxu0 %v1028
        %1255 = vmatpush1.bf16.msra.mxu0 %v1027
        %1256 = vmatprep.subr.bf16.mxu0 0
        %1257 = vmatpush1.bf16.msra.mxu0 0
        %1258 = vmatprep.subr.bf16.mxu0 0
        %1259 = vmatpush1.bf16.msra.mxu0 0
        %1260 = vmatprep.subr.bf16.mxu0 0
        %1261 = vmatpush1.bf16.msra.mxu0 0
        %1262 = vmatprep.subr.bf16.mxu0 0
        %1263 = vmatpush1.bf16.msra.mxu0 0
        %1264 = vmatprep.subr.bf16.mxu0 0
        %1265 = vmatpush1.bf16.msra.mxu0 0
        %1266 = vmatprep.subr.bf16.mxu0 0
        %1267 = vmatpush1.bf16.msra.mxu0 0
        %1268 = vmatprep.subr.bf16.mxu0 0
        %1269 = vmatpush1.bf16.msra.mxu0 0
        %1270 = vmatprep.subr.bf16.mxu0 0
        %1271 = vmatpush1.bf16.msra.mxu0 0
        %1272 = vmatprep.mubr.bf16.mxu0 0
        %1273 = vmatmul.mubr.bf16.gmra.mrb[0].mxu0 %v601
        %v1274 = vpop.f32.mrb[0].mxu0
        %v1275 = vadd.f32 %v1162, %v1274
        %v1276 = vpop.f32.mrb[0].mxu0
        %v1277 = vadd.f32 %v1164, %v1276
        %v1278 = vpop.f32.mrb[0].mxu0
        %v1279 = vadd.f32 %v1166, %v1278
        %v1280 = vpop.f32.mrb[0].mxu0
        %v1281 = vadd.f32 %v1168, %v1280
        %1282 = vmatprep.mubr.bf16.mxu0 0
        %1283 = vmatmul.mubr.bf16.gmra.mrb[0].mxu0 %v604
        %v1284 = vpop.f32.mrb[0].mxu0
        %v1285 = vadd.f32 %v1172, %v1284
        %v1286 = vpop.f32.mrb[0].mxu0
        %v1287 = vadd.f32 %v1174, %v1286
        %v1288 = vpop.f32.mrb[0].mxu0
        %v1289 = vadd.f32 %v1176, %v1288
        %v1290 = vpop.f32.mrb[0].mxu0
        %v1291 = vadd.f32 %v1178, %v1290
        %1292 = vmatprep.mubr.bf16.mxu0 0
        %1293 = vmatmul.mubr.bf16.gmra.mrb[0].mxu0 %v607
        %v1294 = vpop.f32.mrb[0].mxu0
        %v1295 = vadd.f32 %v1182, %v1294
        %v1296 = vpop.f32.mrb[0].mxu0
        %v1297 = vadd.f32 %v1184, %v1296
        %v1298 = vpop.f32.mrb[0].mxu0
        %v1299 = vadd.f32 %v1186, %v1298
        %v1300 = vpop.f32.mrb[0].mxu0
        %v1301 = vadd.f32 %v1188, %v1300
        %1302 = vmatprep.mubr.bf16.mxu0 0
        %1303 = vmatmul.mubr.bf16.gmra.mrb[0].mxu0 %v610
        %v1304 = vpop.f32.mrb[0].mxu0
        %v1305 = vadd.f32 %v1192, %v1304
        %v1306 = vpop.f32.mrb[0].mxu0
        %v1307 = vadd.f32 %v1194, %v1306
        %v1308 = vpop.f32.mrb[0].mxu0
        %v1309 = vadd.f32 %v1196, %v1308
        %v1310 = vpop.f32.mrb[0].mxu0
        %v1311 = vadd.f32 %v1198, %v1310
        %1312 = vmatprep.mubr.bf16.mxu0 0
        %1313 = vmatmul.mubr.bf16.gmra.mrb[0].mxu0 %v613
        %v1314 = vpop.f32.mrb[0].mxu0
        %v1315 = vadd.f32 %v1202, %v1314
        %v1316 = vpop.f32.mrb[0].mxu0
        %v1317 = vadd.f32 %v1204, %v1316
        %v1318 = vpop.f32.mrb[0].mxu0
        %v1319 = vadd.f32 %v1206, %v1318
        %v1320 = vpop.f32.mrb[0].mxu0
        %v1321 = vadd.f32 %v1208, %v1320
        %1322 = vmatprep.mubr.bf16.mxu0 0
        %1323 = vmatmul.mubr.bf16.gmra.mrb[0].mxu0 %v616
        %v1324 = vpop.f32.mrb[0].mxu0
        %v1325 = vadd.f32 %v1212, %v1324
        %v1326 = vpop.f32.mrb[0].mxu0
        %v1327 = vadd.f32 %v1214, %v1326
        %v1328 = vpop.f32.mrb[0].mxu0
        %v1329 = vadd.f32 %v1216, %v1328
        %v1330 = vpop.f32.mrb[0].mxu0
        %v1331 = vadd.f32 %v1218, %v1330
        %1332 = vmatprep.mubr.bf16.mxu0 0
        %1333 = vmatmul.mubr.bf16.gmra.mrb[0].mxu0 %v619
        %v1334 = vpop.f32.mrb[0].mxu0
        %v1335 = vadd.f32 %v1222, %v1334
        %v1336 = vpop.f32.mrb[0].mxu0
        %v1337 = vadd.f32 %v1224, %v1336
        %v1338 = vpop.f32.mrb[0].mxu0
        %v1339 = vadd.f32 %v1226, %v1338
        %v1340 = vpop.f32.mrb[0].mxu0
        %v1341 = vadd.f32 %v1228, %v1340
        %1342 = vmatprep.mubr.bf16.mxu0 0
        %1343 = vmatmul.mubr.bf16.gmra.mrb[0].mxu0 %v622
        %v1344 = vpop.f32.mrb[0].mxu0
        %v1345 = vadd.f32 %v1232, %v1344
        %v1346 = vpop.f32.mrb[0].mxu0
        %v1347 = vadd.f32 %v1234, %v1346
        %v1348 = vpop.f32.mrb[0].mxu0
        %v1349 = vadd.f32 %v1236, %v1348
        %v1350 = vpop.f32.mrb[0].mxu0
        %v1351 = vadd.f32 %v1238, %v1350
        %1352 = vdwg.mxu0
        %1353 = vmatprep.subr.bf16.mxu0 %v938
        %1354 = vmatpush1.bf16.msra.mxu0 %v937
        %1355 = vmatprep.subr.bf16.mxu0 %v942
        %1356 = vmatpush1.bf16.msra.mxu0 %v941
        %1357 = vmatprep.subr.bf16.mxu0 %v946
        %1358 = vmatpush1.bf16.msra.mxu0 %v945
        %1359 = vmatprep.subr.bf16.mxu0 %v950
        %1360 = vmatpush1.bf16.msra.mxu0 %v949
        %1361 = vmatprep.subr.bf16.mxu0 %v954
        %1362 = vmatpush1.bf16.msra.mxu0 %v953
        %1363 = vmatprep.subr.bf16.mxu0 %v958
        %1364 = vmatpush1.bf16.msra.mxu0 %v957
        %1365 = vmatprep.subr.bf16.mxu0 %v962
        %1366 = vmatpush1.bf16.msra.mxu0 %v961
        %1367 = vmatprep.subr.bf16.mxu0 %v966
        %1368 = vmatpush1.bf16.msra.mxu0 %v965
        %1369 = vmatprep.subr.bf16.mxu0 %v970
        %1370 = vmatpush1.bf16.msra.mxu0 %v969
        %1371 = vmatprep.subr.bf16.mxu0 %v974
        %1372 = vmatpush1.bf16.msra.mxu0 %v973
        %1373 = vmatprep.subr.bf16.mxu0 %v978
        %1374 = vmatpush1.bf16.msra.mxu0 %v977
        %1375 = vmatprep.subr.bf16.mxu0 %v982
        %1376 = vmatpush1.bf16.msra.mxu0 %v981
        %1377 = vmatprep.subr.bf16.mxu0 %v986
        %1378 = vmatpush1.bf16.msra.mxu0 %v985
        %1379 = vmatprep.subr.bf16.mxu0 %v990
        %1380 = vmatpush1.bf16.msra.mxu0 %v989
        %1381 = vmatprep.subr.bf16.mxu0 %v994
        %1382 = vmatpush1.bf16.msra.mxu0 %v993
        %1383 = vmatprep.subr.bf16.mxu0 %v998
        %1384 = vmatpush1.bf16.msra.mxu0 %v997
        %1385 = vmatprep.mubr.bf16.mxu0 %v600
        %1386 = vmatmul.mubr.bf16.gmra.mrb[0].mxu0 %v599
        %v1387 = vpop.f32.mrb[0].mxu0
        %v1388 = vadd.f32 %v510, %v1387
        %v1389 = vpop.f32.mrb[0].mxu0
        %v1390 = vadd.f32 %v514, %v1389
        %v1391 = vpop.f32.mrb[0].mxu0
        %v1392 = vadd.f32 %v510, %v1391
        %v1393 = vpop.f32.mrb[0].mxu0
        %v1394 = vadd.f32 %v514, %v1393
        %1395 = vmatprep.mubr.bf16.mxu0 %v603
        %1396 = vmatmul.mubr.bf16.gmra.mrb[0].mxu0 %v602
        %v1397 = vpop.f32.mrb[0].mxu0
        %v1398 = vadd.f32 %v510, %v1397
        %v1399 = vpop.f32.mrb[0].mxu0
        %v1400 = vadd.f32 %v514, %v1399
        %v1401 = vpop.f32.mrb[0].mxu0
        %v1402 = vadd.f32 %v510, %v1401
        %v1403 = vpop.f32.mrb[0].mxu0
        %v1404 = vadd.f32 %v514, %v1403
        %1405 = vmatprep.mubr.bf16.mxu0 %v606
        %1406 = vmatmul.mubr.bf16.gmra.mrb[0].mxu0 %v605
        %v1407 = vpop.f32.mrb[0].mxu0
        %v1408 = vadd.f32 %v510, %v1407
        %v1409 = vpop.f32.mrb[0].mxu0
        %v1410 = vadd.f32 %v514, %v1409
        %v1411 = vpop.f32.mrb[0].mxu0
        %v1412 = vadd.f32 %v510, %v1411
        %v1413 = vpop.f32.mrb[0].mxu0
        %v1414 = vadd.f32 %v514, %v1413
        %1415 = vmatprep.mubr.bf16.mxu0 %v609
        %1416 = vmatmul.mubr.bf16.gmra.mrb[0].mxu0 %v608
        %v1417 = vpop.f32.mrb[0].mxu0
        %v1418 = vadd.f32 %v510, %v1417
        %v1419 = vpop.f32.mrb[0].mxu0
        %v1420 = vadd.f32 %v514, %v1419
        %v1421 = vpop.f32.mrb[0].mxu0
        %v1422 = vadd.f32 %v510, %v1421
        %v1423 = vpop.f32.mrb[0].mxu0
        %v1424 = vadd.f32 %v514, %v1423
        %1425 = vmatprep.mubr.bf16.mxu0 %v612
        %1426 = vmatmul.mubr.bf16.gmra.mrb[0].mxu0 %v611
        %v1427 = vpop.f32.mrb[0].mxu0
        %v1428 = vadd.f32 %v510, %v1427
        %v1429 = vpop.f32.mrb[0].mxu0
        %v1430 = vadd.f32 %v514, %v1429
        %v1431 = vpop.f32.mrb[0].mxu0
        %v1432 = vadd.f32 %v510, %v1431
        %v1433 = vpop.f32.mrb[0].mxu0
        %v1434 = vadd.f32 %v514, %v1433
        %1435 = vmatprep.mubr.bf16.mxu0 %v615
        %1436 = vmatmul.mubr.bf16.gmra.mrb[0].mxu0 %v614
        %v1437 = vpop.f32.mrb[0].mxu0
        %v1438 = vadd.f32 %v510, %v1437
        %v1439 = vpop.f32.mrb[0].mxu0
        %v1440 = vadd.f32 %v514, %v1439
        %v1441 = vpop.f32.mrb[0].mxu0
        %v1442 = vadd.f32 %v510, %v1441
        %v1443 = vpop.f32.mrb[0].mxu0
        %v1444 = vadd.f32 %v514, %v1443
        %1445 = vmatprep.mubr.bf16.mxu0 %v618
        %1446 = vmatmul.mubr.bf16.gmra.mrb[0].mxu0 %v617
        %v1447 = vpop.f32.mrb[0].mxu0
        %v1448 = vadd.f32 %v510, %v1447
        %v1449 = vpop.f32.mrb[0].mxu0
        %v1450 = vadd.f32 %v514, %v1449
        %v1451 = vpop.f32.mrb[0].mxu0
        %v1452 = vadd.f32 %v510, %v1451
        %v1453 = vpop.f32.mrb[0].mxu0
        %v1454 = vadd.f32 %v514, %v1453
        %1455 = vmatprep.mubr.bf16.mxu0 %v621
        %1456 = vmatmul.mubr.bf16.gmra.mrb[0].mxu0 %v620
        %v1457 = vpop.f32.mrb[0].mxu0
        %v1458 = vadd.f32 %v510, %v1457
        %v1459 = vpop.f32.mrb[0].mxu0
        %v1460 = vadd.f32 %v514, %v1459
        %v1461 = vpop.f32.mrb[0].mxu0
        %v1462 = vadd.f32 %v510, %v1461
        %v1463 = vpop.f32.mrb[0].mxu0
        %v1464 = vadd.f32 %v514, %v1463
        %1465 = vdwg.mxu0
        %1466 = vmatprep.subr.bf16.mxu0 %v1002
        %1467 = vmatpush1.bf16.msra.mxu0 %v1001
        %1468 = vmatprep.subr.bf16.mxu0 %v1006
        %1469 = vmatpush1.bf16.msra.mxu0 %v1005
        %1470 = vmatprep.subr.bf16.mxu0 %v1010
        %1471 = vmatpush1.bf16.msra.mxu0 %v1009
        %1472 = vmatprep.subr.bf16.mxu0 %v1014
        %1473 = vmatpush1.bf16.msra.mxu0 %v1013
        %1474 = vmatprep.subr.bf16.mxu0 %v1018
        %1475 = vmatpush1.bf16.msra.mxu0 %v1017
        %1476 = vmatprep.subr.bf16.mxu0 %v1022
        %1477 = vmatpush1.bf16.msra.mxu0 %v1021
        %1478 = vmatprep.subr.bf16.mxu0 %v1026
        %1479 = vmatpush1.bf16.msra.mxu0 %v1025
        %1480 = vmatprep.subr.bf16.mxu0 %v1030
        %1481 = vmatpush1.bf16.msra.mxu0 %v1029
        %1482 = vmatprep.subr.bf16.mxu0 0
        %1483 = vmatpush1.bf16.msra.mxu0 0
        %1484 = vmatprep.subr.bf16.mxu0 0
        %1485 = vmatpush1.bf16.msra.mxu0 0
        %1486 = vmatprep.subr.bf16.mxu0 0
        %1487 = vmatpush1.bf16.msra.mxu0 0
        %1488 = vmatprep.subr.bf16.mxu0 0
        %1489 = vmatpush1.bf16.msra.mxu0 0
        %1490 = vmatprep.subr.bf16.mxu0 0
        %1491 = vmatpush1.bf16.msra.mxu0 0
        %1492 = vmatprep.subr.bf16.mxu0 0
        %1493 = vmatpush1.bf16.msra.mxu0 0
        %1494 = vmatprep.subr.bf16.mxu0 0
        %1495 = vmatpush1.bf16.msra.mxu0 0
        %1496 = vmatprep.subr.bf16.mxu0 0
        %1497 = vmatpush1.bf16.msra.mxu0 0
        %1498 = vmatprep.mubr.bf16.mxu0 0
        %1499 = vmatmul.mubr.bf16.gmra.mrb[0].mxu0 %v601
        %v1500 = vpop.f32.mrb[0].mxu0
        %v1501 = vadd.f32 %v1388, %v1500
        %v1502 = vpop.f32.mrb[0].mxu0
        %v1503 = vadd.f32 %v1390, %v1502
        %v1504 = vpop.f32.mrb[0].mxu0
        %v1505 = vadd.f32 %v1392, %v1504
        %v1506 = vpop.f32.mrb[0].mxu0
        %v1507 = vadd.f32 %v1394, %v1506
        %1508 = vmatprep.mubr.bf16.mxu0 0
        %1509 = vmatmul.mubr.bf16.gmra.mrb[0].mxu0 %v604
        %v1510 = vpop.f32.mrb[0].mxu0
        %v1511 = vadd.f32 %v1398, %v1510
        %v1512 = vpop.f32.mrb[0].mxu0
        %v1513 = vadd.f32 %v1400, %v1512
        %v1514 = vpop.f32.mrb[0].mxu0
        %v1515 = vadd.f32 %v1402, %v1514
        %v1516 = vpop.f32.mrb[0].mxu0
        %v1517 = vadd.f32 %v1404, %v1516
        %1518 = vmatprep.mubr.bf16.mxu0 0
        %1519 = vmatmul.mubr.bf16.gmra.mrb[0].mxu0 %v607
        %v1520 = vpop.f32.mrb[0].mxu0
        %v1521 = vadd.f32 %v1408, %v1520
        %v1522 = vpop.f32.mrb[0].mxu0
        %v1523 = vadd.f32 %v1410, %v1522
        %v1524 = vpop.f32.mrb[0].mxu0
        %v1525 = vadd.f32 %v1412, %v1524
        %v1526 = vpop.f32.mrb[0].mxu0
        %v1527 = vadd.f32 %v1414, %v1526
        %1528 = vmatprep.mubr.bf16.mxu0 0
        %1529 = vmatmul.mubr.bf16.gmra.mrb[0].mxu0 %v610
        %v1530 = vpop.f32.mrb[0].mxu0
        %v1531 = vadd.f32 %v1418, %v1530
        %v1532 = vpop.f32.mrb[0].mxu0
        %v1533 = vadd.f32 %v1420, %v1532
        %v1534 = vpop.f32.mrb[0].mxu0
        %v1535 = vadd.f32 %v1422, %v1534
        %v1536 = vpop.f32.mrb[0].mxu0
        %v1537 = vadd.f32 %v1424, %v1536
        %1538 = vmatprep.mubr.bf16.mxu0 0
        %1539 = vmatmul.mubr.bf16.gmra.mrb[0].mxu0 %v613
        %v1540 = vpop.f32.mrb[0].mxu0
        %v1541 = vadd.f32 %v1428, %v1540
        %v1542 = vpop.f32.mrb[0].mxu0
        %v1543 = vadd.f32 %v1430, %v1542
        %v1544 = vpop.f32.mrb[0].mxu0
        %v1545 = vadd.f32 %v1432, %v1544
        %v1546 = vpop.f32.mrb[0].mxu0
        %v1547 = vadd.f32 %v1434, %v1546
        %1548 = vmatprep.mubr.bf16.mxu0 0
        %1549 = vmatmul.mubr.bf16.gmra.mrb[0].mxu0 %v616
        %v1550 = vpop.f32.mrb[0].mxu0
        %v1551 = vadd.f32 %v1438, %v1550
        %v1552 = vpop.f32.mrb[0].mxu0
        %v1553 = vadd.f32 %v1440, %v1552
        %v1554 = vpop.f32.mrb[0].mxu0
        %v1555 = vadd.f32 %v1442, %v1554
        %v1556 = vpop.f32.mrb[0].mxu0
        %v1557 = vadd.f32 %v1444, %v1556
        %1558 = vmatprep.mubr.bf16.mxu0 0
        %1559 = vmatmul.mubr.bf16.gmra.mrb[0].mxu0 %v619
        %v1560 = vpop.f32.mrb[0].mxu0
        %v1561 = vadd.f32 %v1448, %v1560
        %v1562 = vpop.f32.mrb[0].mxu0
        %v1563 = vadd.f32 %v1450, %v1562
        %v1564 = vpop.f32.mrb[0].mxu0
        %v1565 = vadd.f32 %v1452, %v1564
        %v1566 = vpop.f32.mrb[0].mxu0
        %v1567 = vadd.f32 %v1454, %v1566
        %1568 = vmatprep.mubr.bf16.mxu0 0
        %1569 = vmatmul.mubr.bf16.gmra.mrb[0].mxu0 %v622
        %v1570 = vpop.f32.mrb[0].mxu0
        %v1571 = vadd.f32 %v1458, %v1570
        %v1572 = vpop.f32.mrb[0].mxu0
        %v1573 = vadd.f32 %v1460, %v1572
        %v1574 = vpop.f32.mrb[0].mxu0
        %v1575 = vadd.f32 %v1462, %v1574
        %v1576 = vpop.f32.mrb[0].mxu0
        %v1577 = vadd.f32 %v1464, %v1576
        %1578 = vdwg.mxu0
        %v1579 = vmax.f32 %v1275, %v1501
        %v1580 = vmax.f32 %v1277, %v1503
        %v1581 = vmax.f32 %v1279, %v1505
        %v1582 = vmax.f32 %v1281, %v1507
        %v1583 = vmax.f32 %v1285, %v1511
        %v1584 = vmax.f32 %v1287, %v1513
        %v1585 = vmax.f32 %v1289, %v1515
        %v1586 = vmax.f32 %v1291, %v1517
        %v1587 = vmax.f32 %v1295, %v1521
        %v1588 = vmax.f32 %v1297, %v1523
        %v1589 = vmax.f32 %v1299, %v1525
        %v1590 = vmax.f32 %v1301, %v1527
        %v1591 = vmax.f32 %v1305, %v1531
        %v1592 = vmax.f32 %v1307, %v1533
        %v1593 = vmax.f32 %v1309, %v1535
        %v1594 = vmax.f32 %v1311, %v1537
        %v1595 = vmax.f32 %v1315, %v1541
        %v1596 = vmax.f32 %v1317, %v1543
        %v1597 = vmax.f32 %v1319, %v1545
        %v1598 = vmax.f32 %v1321, %v1547
        %v1599 = vmax.f32 %v1325, %v1551
        %v1600 = vmax.f32 %v1327, %v1553
        %v1601 = vmax.f32 %v1329, %v1555
        %v1602 = vmax.f32 %v1331, %v1557
        %v1603 = vmax.f32 %v1335, %v1561
        %v1604 = vmax.f32 %v1337, %v1563
        %v1605 = vmax.f32 %v1339, %v1565
        %v1606 = vmax.f32 %v1341, %v1567
        %v1607 = vmax.f32 %v1345, %v1571
        %v1608 = vmax.f32 %v1347, %v1573
        %v1609 = vmax.f32 %v1349, %v1575
        %v1610 = vmax.f32 %v1351, %v1577
        %v1611 = vmax.f32 %v1579, %v1580
        %v1612 = vmax.f32 %v1581, %v1582
        %v1613 = vmax.f32 %v1583, %v1584
        %v1614 = vmax.f32 %v1585, %v1586
        %v1615 = vmax.f32 %v1587, %v1588
        %v1616 = vmax.f32 %v1589, %v1590
        %v1617 = vmax.f32 %v1591, %v1592
        %v1618 = vmax.f32 %v1593, %v1594
        %v1619 = vmax.f32 %v1595, %v1596
        %v1620 = vmax.f32 %v1597, %v1598
        %v1621 = vmax.f32 %v1599, %v1600
        %v1622 = vmax.f32 %v1601, %v1602
        %v1623 = vmax.f32 %v1603, %v1604
        %v1624 = vmax.f32 %v1605, %v1606
        %v1625 = vmax.f32 %v1607, %v1608
        %v1626 = vmax.f32 %v1609, %v1610
        %1643 = vrot.lane.b32.xlu0 %v1611, 64
        %v1644 = vpop.permute.xlu0 %1643
        %1645 = vrot.lane.b32.xlu0 %v1612, 64
        %v1646 = vpop.permute.xlu0 %1645
        %1647 = vrot.lane.b32.xlu0 %v1613, 64
        %v1648 = vpop.permute.xlu0 %1647
        %1649 = vrot.lane.b32.xlu0 %v1614, 64
        %v1650 = vpop.permute.xlu0 %1649
        %1651 = vrot.lane.b32.xlu0 %v1615, 64
        %v1652 = vpop.permute.xlu0 %1651
        %1653 = vrot.lane.b32.xlu0 %v1616, 64
        %v1654 = vpop.permute.xlu0 %1653
        %1655 = vrot.lane.b32.xlu0 %v1617, 64
        %v1656 = vpop.permute.xlu0 %1655
        %1657 = vrot.lane.b32.xlu0 %v1618, 64
        %v1658 = vpop.permute.xlu0 %1657
        %1659 = vrot.lane.b32.xlu0 %v1619, 64
        %v1660 = vpop.permute.xlu0 %1659
        %1661 = vrot.lane.b32.xlu0 %v1620, 64
        %v1662 = vpop.permute.xlu0 %1661
        %1663 = vrot.lane.b32.xlu0 %v1621, 64
        %v1664 = vpop.permute.xlu0 %1663
        %1665 = vrot.lane.b32.xlu0 %v1622, 64
        %v1666 = vpop.permute.xlu0 %1665
        %1667 = vrot.lane.b32.xlu0 %v1623, 64
        %v1668 = vpop.permute.xlu0 %1667
        %1669 = vrot.lane.b32.xlu0 %v1624, 64
        %v1670 = vpop.permute.xlu0 %1669
        %1671 = vrot.lane.b32.xlu0 %v1625, 64
        %v1672 = vpop.permute.xlu0 %1671
        %1673 = vrot.lane.b32.xlu0 %v1626, 64
        %v1674 = vpop.permute.xlu0 %1673
        %v1691 = vmax.f32 %v1611, %v1644
        %v1692 = vmax.f32 %v1612, %v1646
        %v1693 = vmax.f32 %v1613, %v1648
        %v1694 = vmax.f32 %v1614, %v1650
        %v1695 = vmax.f32 %v1615, %v1652
        %v1696 = vmax.f32 %v1616, %v1654
        %v1697 = vmax.f32 %v1617, %v1656
        %v1698 = vmax.f32 %v1618, %v1658
        %v1699 = vmax.f32 %v1619, %v1660
        %v1700 = vmax.f32 %v1620, %v1662
        %v1701 = vmax.f32 %v1621, %v1664
        %v1702 = vmax.f32 %v1622, %v1666
        %v1703 = vmax.f32 %v1623, %v1668
        %v1704 = vmax.f32 %v1624, %v1670
        %v1705 = vmax.f32 %v1625, %v1672
        %v1706 = vmax.f32 %v1626, %v1674
        %1723 = vrot.lane.b32.xlu0 %v1691, 96
        %v1724 = vpop.permute.xlu0 %1723
        %1725 = vrot.lane.b32.xlu0 %v1692, 96
        %v1726 = vpop.permute.xlu0 %1725
        %1727 = vrot.lane.b32.xlu0 %v1693, 96
        %v1728 = vpop.permute.xlu0 %1727
        %1729 = vrot.lane.b32.xlu0 %v1694, 96
        %v1730 = vpop.permute.xlu0 %1729
        %1731 = vrot.lane.b32.xlu0 %v1695, 96
        %v1732 = vpop.permute.xlu0 %1731
        %1733 = vrot.lane.b32.xlu0 %v1696, 96
        %v1734 = vpop.permute.xlu0 %1733
        %1735 = vrot.lane.b32.xlu0 %v1697, 96
        %v1736 = vpop.permute.xlu0 %1735
        %1737 = vrot.lane.b32.xlu0 %v1698, 96
        %v1738 = vpop.permute.xlu0 %1737
        %1739 = vrot.lane.b32.xlu0 %v1699, 96
        %v1740 = vpop.permute.xlu0 %1739
        %1741 = vrot.lane.b32.xlu0 %v1700, 96
        %v1742 = vpop.permute.xlu0 %1741
        %1743 = vrot.lane.b32.xlu0 %v1701, 96
        %v1744 = vpop.permute.xlu0 %1743
        %1745 = vrot.lane.b32.xlu0 %v1702, 96
        %v1746 = vpop.permute.xlu0 %1745
        %1747 = vrot.lane.b32.xlu0 %v1703, 96
        %v1748 = vpop.permute.xlu0 %1747
        %1749 = vrot.lane.b32.xlu0 %v1704, 96
        %v1750 = vpop.permute.xlu0 %1749
        %1751 = vrot.lane.b32.xlu0 %v1705, 96
        %v1752 = vpop.permute.xlu0 %1751
        %1753 = vrot.lane.b32.xlu0 %v1706, 96
        %v1754 = vpop.permute.xlu0 %1753
        %v1771 = vmax.f32 %v1691, %v1724
        %v1772 = vmax.f32 %v1692, %v1726
        %v1773 = vmax.f32 %v1693, %v1728
        %v1774 = vmax.f32 %v1694, %v1730
        %v1775 = vmax.f32 %v1695, %v1732
        %v1776 = vmax.f32 %v1696, %v1734
        %v1777 = vmax.f32 %v1697, %v1736
        %v1778 = vmax.f32 %v1698, %v1738
        %v1779 = vmax.f32 %v1699, %v1740
        %v1780 = vmax.f32 %v1700, %v1742
        %v1781 = vmax.f32 %v1701, %v1744
        %v1782 = vmax.f32 %v1702, %v1746
        %v1783 = vmax.f32 %v1703, %v1748
        %v1784 = vmax.f32 %v1704, %v1750
        %v1785 = vmax.f32 %v1705, %v1752
        %v1786 = vmax.f32 %v1706, %v1754
        %1803 = vrot.lane.b32.xlu0 %v1771, 112
        %v1804 = vpop.permute.xlu0 %1803
        %1805 = vrot.lane.b32.xlu0 %v1772, 112
        %v1806 = vpop.permute.xlu0 %1805
        %1807 = vrot.lane.b32.xlu0 %v1773, 112
        %v1808 = vpop.permute.xlu0 %1807
        %1809 = vrot.lane.b32.xlu0 %v1774, 112
        %v1810 = vpop.permute.xlu0 %1809
        %1811 = vrot.lane.b32.xlu0 %v1775, 112
        %v1812 = vpop.permute.xlu0 %1811
        %1813 = vrot.lane.b32.xlu0 %v1776, 112
        %v1814 = vpop.permute.xlu0 %1813
        %1815 = vrot.lane.b32.xlu0 %v1777, 112
        %v1816 = vpop.permute.xlu0 %1815
        %1817 = vrot.lane.b32.xlu0 %v1778, 112
        %v1818 = vpop.permute.xlu0 %1817
        %1819 = vrot.lane.b32.xlu0 %v1779, 112
        %v1820 = vpop.permute.xlu0 %1819
        %1821 = vrot.lane.b32.xlu0 %v1780, 112
        %v1822 = vpop.permute.xlu0 %1821
        %1823 = vrot.lane.b32.xlu0 %v1781, 112
        %v1824 = vpop.permute.xlu0 %1823
        %1825 = vrot.lane.b32.xlu0 %v1782, 112
        %v1826 = vpop.permute.xlu0 %1825
        %1827 = vrot.lane.b32.xlu0 %v1783, 112
        %v1828 = vpop.permute.xlu0 %1827
        %1829 = vrot.lane.b32.xlu0 %v1784, 112
        %v1830 = vpop.permute.xlu0 %1829
        %1831 = vrot.lane.b32.xlu0 %v1785, 112
        %v1832 = vpop.permute.xlu0 %1831
        %1833 = vrot.lane.b32.xlu0 %v1786, 112
        %v1834 = vpop.permute.xlu0 %1833
        %v1851 = vmax.f32 %v1771, %v1804
        %v1852 = vmax.f32 %v1772, %v1806
        %v1853 = vmax.f32 %v1773, %v1808
        %v1854 = vmax.f32 %v1774, %v1810
        %v1855 = vmax.f32 %v1775, %v1812
        %v1856 = vmax.f32 %v1776, %v1814
        %v1857 = vmax.f32 %v1777, %v1816
        %v1858 = vmax.f32 %v1778, %v1818
        %v1859 = vmax.f32 %v1779, %v1820
        %v1860 = vmax.f32 %v1780, %v1822
        %v1861 = vmax.f32 %v1781, %v1824
        %v1862 = vmax.f32 %v1782, %v1826
        %v1863 = vmax.f32 %v1783, %v1828
        %v1864 = vmax.f32 %v1784, %v1830
        %v1865 = vmax.f32 %v1785, %v1832
        %v1866 = vmax.f32 %v1786, %v1834
        %v1867 = vmax.f32 %v1851, 0.0
        %v1868 = vmax.f32 %v1852, 0.0
        %v1869 = vmax.f32 %v1853, 0.0
        %v1870 = vmax.f32 %v1854, 0.0
        %v1871 = vmax.f32 %v1855, 0.0
        %v1872 = vmax.f32 %v1856, 0.0
        %v1873 = vmax.f32 %v1857, 0.0
        %v1874 = vmax.f32 %v1858, 0.0
        %v1875 = vmax.f32 %v1859, 0.0
        %v1876 = vmax.f32 %v1860, 0.0
        %v1877 = vmax.f32 %v1861, 0.0
        %v1878 = vmax.f32 %v1862, 0.0
        %v1879 = vmax.f32 %v1863, 0.0
        %v1880 = vmax.f32 %v1864, 0.0
        %v1881 = vmax.f32 %v1865, 0.0
        %v1882 = vmax.f32 %v1866, 0.0
        %v1883 = vpack.c.bf16 %v1868, %v1867
        %v1884 = vpack.c.bf16 %v1870, %v1869
        %v1885 = vpack.c.bf16 %v1872, %v1871
        %v1886 = vpack.c.bf16 %v1874, %v1873
        %v1887 = vpack.c.bf16 %v1876, %v1875
        %v1888 = vpack.c.bf16 %v1878, %v1877
        %v1889 = vpack.c.bf16 %v1880, %v1879
        %v1890 = vpack.c.bf16 %v1882, %v1881
        %v1891 = vld [vmem:[%s3] sm:$0xf]
        %v1892 = vld [vmem:[%s3 + $0x4] sm:$0xf]
        %v1893 = vld [vmem:[%s4] sm:$0x1]
        %v1895 = vlaneseq
        %v1896 = vshrl.u32 %v1895, 7
        %v1897 = vsub.s32 0, %v1896
        %v1898 = vrot.slane %v1893, %v1897
        %v1902 = vunpack.c.l.b16 %v1891
        %v1903 = vunpack.c.l.b16 %v1892
        %v1904 = vpack.c.b16 %v1903, %v1902
        %vm1906 = vcmask 130048
        %v1908 = vsel %vm1906, %v1883, 0
        %v1911 = vsel %vm1906, %v1884, 0
        %v1914 = vsel %vm1906, %v1885, 0
        %v1917 = vsel %vm1906, %v1886, 0
        %v1920 = vsel %vm1906, %v1887, 0
        %v1923 = vsel %vm1906, %v1888, 0
        %v1926 = vsel %vm1906, %v1889, 0
        %v1929 = vsel %vm1906, %v1890, 0
        %1931 = vmatprep.subr.bf16.mxu0 0
        %1932 = vmatpush1.bf16.msra.mxu0 %v1904
        %1933 = vmatprep.subr.bf16.mxu0 0
        %1934 = vmatpush1.bf16.msra.mxu0 0
        %1935 = vmatprep.subr.bf16.mxu0 0
        %1936 = vmatpush1.bf16.msra.mxu0 0
        %1937 = vmatprep.subr.bf16.mxu0 0
        %1938 = vmatpush1.bf16.msra.mxu0 0
        %1939 = vmatprep.subr.bf16.mxu0 0
        %1940 = vmatpush1.bf16.msra.mxu0 0
        %1941 = vmatprep.subr.bf16.mxu0 0
        %1942 = vmatpush1.bf16.msra.mxu0 0
        %1943 = vmatprep.subr.bf16.mxu0 0
        %1944 = vmatpush1.bf16.msra.mxu0 0
        %1945 = vmatprep.subr.bf16.mxu0 0
        %1946 = vmatpush1.bf16.msra.mxu0 0
        %1947 = vmatprep.subr.bf16.mxu0 0
        %1948 = vmatpush1.bf16.msra.mxu0 0
        %1949 = vmatprep.subr.bf16.mxu0 0
        %1950 = vmatpush1.bf16.msra.mxu0 0
        %1951 = vmatprep.subr.bf16.mxu0 0
        %1952 = vmatpush1.bf16.msra.mxu0 0
        %1953 = vmatprep.subr.bf16.mxu0 0
        %1954 = vmatpush1.bf16.msra.mxu0 0
        %1955 = vmatprep.subr.bf16.mxu0 0
        %1956 = vmatpush1.bf16.msra.mxu0 0
        %1957 = vmatprep.subr.bf16.mxu0 0
        %1958 = vmatpush1.bf16.msra.mxu0 0
        %1959 = vmatprep.subr.bf16.mxu0 0
        %1960 = vmatpush1.bf16.msra.mxu0 0
        %1961 = vmatprep.subr.bf16.mxu0 0
        %1962 = vmatpush1.bf16.msra.mxu0 0
        %1963 = vmatprep.mubr.bf16.mxu0 0
        %1964 = vmatmul.mubr.bf16.gmra.mrb[0].mxu0 %v1908
        %v1965 = vpop.f32.mrb[0].mxu0
        %v1966 = vadd.f32 %v1898, %v1965
        %v1967 = vpop.f32.mrb[0].mxu0
        %v1968 = vpop.f32.mrb[0].mxu0
        %v1969 = vadd.f32 %v1898, %v1968
        %v1970 = vpop.f32.mrb[0].mxu0
        %1971 = vmatprep.mubr.bf16.mxu0 0
        %1972 = vmatmul.mubr.bf16.gmra.mrb[0].mxu0 %v1911
        %v1973 = vpop.f32.mrb[0].mxu0
        %v1974 = vadd.f32 %v1898, %v1973
        %v1975 = vpop.f32.mrb[0].mxu0
        %v1976 = vpop.f32.mrb[0].mxu0
        %v1977 = vadd.f32 %v1898, %v1976
        %v1978 = vpop.f32.mrb[0].mxu0
        %1979 = vmatprep.mubr.bf16.mxu0 0
        %1980 = vmatmul.mubr.bf16.gmra.mrb[0].mxu0 %v1914
        %v1981 = vpop.f32.mrb[0].mxu0
        %v1982 = vadd.f32 %v1898, %v1981
        %v1983 = vpop.f32.mrb[0].mxu0
        %v1984 = vpop.f32.mrb[0].mxu0
        %v1985 = vadd.f32 %v1898, %v1984
        %v1986 = vpop.f32.mrb[0].mxu0
        %1987 = vmatprep.mubr.bf16.mxu0 0
        %1988 = vmatmul.mubr.bf16.gmra.mrb[0].mxu0 %v1917
        %v1989 = vpop.f32.mrb[0].mxu0
        %v1990 = vadd.f32 %v1898, %v1989
        %v1991 = vpop.f32.mrb[0].mxu0
        %v1992 = vpop.f32.mrb[0].mxu0
        %v1993 = vadd.f32 %v1898, %v1992
        %v1994 = vpop.f32.mrb[0].mxu0
        %1995 = vmatprep.mubr.bf16.mxu0 0
        %1996 = vmatmul.mubr.bf16.gmra.mrb[0].mxu0 %v1920
        %v1997 = vpop.f32.mrb[0].mxu0
        %v1998 = vadd.f32 %v1898, %v1997
        %v1999 = vpop.f32.mrb[0].mxu0
        %v2000 = vpop.f32.mrb[0].mxu0
        %v2001 = vadd.f32 %v1898, %v2000
        %v2002 = vpop.f32.mrb[0].mxu0
        %2003 = vmatprep.mubr.bf16.mxu0 0
        %2004 = vmatmul.mubr.bf16.gmra.mrb[0].mxu0 %v1923
        %v2005 = vpop.f32.mrb[0].mxu0
        %v2006 = vadd.f32 %v1898, %v2005
        %v2007 = vpop.f32.mrb[0].mxu0
        %v2008 = vpop.f32.mrb[0].mxu0
        %v2009 = vadd.f32 %v1898, %v2008
        %v2010 = vpop.f32.mrb[0].mxu0
        %2011 = vmatprep.mubr.bf16.mxu0 0
        %2012 = vmatmul.mubr.bf16.gmra.mrb[0].mxu0 %v1926
        %v2013 = vpop.f32.mrb[0].mxu0
        %v2014 = vadd.f32 %v1898, %v2013
        %v2015 = vpop.f32.mrb[0].mxu0
        %v2016 = vpop.f32.mrb[0].mxu0
        %v2017 = vadd.f32 %v1898, %v2016
        %v2018 = vpop.f32.mrb[0].mxu0
        %2019 = vmatprep.mubr.bf16.mxu0 0
        %2020 = vmatmul.mubr.bf16.gmra.mrb[0].mxu0 %v1929
        %v2021 = vpop.f32.mrb[0].mxu0
        %v2022 = vadd.f32 %v1898, %v2021
        %v2023 = vpop.f32.mrb[0].mxu0
        %v2024 = vpop.f32.mrb[0].mxu0
        %v2025 = vadd.f32 %v1898, %v2024
        %v2026 = vpop.f32.mrb[0].mxu0
        %2027 = vdwg.mxu0
        %v2028 = vpack.c.bf16 %v1969, %v1966
        %v2029 = vpack.c.bf16 %v1977, %v1974
        %v2030 = vpack.c.bf16 %v1985, %v1982
        %v2031 = vpack.c.bf16 %v1993, %v1990
        %v2032 = vpack.c.bf16 %v2001, %v1998
        %v2033 = vpack.c.bf16 %v2009, %v2006
        %v2034 = vpack.c.bf16 %v2017, %v2014
        %v2035 = vpack.c.bf16 %v2025, %v2022
        %v2036 = vld [vmem:[%s5] sm:$0x1]
        %v2038 = vlaneseq
        %v2039 = vshrl.u32 %v2038, 7
        %v2040 = vsub.s32 0, %v2039
        %v2041 = vrot.slane %v2036, %v2040
        %2051 = vrot.lane.b32.xlu0 %v2028, 112
        %v2052 = vpop.permute.xlu0 %2051
        %2053 = vrot.lane.b32.xlu0 %v2029, 112
        %v2054 = vpop.permute.xlu0 %2053
        %2055 = vrot.lane.b32.xlu0 %v2030, 112
        %v2056 = vpop.permute.xlu0 %2055
        %2057 = vrot.lane.b32.xlu0 %v2031, 112
        %v2058 = vpop.permute.xlu0 %2057
        %2059 = vrot.lane.b32.xlu0 %v2032, 112
        %v2060 = vpop.permute.xlu0 %2059
        %2061 = vrot.lane.b32.xlu0 %v2033, 112
        %v2062 = vpop.permute.xlu0 %2061
        %2063 = vrot.lane.b32.xlu0 %v2034, 112
        %v2064 = vpop.permute.xlu0 %2063
        %2065 = vrot.lane.b32.xlu0 %v2035, 112
        %v2066 = vpop.permute.xlu0 %2065
        %v2068 = vsel %vm1906, %v2028, 0
        %v2071 = vsel %vm1906, %v2029, 0
        %v2074 = vsel %vm1906, %v2030, 0
        %v2077 = vsel %vm1906, %v2031, 0
        %v2080 = vsel %vm1906, %v2032, 0
        %v2083 = vsel %vm1906, %v2033, 0
        %v2086 = vsel %vm1906, %v2034, 0
        %v2089 = vsel %vm1906, %v2035, 0
        %v2092 = vsel %vm1906, %v2052, 0
        %v2095 = vsel %vm1906, %v2054, 0
        %v2098 = vsel %vm1906, %v2056, 0
        %v2101 = vsel %vm1906, %v2058, 0
        %v2104 = vsel %vm1906, %v2060, 0
        %v2107 = vsel %vm1906, %v2062, 0
        %v2110 = vsel %vm1906, %v2064, 0
        %v2113 = vsel %vm1906, %v2066, 0
        %2115 = vmatprep.subr.bf16.mxu0 0
        %2116 = vmatpush1.bf16.xpose.msra.mxu0 %v2092
        %2117 = vmatprep.subr.bf16.mxu0 0
        %2118 = vmatpush1.bf16.xpose.msra.mxu0 %v2095
        %2119 = vmatprep.subr.bf16.mxu0 0
        %2120 = vmatpush1.bf16.xpose.msra.mxu0 %v2098
        %2121 = vmatprep.subr.bf16.mxu0 0
        %2122 = vmatpush1.bf16.xpose.msra.mxu0 %v2101
        %2123 = vmatprep.subr.bf16.mxu0 0
        %2124 = vmatpush1.bf16.xpose.msra.mxu0 %v2104
        %2125 = vmatprep.subr.bf16.mxu0 0
        %2126 = vmatpush1.bf16.xpose.msra.mxu0 %v2107
        %2127 = vmatprep.subr.bf16.mxu0 0
        %2128 = vmatpush1.bf16.xpose.msra.mxu0 %v2110
        %2129 = vmatprep.subr.bf16.mxu0 0
        %2130 = vmatpush1.bf16.xpose.msra.mxu0 %v2113
        %2131 = vmatprep.subr.bf16.mxu0 0
        %2132 = vmatpush1.bf16.xpose.msra.mxu0 0
        %2133 = vmatprep.subr.bf16.mxu0 0
        %2134 = vmatpush1.bf16.xpose.msra.mxu0 0
        %2135 = vmatprep.subr.bf16.mxu0 0
        %2136 = vmatpush1.bf16.xpose.msra.mxu0 0
        %2137 = vmatprep.subr.bf16.mxu0 0
        %2138 = vmatpush1.bf16.xpose.msra.mxu0 0
        %2139 = vmatprep.subr.bf16.mxu0 0
        %2140 = vmatpush1.bf16.xpose.msra.mxu0 0
        %2141 = vmatprep.subr.bf16.mxu0 0
        %2142 = vmatpush1.bf16.xpose.msra.mxu0 0
        %2143 = vmatprep.subr.bf16.mxu0 0
        %2144 = vmatpush1.bf16.xpose.msra.mxu0 0
        %2145 = vmatprep.subr.bf16.mxu0 0
        %2146 = vmatpush1.bf16.xpose.msra.mxu0 0
        %2147 = vmatprep.mubr.bf16.mxu0 0
        %2148 = vmatmul.mubr.bf16.gmra.mrb[0].mxu0 %v2068
        %v2149 = vpop.f32.mrb[0].mxu0
        %v2150 = vadd.f32 %v2041, %v2149
        %v2151 = vpop.f32.mrb[0].mxu0
        %v2152 = vpop.f32.mrb[0].mxu0
        %v2153 = vadd.f32 %v2041, %v2152
        %v2154 = vpop.f32.mrb[0].mxu0
        %2155 = vmatprep.mubr.bf16.mxu0 0
        %2156 = vmatmul.mubr.bf16.gmra.mrb[0].mxu0 %v2071
        %v2157 = vpop.f32.mrb[0].mxu0
        %v2158 = vadd.f32 %v2041, %v2157
        %v2159 = vpop.f32.mrb[0].mxu0
        %v2160 = vpop.f32.mrb[0].mxu0
        %v2161 = vadd.f32 %v2041, %v2160
        %v2162 = vpop.f32.mrb[0].mxu0
        %2163 = vmatprep.mubr.bf16.mxu0 0
        %2164 = vmatmul.mubr.bf16.gmra.mrb[0].mxu0 %v2074
        %v2165 = vpop.f32.mrb[0].mxu0
        %v2166 = vadd.f32 %v2041, %v2165
        %v2167 = vpop.f32.mrb[0].mxu0
        %v2168 = vpop.f32.mrb[0].mxu0
        %v2169 = vadd.f32 %v2041, %v2168
        %v2170 = vpop.f32.mrb[0].mxu0
        %2171 = vmatprep.mubr.bf16.mxu0 0
        %2172 = vmatmul.mubr.bf16.gmra.mrb[0].mxu0 %v2077
        %v2173 = vpop.f32.mrb[0].mxu0
        %v2174 = vadd.f32 %v2041, %v2173
        %v2175 = vpop.f32.mrb[0].mxu0
        %v2176 = vpop.f32.mrb[0].mxu0
        %v2177 = vadd.f32 %v2041, %v2176
        %v2178 = vpop.f32.mrb[0].mxu0
        %2179 = vmatprep.mubr.bf16.mxu0 0
        %2180 = vmatmul.mubr.bf16.gmra.mrb[0].mxu0 %v2080
        %v2181 = vpop.f32.mrb[0].mxu0
        %v2182 = vadd.f32 %v2041, %v2181
        %v2183 = vpop.f32.mrb[0].mxu0
        %v2184 = vpop.f32.mrb[0].mxu0
        %v2185 = vadd.f32 %v2041, %v2184
        %v2186 = vpop.f32.mrb[0].mxu0
        %2187 = vmatprep.mubr.bf16.mxu0 0
        %2188 = vmatmul.mubr.bf16.gmra.mrb[0].mxu0 %v2083
        %v2189 = vpop.f32.mrb[0].mxu0
        %v2190 = vadd.f32 %v2041, %v2189
        %v2191 = vpop.f32.mrb[0].mxu0
        %v2192 = vpop.f32.mrb[0].mxu0
        %v2193 = vadd.f32 %v2041, %v2192
        %v2194 = vpop.f32.mrb[0].mxu0
        %2195 = vmatprep.mubr.bf16.mxu0 0
        %2196 = vmatmul.mubr.bf16.gmra.mrb[0].mxu0 %v2086
        %v2197 = vpop.f32.mrb[0].mxu0
        %v2198 = vadd.f32 %v2041, %v2197
        %v2199 = vpop.f32.mrb[0].mxu0
        %v2200 = vpop.f32.mrb[0].mxu0
        %v2201 = vadd.f32 %v2041, %v2200
        %v2202 = vpop.f32.mrb[0].mxu0
        %2203 = vmatprep.mubr.bf16.mxu0 0
        %2204 = vmatmul.mubr.bf16.gmra.mrb[0].mxu0 %v2089
        %v2205 = vpop.f32.mrb[0].mxu0
        %v2206 = vadd.f32 %v2041, %v2205
        %v2207 = vpop.f32.mrb[0].mxu0
        %v2208 = vpop.f32.mrb[0].mxu0
        %v2209 = vadd.f32 %v2041, %v2208
        %v2210 = vpop.f32.mrb[0].mxu0
        %2211 = vdwg.mxu0
        %2212 = vmax.xlane.f32.xlu0 %v2150
        %v2213 = vpop.xlane.xlu0 %2212
        %2214 = vmax.xlane.f32.xlu0 %v2153
        %v2215 = vpop.xlane.xlu0 %2214
        %2216 = vmax.xlane.f32.xlu0 %v2158
        %v2217 = vpop.xlane.xlu0 %2216
        %2218 = vmax.xlane.f32.xlu0 %v2161
        %v2219 = vpop.xlane.xlu0 %2218
        %2220 = vmax.xlane.f32.xlu0 %v2166
        %v2221 = vpop.xlane.xlu0 %2220
        %2222 = vmax.xlane.f32.xlu0 %v2169
        %v2223 = vpop.xlane.xlu0 %2222
        %2224 = vmax.xlane.f32.xlu0 %v2174
        %v2225 = vpop.xlane.xlu0 %2224
        %2226 = vmax.xlane.f32.xlu0 %v2177
        %v2227 = vpop.xlane.xlu0 %2226
        %2228 = vmax.xlane.f32.xlu0 %v2182
        %v2229 = vpop.xlane.xlu0 %2228
        %2230 = vmax.xlane.f32.xlu0 %v2185
        %v2231 = vpop.xlane.xlu0 %2230
        %2232 = vmax.xlane.f32.xlu0 %v2190
        %v2233 = vpop.xlane.xlu0 %2232
        %2234 = vmax.xlane.f32.xlu0 %v2193
        %v2235 = vpop.xlane.xlu0 %2234
        %2236 = vmax.xlane.f32.xlu0 %v2198
        %v2237 = vpop.xlane.xlu0 %2236
        %2238 = vmax.xlane.f32.xlu0 %v2201
        %v2239 = vpop.xlane.xlu0 %2238
        %2240 = vmax.xlane.f32.xlu0 %v2206
        %v2241 = vpop.xlane.xlu0 %2240
        %2242 = vmax.xlane.f32.xlu0 %v2209
        %v2243 = vpop.xlane.xlu0 %2242
        %vm2244 = vcmp.eq.f32.partialorder %v2150, %v2213
        %vm2245 = vcmp.eq.f32.partialorder %v2153, %v2215
        %vm2246 = vcmp.eq.f32.partialorder %v2158, %v2217
        %vm2247 = vcmp.eq.f32.partialorder %v2161, %v2219
        %vm2248 = vcmp.eq.f32.partialorder %v2166, %v2221
        %vm2249 = vcmp.eq.f32.partialorder %v2169, %v2223
        %vm2250 = vcmp.eq.f32.partialorder %v2174, %v2225
        %vm2251 = vcmp.eq.f32.partialorder %v2177, %v2227
        %vm2252 = vcmp.eq.f32.partialorder %v2182, %v2229
        %vm2253 = vcmp.eq.f32.partialorder %v2185, %v2231
        %vm2254 = vcmp.eq.f32.partialorder %v2190, %v2233
        %vm2255 = vcmp.eq.f32.partialorder %v2193, %v2235
        %vm2256 = vcmp.eq.f32.partialorder %v2198, %v2237
        %vm2257 = vcmp.eq.f32.partialorder %v2201, %v2239
        %vm2258 = vcmp.eq.f32.partialorder %v2206, %v2241
        %vm2259 = vcmp.eq.f32.partialorder %v2209, %v2243
        %v2260 = vsub.f32 %v2213, %v2213
        %v2261 = vsub.f32 %v2215, %v2215
        %v2262 = vsub.f32 %v2217, %v2217
        %v2263 = vsub.f32 %v2219, %v2219
        %v2264 = vsub.f32 %v2221, %v2221
        %v2265 = vsub.f32 %v2223, %v2223
        %v2266 = vsub.f32 %v2225, %v2225
        %v2267 = vsub.f32 %v2227, %v2227
        %v2268 = vsub.f32 %v2229, %v2229
        %v2269 = vsub.f32 %v2231, %v2231
        %v2270 = vsub.f32 %v2233, %v2233
        %v2271 = vsub.f32 %v2235, %v2235
        %v2272 = vsub.f32 %v2237, %v2237
        %v2273 = vsub.f32 %v2239, %v2239
        %v2274 = vsub.f32 %v2241, %v2241
        %v2275 = vsub.f32 %v2243, %v2243
        %v2276 = vmul.f32 %v2260, 1.442695
        %v2277 = vpow.pop %v2276
        %v2278 = vmul.f32 %v2261, 1.442695
        %v2279 = vpow.pop %v2278
        %v2280 = vmul.f32 %v2262, 1.442695
        %v2281 = vpow.pop %v2280
        %v2282 = vmul.f32 %v2263, 1.442695
        %v2283 = vpow.pop %v2282
        %v2284 = vmul.f32 %v2264, 1.442695
        %v2285 = vpow.pop %v2284
        %v2286 = vmul.f32 %v2265, 1.442695
        %v2287 = vpow.pop %v2286
        %v2288 = vmul.f32 %v2266, 1.442695
        %v2289 = vpow.pop %v2288
        %v2290 = vmul.f32 %v2267, 1.442695
        %v2291 = vpow.pop %v2290
        %v2292 = vmul.f32 %v2268, 1.442695
        %v2293 = vpow.pop %v2292
        %v2294 = vmul.f32 %v2269, 1.442695
        %v2295 = vpow.pop %v2294
        %v2296 = vmul.f32 %v2270, 1.442695
        %v2297 = vpow.pop %v2296
        %v2298 = vmul.f32 %v2271, 1.442695
        %v2299 = vpow.pop %v2298
        %v2300 = vmul.f32 %v2272, 1.442695
        %v2301 = vpow.pop %v2300
        %v2302 = vmul.f32 %v2273, 1.442695
        %v2303 = vpow.pop %v2302
        %v2304 = vmul.f32 %v2274, 1.442695
        %v2305 = vpow.pop %v2304
        %v2306 = vmul.f32 %v2275, 1.442695
        %v2307 = vpow.pop %v2306
        %v2308 = vsel %vm2244, %v2277, 0.0
        %v2309 = vsel %vm2245, %v2279, 0.0
        %v2310 = vsel %vm2246, %v2281, 0.0
        %v2311 = vsel %vm2247, %v2283, 0.0
        %v2312 = vsel %vm2248, %v2285, 0.0
        %v2313 = vsel %vm2249, %v2287, 0.0
        %v2314 = vsel %vm2250, %v2289, 0.0
        %v2315 = vsel %vm2251, %v2291, 0.0
        %v2316 = vsel %vm2252, %v2293, 0.0
        %v2317 = vsel %vm2253, %v2295, 0.0
        %v2318 = vsel %vm2254, %v2297, 0.0
        %v2319 = vsel %vm2255, %v2299, 0.0
        %v2320 = vsel %vm2256, %v2301, 0.0
        %v2321 = vsel %vm2257, %v2303, 0.0
        %v2322 = vsel %vm2258, %v2305, 0.0
        %v2323 = vsel %vm2259, %v2307, 0.0
        %v2324 = vsel %vm2244, -1e+30, %v2150
        %v2325 = vsel %vm2245, -1e+30, %v2153
        %v2326 = vsel %vm2246, -1e+30, %v2158
        %v2327 = vsel %vm2247, -1e+30, %v2161
        %v2328 = vsel %vm2248, -1e+30, %v2166
        %v2329 = vsel %vm2249, -1e+30, %v2169
        %v2330 = vsel %vm2250, -1e+30, %v2174
        %v2331 = vsel %vm2251, -1e+30, %v2177
        %v2332 = vsel %vm2252, -1e+30, %v2182
        %v2333 = vsel %vm2253, -1e+30, %v2185
        %v2334 = vsel %vm2254, -1e+30, %v2190
        %v2335 = vsel %vm2255, -1e+30, %v2193
        %v2336 = vsel %vm2256, -1e+30, %v2198
        %v2337 = vsel %vm2257, -1e+30, %v2201
        %v2338 = vsel %vm2258, -1e+30, %v2206
        %v2339 = vsel %vm2259, -1e+30, %v2209
        %2340 = vmax.xlane.f32.xlu0 %v2324
        %v2341 = vpop.xlane.xlu0 %2340
        %2342 = vmax.xlane.f32.xlu0 %v2325
        %v2343 = vpop.xlane.xlu0 %2342
        %2344 = vmax.xlane.f32.xlu0 %v2326
        %v2345 = vpop.xlane.xlu0 %2344
        %2346 = vmax.xlane.f32.xlu0 %v2327
        %v2347 = vpop.xlane.xlu0 %2346
        %2348 = vmax.xlane.f32.xlu0 %v2328
        %v2349 = vpop.xlane.xlu0 %2348
        %2350 = vmax.xlane.f32.xlu0 %v2329
        %v2351 = vpop.xlane.xlu0 %2350
        %2352 = vmax.xlane.f32.xlu0 %v2330
        %v2353 = vpop.xlane.xlu0 %2352
        %2354 = vmax.xlane.f32.xlu0 %v2331
        %v2355 = vpop.xlane.xlu0 %2354
        %2356 = vmax.xlane.f32.xlu0 %v2332
        %v2357 = vpop.xlane.xlu0 %2356
        %2358 = vmax.xlane.f32.xlu0 %v2333
        %v2359 = vpop.xlane.xlu0 %2358
        %2360 = vmax.xlane.f32.xlu0 %v2334
        %v2361 = vpop.xlane.xlu0 %2360
        %2362 = vmax.xlane.f32.xlu0 %v2335
        %v2363 = vpop.xlane.xlu0 %2362
        %2364 = vmax.xlane.f32.xlu0 %v2336
        %v2365 = vpop.xlane.xlu0 %2364
        %2366 = vmax.xlane.f32.xlu0 %v2337
        %v2367 = vpop.xlane.xlu0 %2366
        %2368 = vmax.xlane.f32.xlu0 %v2338
        %v2369 = vpop.xlane.xlu0 %2368
        %2370 = vmax.xlane.f32.xlu0 %v2339
        %v2371 = vpop.xlane.xlu0 %2370
        %vm2372 = vcmp.eq.f32.partialorder %v2324, %v2341
        %vm2373 = vcmp.eq.f32.partialorder %v2325, %v2343
        %vm2374 = vcmp.eq.f32.partialorder %v2326, %v2345
        %vm2375 = vcmp.eq.f32.partialorder %v2327, %v2347
        %vm2376 = vcmp.eq.f32.partialorder %v2328, %v2349
        %vm2377 = vcmp.eq.f32.partialorder %v2329, %v2351
        %vm2378 = vcmp.eq.f32.partialorder %v2330, %v2353
        %vm2379 = vcmp.eq.f32.partialorder %v2331, %v2355
        %vm2380 = vcmp.eq.f32.partialorder %v2332, %v2357
        %vm2381 = vcmp.eq.f32.partialorder %v2333, %v2359
        %vm2382 = vcmp.eq.f32.partialorder %v2334, %v2361
        %vm2383 = vcmp.eq.f32.partialorder %v2335, %v2363
        %vm2384 = vcmp.eq.f32.partialorder %v2336, %v2365
        %vm2385 = vcmp.eq.f32.partialorder %v2337, %v2367
        %vm2386 = vcmp.eq.f32.partialorder %v2338, %v2369
        %vm2387 = vcmp.eq.f32.partialorder %v2339, %v2371
        %v2388 = vsub.f32 %v2341, %v2213
        %v2389 = vsub.f32 %v2343, %v2215
        %v2390 = vsub.f32 %v2345, %v2217
        %v2391 = vsub.f32 %v2347, %v2219
        %v2392 = vsub.f32 %v2349, %v2221
        %v2393 = vsub.f32 %v2351, %v2223
        %v2394 = vsub.f32 %v2353, %v2225
        %v2395 = vsub.f32 %v2355, %v2227
        %v2396 = vsub.f32 %v2357, %v2229
        %v2397 = vsub.f32 %v2359, %v2231
        %v2398 = vsub.f32 %v2361, %v2233
        %v2399 = vsub.f32 %v2363, %v2235
        %v2400 = vsub.f32 %v2365, %v2237
        %v2401 = vsub.f32 %v2367, %v2239
        %v2402 = vsub.f32 %v2369, %v2241
        %v2403 = vsub.f32 %v2371, %v2243
        %v2404 = vmul.f32 %v2388, 1.442695
        %v2405 = vpow.pop %v2404
        %v2406 = vmul.f32 %v2389, 1.442695
        %v2407 = vpow.pop %v2406
        %v2408 = vmul.f32 %v2390, 1.442695
        %v2409 = vpow.pop %v2408
        %v2410 = vmul.f32 %v2391, 1.442695
        %v2411 = vpow.pop %v2410
        %v2412 = vmul.f32 %v2392, 1.442695
        %v2413 = vpow.pop %v2412
        %v2414 = vmul.f32 %v2393, 1.442695
        %v2415 = vpow.pop %v2414
        %v2416 = vmul.f32 %v2394, 1.442695
        %v2417 = vpow.pop %v2416
        %v2418 = vmul.f32 %v2395, 1.442695
        %v2419 = vpow.pop %v2418
        %v2420 = vmul.f32 %v2396, 1.442695
        %v2421 = vpow.pop %v2420
        %v2422 = vmul.f32 %v2397, 1.442695
        %v2423 = vpow.pop %v2422
        %v2424 = vmul.f32 %v2398, 1.442695
        %v2425 = vpow.pop %v2424
        %v2426 = vmul.f32 %v2399, 1.442695
        %v2427 = vpow.pop %v2426
        %v2428 = vmul.f32 %v2400, 1.442695
        %v2429 = vpow.pop %v2428
        %v2430 = vmul.f32 %v2401, 1.442695
        %v2431 = vpow.pop %v2430
        %v2432 = vmul.f32 %v2402, 1.442695
        %v2433 = vpow.pop %v2432
        %v2434 = vmul.f32 %v2403, 1.442695
        %v2435 = vpow.pop %v2434
        %v2436 = vsel %vm2372, %v2405, 0.0
        %v2437 = vsel %vm2373, %v2407, 0.0
        %v2438 = vsel %vm2374, %v2409, 0.0
        %v2439 = vsel %vm2375, %v2411, 0.0
        %v2440 = vsel %vm2376, %v2413, 0.0
        %v2441 = vsel %vm2377, %v2415, 0.0
        %v2442 = vsel %vm2378, %v2417, 0.0
        %v2443 = vsel %vm2379, %v2419, 0.0
        %v2444 = vsel %vm2380, %v2421, 0.0
        %v2445 = vsel %vm2381, %v2423, 0.0
        %v2446 = vsel %vm2382, %v2425, 0.0
        %v2447 = vsel %vm2383, %v2427, 0.0
        %v2448 = vsel %vm2384, %v2429, 0.0
        %v2449 = vsel %vm2385, %v2431, 0.0
        %v2450 = vsel %vm2386, %v2433, 0.0
        %v2451 = vsel %vm2387, %v2435, 0.0
        %v2452 = vadd.f32 %v2308, %v2436
        %v2453 = vadd.f32 %v2309, %v2437
        %v2454 = vadd.f32 %v2310, %v2438
        %v2455 = vadd.f32 %v2311, %v2439
        %v2456 = vadd.f32 %v2312, %v2440
        %v2457 = vadd.f32 %v2313, %v2441
        %v2458 = vadd.f32 %v2314, %v2442
        %v2459 = vadd.f32 %v2315, %v2443
        %v2460 = vadd.f32 %v2316, %v2444
        %v2461 = vadd.f32 %v2317, %v2445
        %v2462 = vadd.f32 %v2318, %v2446
        %v2463 = vadd.f32 %v2319, %v2447
        %v2464 = vadd.f32 %v2320, %v2448
        %v2465 = vadd.f32 %v2321, %v2449
        %v2466 = vadd.f32 %v2322, %v2450
        %v2467 = vadd.f32 %v2323, %v2451
        %v2468 = vsel %vm2372, -1e+30, %v2324
        %v2469 = vsel %vm2373, -1e+30, %v2325
        %v2470 = vsel %vm2374, -1e+30, %v2326
        %v2471 = vsel %vm2375, -1e+30, %v2327
        %v2472 = vsel %vm2376, -1e+30, %v2328
        %v2473 = vsel %vm2377, -1e+30, %v2329
        %v2474 = vsel %vm2378, -1e+30, %v2330
        %v2475 = vsel %vm2379, -1e+30, %v2331
        %v2476 = vsel %vm2380, -1e+30, %v2332
        %v2477 = vsel %vm2381, -1e+30, %v2333
        %v2478 = vsel %vm2382, -1e+30, %v2334
        %v2479 = vsel %vm2383, -1e+30, %v2335
        %v2480 = vsel %vm2384, -1e+30, %v2336
        %v2481 = vsel %vm2385, -1e+30, %v2337
        %v2482 = vsel %vm2386, -1e+30, %v2338
        %v2483 = vsel %vm2387, -1e+30, %v2339
        %2484 = vmax.xlane.f32.xlu0 %v2468
        %v2485 = vpop.xlane.xlu0 %2484
        %2486 = vmax.xlane.f32.xlu0 %v2469
        %v2487 = vpop.xlane.xlu0 %2486
        %2488 = vmax.xlane.f32.xlu0 %v2470
        %v2489 = vpop.xlane.xlu0 %2488
        %2490 = vmax.xlane.f32.xlu0 %v2471
        %v2491 = vpop.xlane.xlu0 %2490
        %2492 = vmax.xlane.f32.xlu0 %v2472
        %v2493 = vpop.xlane.xlu0 %2492
        %2494 = vmax.xlane.f32.xlu0 %v2473
        %v2495 = vpop.xlane.xlu0 %2494
        %2496 = vmax.xlane.f32.xlu0 %v2474
        %v2497 = vpop.xlane.xlu0 %2496
        %2498 = vmax.xlane.f32.xlu0 %v2475
        %v2499 = vpop.xlane.xlu0 %2498
        %2500 = vmax.xlane.f32.xlu0 %v2476
        %v2501 = vpop.xlane.xlu0 %2500
        %2502 = vmax.xlane.f32.xlu0 %v2477
        %v2503 = vpop.xlane.xlu0 %2502
        %2504 = vmax.xlane.f32.xlu0 %v2478
        %v2505 = vpop.xlane.xlu0 %2504
        %2506 = vmax.xlane.f32.xlu0 %v2479
        %v2507 = vpop.xlane.xlu0 %2506
        %2508 = vmax.xlane.f32.xlu0 %v2480
        %v2509 = vpop.xlane.xlu0 %2508
        %2510 = vmax.xlane.f32.xlu0 %v2481
        %v2511 = vpop.xlane.xlu0 %2510
        %2512 = vmax.xlane.f32.xlu0 %v2482
        %v2513 = vpop.xlane.xlu0 %2512
        %2514 = vmax.xlane.f32.xlu0 %v2483
        %v2515 = vpop.xlane.xlu0 %2514
        %vm2516 = vcmp.eq.f32.partialorder %v2468, %v2485
        %vm2517 = vcmp.eq.f32.partialorder %v2469, %v2487
        %vm2518 = vcmp.eq.f32.partialorder %v2470, %v2489
        %vm2519 = vcmp.eq.f32.partialorder %v2471, %v2491
        %vm2520 = vcmp.eq.f32.partialorder %v2472, %v2493
        %vm2521 = vcmp.eq.f32.partialorder %v2473, %v2495
        %vm2522 = vcmp.eq.f32.partialorder %v2474, %v2497
        %vm2523 = vcmp.eq.f32.partialorder %v2475, %v2499
        %vm2524 = vcmp.eq.f32.partialorder %v2476, %v2501
        %vm2525 = vcmp.eq.f32.partialorder %v2477, %v2503
        %vm2526 = vcmp.eq.f32.partialorder %v2478, %v2505
        %vm2527 = vcmp.eq.f32.partialorder %v2479, %v2507
        %vm2528 = vcmp.eq.f32.partialorder %v2480, %v2509
        %vm2529 = vcmp.eq.f32.partialorder %v2481, %v2511
        %vm2530 = vcmp.eq.f32.partialorder %v2482, %v2513
        %vm2531 = vcmp.eq.f32.partialorder %v2483, %v2515
        %v2532 = vsub.f32 %v2485, %v2213
        %v2533 = vsub.f32 %v2487, %v2215
        %v2534 = vsub.f32 %v2489, %v2217
        %v2535 = vsub.f32 %v2491, %v2219
        %v2536 = vsub.f32 %v2493, %v2221
        %v2537 = vsub.f32 %v2495, %v2223
        %v2538 = vsub.f32 %v2497, %v2225
        %v2539 = vsub.f32 %v2499, %v2227
        %v2540 = vsub.f32 %v2501, %v2229
        %v2541 = vsub.f32 %v2503, %v2231
        %v2542 = vsub.f32 %v2505, %v2233
        %v2543 = vsub.f32 %v2507, %v2235
        %v2544 = vsub.f32 %v2509, %v2237
        %v2545 = vsub.f32 %v2511, %v2239
        %v2546 = vsub.f32 %v2513, %v2241
        %v2547 = vsub.f32 %v2515, %v2243
        %v2548 = vmul.f32 %v2532, 1.442695
        %v2549 = vpow.pop %v2548
        %v2550 = vmul.f32 %v2533, 1.442695
        %v2551 = vpow.pop %v2550
        %v2552 = vmul.f32 %v2534, 1.442695
        %v2553 = vpow.pop %v2552
        %v2554 = vmul.f32 %v2535, 1.442695
        %v2555 = vpow.pop %v2554
        %v2556 = vmul.f32 %v2536, 1.442695
        %v2557 = vpow.pop %v2556
        %v2558 = vmul.f32 %v2537, 1.442695
        %v2559 = vpow.pop %v2558
        %v2560 = vmul.f32 %v2538, 1.442695
        %v2561 = vpow.pop %v2560
        %v2562 = vmul.f32 %v2539, 1.442695
        %v2563 = vpow.pop %v2562
        %v2564 = vmul.f32 %v2540, 1.442695
        %v2565 = vpow.pop %v2564
        %v2566 = vmul.f32 %v2541, 1.442695
        %v2567 = vpow.pop %v2566
        %v2568 = vmul.f32 %v2542, 1.442695
        %v2569 = vpow.pop %v2568
        %v2570 = vmul.f32 %v2543, 1.442695
        %v2571 = vpow.pop %v2570
        %v2572 = vmul.f32 %v2544, 1.442695
        %v2573 = vpow.pop %v2572
        %v2574 = vmul.f32 %v2545, 1.442695
        %v2575 = vpow.pop %v2574
        %v2576 = vmul.f32 %v2546, 1.442695
        %v2577 = vpow.pop %v2576
        %v2578 = vmul.f32 %v2547, 1.442695
        %v2579 = vpow.pop %v2578
        %v2580 = vsel %vm2516, %v2549, 0.0
        %v2581 = vsel %vm2517, %v2551, 0.0
        %v2582 = vsel %vm2518, %v2553, 0.0
        %v2583 = vsel %vm2519, %v2555, 0.0
        %v2584 = vsel %vm2520, %v2557, 0.0
        %v2585 = vsel %vm2521, %v2559, 0.0
        %v2586 = vsel %vm2522, %v2561, 0.0
        %v2587 = vsel %vm2523, %v2563, 0.0
        %v2588 = vsel %vm2524, %v2565, 0.0
        %v2589 = vsel %vm2525, %v2567, 0.0
        %v2590 = vsel %vm2526, %v2569, 0.0
        %v2591 = vsel %vm2527, %v2571, 0.0
        %v2592 = vsel %vm2528, %v2573, 0.0
        %v2593 = vsel %vm2529, %v2575, 0.0
        %v2594 = vsel %vm2530, %v2577, 0.0
        %v2595 = vsel %vm2531, %v2579, 0.0
        %v2596 = vadd.f32 %v2452, %v2580
        %v2597 = vadd.f32 %v2453, %v2581
        %v2598 = vadd.f32 %v2454, %v2582
        %v2599 = vadd.f32 %v2455, %v2583
        %v2600 = vadd.f32 %v2456, %v2584
        %v2601 = vadd.f32 %v2457, %v2585
        %v2602 = vadd.f32 %v2458, %v2586
        %v2603 = vadd.f32 %v2459, %v2587
        %v2604 = vadd.f32 %v2460, %v2588
        %v2605 = vadd.f32 %v2461, %v2589
        %v2606 = vadd.f32 %v2462, %v2590
        %v2607 = vadd.f32 %v2463, %v2591
        %v2608 = vadd.f32 %v2464, %v2592
        %v2609 = vadd.f32 %v2465, %v2593
        %v2610 = vadd.f32 %v2466, %v2594
        %v2611 = vadd.f32 %v2467, %v2595
        %v2612 = vsel %vm2516, -1e+30, %v2468
        %v2613 = vsel %vm2517, -1e+30, %v2469
        %v2614 = vsel %vm2518, -1e+30, %v2470
        %v2615 = vsel %vm2519, -1e+30, %v2471
        %v2616 = vsel %vm2520, -1e+30, %v2472
        %v2617 = vsel %vm2521, -1e+30, %v2473
        %v2618 = vsel %vm2522, -1e+30, %v2474
        %v2619 = vsel %vm2523, -1e+30, %v2475
        %v2620 = vsel %vm2524, -1e+30, %v2476
        %v2621 = vsel %vm2525, -1e+30, %v2477
        %v2622 = vsel %vm2526, -1e+30, %v2478
        %v2623 = vsel %vm2527, -1e+30, %v2479
        %v2624 = vsel %vm2528, -1e+30, %v2480
        %v2625 = vsel %vm2529, -1e+30, %v2481
        %v2626 = vsel %vm2530, -1e+30, %v2482
        %v2627 = vsel %vm2531, -1e+30, %v2483
        %2628 = vmax.xlane.f32.xlu0 %v2612
        %v2629 = vpop.xlane.xlu0 %2628
        %2630 = vmax.xlane.f32.xlu0 %v2613
        %v2631 = vpop.xlane.xlu0 %2630
        %2632 = vmax.xlane.f32.xlu0 %v2614
        %v2633 = vpop.xlane.xlu0 %2632
        %2634 = vmax.xlane.f32.xlu0 %v2615
        %v2635 = vpop.xlane.xlu0 %2634
        %2636 = vmax.xlane.f32.xlu0 %v2616
        %v2637 = vpop.xlane.xlu0 %2636
        %2638 = vmax.xlane.f32.xlu0 %v2617
        %v2639 = vpop.xlane.xlu0 %2638
        %2640 = vmax.xlane.f32.xlu0 %v2618
        %v2641 = vpop.xlane.xlu0 %2640
        %2642 = vmax.xlane.f32.xlu0 %v2619
        %v2643 = vpop.xlane.xlu0 %2642
        %2644 = vmax.xlane.f32.xlu0 %v2620
        %v2645 = vpop.xlane.xlu0 %2644
        %2646 = vmax.xlane.f32.xlu0 %v2621
        %v2647 = vpop.xlane.xlu0 %2646
        %2648 = vmax.xlane.f32.xlu0 %v2622
        %v2649 = vpop.xlane.xlu0 %2648
        %2650 = vmax.xlane.f32.xlu0 %v2623
        %v2651 = vpop.xlane.xlu0 %2650
        %2652 = vmax.xlane.f32.xlu0 %v2624
        %v2653 = vpop.xlane.xlu0 %2652
        %2654 = vmax.xlane.f32.xlu0 %v2625
        %v2655 = vpop.xlane.xlu0 %2654
        %2656 = vmax.xlane.f32.xlu0 %v2626
        %v2657 = vpop.xlane.xlu0 %2656
        %2658 = vmax.xlane.f32.xlu0 %v2627
        %v2659 = vpop.xlane.xlu0 %2658
        %vm2660 = vcmp.eq.f32.partialorder %v2612, %v2629
        %vm2661 = vcmp.eq.f32.partialorder %v2613, %v2631
        %vm2662 = vcmp.eq.f32.partialorder %v2614, %v2633
        %vm2663 = vcmp.eq.f32.partialorder %v2615, %v2635
        %vm2664 = vcmp.eq.f32.partialorder %v2616, %v2637
        %vm2665 = vcmp.eq.f32.partialorder %v2617, %v2639
        %vm2666 = vcmp.eq.f32.partialorder %v2618, %v2641
        %vm2667 = vcmp.eq.f32.partialorder %v2619, %v2643
        %vm2668 = vcmp.eq.f32.partialorder %v2620, %v2645
        %vm2669 = vcmp.eq.f32.partialorder %v2621, %v2647
        %vm2670 = vcmp.eq.f32.partialorder %v2622, %v2649
        %vm2671 = vcmp.eq.f32.partialorder %v2623, %v2651
        %vm2672 = vcmp.eq.f32.partialorder %v2624, %v2653
        %vm2673 = vcmp.eq.f32.partialorder %v2625, %v2655
        %vm2674 = vcmp.eq.f32.partialorder %v2626, %v2657
        %vm2675 = vcmp.eq.f32.partialorder %v2627, %v2659
        %v2676 = vsub.f32 %v2629, %v2213
        %v2677 = vsub.f32 %v2631, %v2215
        %v2678 = vsub.f32 %v2633, %v2217
        %v2679 = vsub.f32 %v2635, %v2219
        %v2680 = vsub.f32 %v2637, %v2221
        %v2681 = vsub.f32 %v2639, %v2223
        %v2682 = vsub.f32 %v2641, %v2225
        %v2683 = vsub.f32 %v2643, %v2227
        %v2684 = vsub.f32 %v2645, %v2229
        %v2685 = vsub.f32 %v2647, %v2231
        %v2686 = vsub.f32 %v2649, %v2233
        %v2687 = vsub.f32 %v2651, %v2235
        %v2688 = vsub.f32 %v2653, %v2237
        %v2689 = vsub.f32 %v2655, %v2239
        %v2690 = vsub.f32 %v2657, %v2241
        %v2691 = vsub.f32 %v2659, %v2243
        %v2692 = vmul.f32 %v2676, 1.442695
        %v2693 = vpow.pop %v2692
        %v2694 = vmul.f32 %v2677, 1.442695
        %v2695 = vpow.pop %v2694
        %v2696 = vmul.f32 %v2678, 1.442695
        %v2697 = vpow.pop %v2696
        %v2698 = vmul.f32 %v2679, 1.442695
        %v2699 = vpow.pop %v2698
        %v2700 = vmul.f32 %v2680, 1.442695
        %v2701 = vpow.pop %v2700
        %v2702 = vmul.f32 %v2681, 1.442695
        %v2703 = vpow.pop %v2702
        %v2704 = vmul.f32 %v2682, 1.442695
        %v2705 = vpow.pop %v2704
        %v2706 = vmul.f32 %v2683, 1.442695
        %v2707 = vpow.pop %v2706
        %v2708 = vmul.f32 %v2684, 1.442695
        %v2709 = vpow.pop %v2708
        %v2710 = vmul.f32 %v2685, 1.442695
        %v2711 = vpow.pop %v2710
        %v2712 = vmul.f32 %v2686, 1.442695
        %v2713 = vpow.pop %v2712
        %v2714 = vmul.f32 %v2687, 1.442695
        %v2715 = vpow.pop %v2714
        %v2716 = vmul.f32 %v2688, 1.442695
        %v2717 = vpow.pop %v2716
        %v2718 = vmul.f32 %v2689, 1.442695
        %v2719 = vpow.pop %v2718
        %v2720 = vmul.f32 %v2690, 1.442695
        %v2721 = vpow.pop %v2720
        %v2722 = vmul.f32 %v2691, 1.442695
        %v2723 = vpow.pop %v2722
        %v2724 = vsel %vm2660, %v2693, 0.0
        %v2725 = vsel %vm2661, %v2695, 0.0
        %v2726 = vsel %vm2662, %v2697, 0.0
        %v2727 = vsel %vm2663, %v2699, 0.0
        %v2728 = vsel %vm2664, %v2701, 0.0
        %v2729 = vsel %vm2665, %v2703, 0.0
        %v2730 = vsel %vm2666, %v2705, 0.0
        %v2731 = vsel %vm2667, %v2707, 0.0
        %v2732 = vsel %vm2668, %v2709, 0.0
        %v2733 = vsel %vm2669, %v2711, 0.0
        %v2734 = vsel %vm2670, %v2713, 0.0
        %v2735 = vsel %vm2671, %v2715, 0.0
        %v2736 = vsel %vm2672, %v2717, 0.0
        %v2737 = vsel %vm2673, %v2719, 0.0
        %v2738 = vsel %vm2674, %v2721, 0.0
        %v2739 = vsel %vm2675, %v2723, 0.0
        %v2740 = vadd.f32 %v2596, %v2724
        %v2741 = vadd.f32 %v2597, %v2725
        %v2742 = vadd.f32 %v2598, %v2726
        %v2743 = vadd.f32 %v2599, %v2727
        %v2744 = vadd.f32 %v2600, %v2728
        %v2745 = vadd.f32 %v2601, %v2729
        %v2746 = vadd.f32 %v2602, %v2730
        %v2747 = vadd.f32 %v2603, %v2731
        %v2748 = vadd.f32 %v2604, %v2732
        %v2749 = vadd.f32 %v2605, %v2733
        %v2750 = vadd.f32 %v2606, %v2734
        %v2751 = vadd.f32 %v2607, %v2735
        %v2752 = vadd.f32 %v2608, %v2736
        %v2753 = vadd.f32 %v2609, %v2737
        %v2754 = vadd.f32 %v2610, %v2738
        %v2755 = vadd.f32 %v2611, %v2739
        %v2756 = vsel %vm2660, -1e+30, %v2612
        %v2757 = vsel %vm2661, -1e+30, %v2613
        %v2758 = vsel %vm2662, -1e+30, %v2614
        %v2759 = vsel %vm2663, -1e+30, %v2615
        %v2760 = vsel %vm2664, -1e+30, %v2616
        %v2761 = vsel %vm2665, -1e+30, %v2617
        %v2762 = vsel %vm2666, -1e+30, %v2618
        %v2763 = vsel %vm2667, -1e+30, %v2619
        %v2764 = vsel %vm2668, -1e+30, %v2620
        %v2765 = vsel %vm2669, -1e+30, %v2621
        %v2766 = vsel %vm2670, -1e+30, %v2622
        %v2767 = vsel %vm2671, -1e+30, %v2623
        %v2768 = vsel %vm2672, -1e+30, %v2624
        %v2769 = vsel %vm2673, -1e+30, %v2625
        %v2770 = vsel %vm2674, -1e+30, %v2626
        %v2771 = vsel %vm2675, -1e+30, %v2627
        %2772 = vmax.xlane.f32.xlu0 %v2756
        %v2773 = vpop.xlane.xlu0 %2772
        %2774 = vmax.xlane.f32.xlu0 %v2757
        %v2775 = vpop.xlane.xlu0 %2774
        %2776 = vmax.xlane.f32.xlu0 %v2758
        %v2777 = vpop.xlane.xlu0 %2776
        %2778 = vmax.xlane.f32.xlu0 %v2759
        %v2779 = vpop.xlane.xlu0 %2778
        %2780 = vmax.xlane.f32.xlu0 %v2760
        %v2781 = vpop.xlane.xlu0 %2780
        %2782 = vmax.xlane.f32.xlu0 %v2761
        %v2783 = vpop.xlane.xlu0 %2782
        %2784 = vmax.xlane.f32.xlu0 %v2762
        %v2785 = vpop.xlane.xlu0 %2784
        %2786 = vmax.xlane.f32.xlu0 %v2763
        %v2787 = vpop.xlane.xlu0 %2786
        %2788 = vmax.xlane.f32.xlu0 %v2764
        %v2789 = vpop.xlane.xlu0 %2788
        %2790 = vmax.xlane.f32.xlu0 %v2765
        %v2791 = vpop.xlane.xlu0 %2790
        %2792 = vmax.xlane.f32.xlu0 %v2766
        %v2793 = vpop.xlane.xlu0 %2792
        %2794 = vmax.xlane.f32.xlu0 %v2767
        %v2795 = vpop.xlane.xlu0 %2794
        %2796 = vmax.xlane.f32.xlu0 %v2768
        %v2797 = vpop.xlane.xlu0 %2796
        %2798 = vmax.xlane.f32.xlu0 %v2769
        %v2799 = vpop.xlane.xlu0 %2798
        %2800 = vmax.xlane.f32.xlu0 %v2770
        %v2801 = vpop.xlane.xlu0 %2800
        %2802 = vmax.xlane.f32.xlu0 %v2771
        %v2803 = vpop.xlane.xlu0 %2802
        %vm2804 = vcmp.eq.f32.partialorder %v2756, %v2773
        %vm2805 = vcmp.eq.f32.partialorder %v2757, %v2775
        %vm2806 = vcmp.eq.f32.partialorder %v2758, %v2777
        %vm2807 = vcmp.eq.f32.partialorder %v2759, %v2779
        %vm2808 = vcmp.eq.f32.partialorder %v2760, %v2781
        %vm2809 = vcmp.eq.f32.partialorder %v2761, %v2783
        %vm2810 = vcmp.eq.f32.partialorder %v2762, %v2785
        %vm2811 = vcmp.eq.f32.partialorder %v2763, %v2787
        %vm2812 = vcmp.eq.f32.partialorder %v2764, %v2789
        %vm2813 = vcmp.eq.f32.partialorder %v2765, %v2791
        %vm2814 = vcmp.eq.f32.partialorder %v2766, %v2793
        %vm2815 = vcmp.eq.f32.partialorder %v2767, %v2795
        %vm2816 = vcmp.eq.f32.partialorder %v2768, %v2797
        %vm2817 = vcmp.eq.f32.partialorder %v2769, %v2799
        %vm2818 = vcmp.eq.f32.partialorder %v2770, %v2801
        %vm2819 = vcmp.eq.f32.partialorder %v2771, %v2803
        %v2820 = vsub.f32 %v2773, %v2213
        %v2821 = vsub.f32 %v2775, %v2215
        %v2822 = vsub.f32 %v2777, %v2217
        %v2823 = vsub.f32 %v2779, %v2219
        %v2824 = vsub.f32 %v2781, %v2221
        %v2825 = vsub.f32 %v2783, %v2223
        %v2826 = vsub.f32 %v2785, %v2225
        %v2827 = vsub.f32 %v2787, %v2227
        %v2828 = vsub.f32 %v2789, %v2229
        %v2829 = vsub.f32 %v2791, %v2231
        %v2830 = vsub.f32 %v2793, %v2233
        %v2831 = vsub.f32 %v2795, %v2235
        %v2832 = vsub.f32 %v2797, %v2237
        %v2833 = vsub.f32 %v2799, %v2239
        %v2834 = vsub.f32 %v2801, %v2241
        %v2835 = vsub.f32 %v2803, %v2243
        %v2836 = vmul.f32 %v2820, 1.442695
        %v2837 = vpow.pop %v2836
        %v2838 = vmul.f32 %v2821, 1.442695
        %v2839 = vpow.pop %v2838
        %v2840 = vmul.f32 %v2822, 1.442695
        %v2841 = vpow.pop %v2840
        %v2842 = vmul.f32 %v2823, 1.442695
        %v2843 = vpow.pop %v2842
        %v2844 = vmul.f32 %v2824, 1.442695
        %v2845 = vpow.pop %v2844
        %v2846 = vmul.f32 %v2825, 1.442695
        %v2847 = vpow.pop %v2846
        %v2848 = vmul.f32 %v2826, 1.442695
        %v2849 = vpow.pop %v2848
        %v2850 = vmul.f32 %v2827, 1.442695
        %v2851 = vpow.pop %v2850
        %v2852 = vmul.f32 %v2828, 1.442695
        %v2853 = vpow.pop %v2852
        %v2854 = vmul.f32 %v2829, 1.442695
        %v2855 = vpow.pop %v2854
        %v2856 = vmul.f32 %v2830, 1.442695
        %v2857 = vpow.pop %v2856
        %v2858 = vmul.f32 %v2831, 1.442695
        %v2859 = vpow.pop %v2858
        %v2860 = vmul.f32 %v2832, 1.442695
        %v2861 = vpow.pop %v2860
        %v2862 = vmul.f32 %v2833, 1.442695
        %v2863 = vpow.pop %v2862
        %v2864 = vmul.f32 %v2834, 1.442695
        %v2865 = vpow.pop %v2864
        %v2866 = vmul.f32 %v2835, 1.442695
        %v2867 = vpow.pop %v2866
        %v2868 = vsel %vm2804, %v2837, 0.0
        %v2869 = vsel %vm2805, %v2839, 0.0
        %v2870 = vsel %vm2806, %v2841, 0.0
        %v2871 = vsel %vm2807, %v2843, 0.0
        %v2872 = vsel %vm2808, %v2845, 0.0
        %v2873 = vsel %vm2809, %v2847, 0.0
        %v2874 = vsel %vm2810, %v2849, 0.0
        %v2875 = vsel %vm2811, %v2851, 0.0
        %v2876 = vsel %vm2812, %v2853, 0.0
        %v2877 = vsel %vm2813, %v2855, 0.0
        %v2878 = vsel %vm2814, %v2857, 0.0
        %v2879 = vsel %vm2815, %v2859, 0.0
        %v2880 = vsel %vm2816, %v2861, 0.0
        %v2881 = vsel %vm2817, %v2863, 0.0
        %v2882 = vsel %vm2818, %v2865, 0.0
        %v2883 = vsel %vm2819, %v2867, 0.0
        %v2884 = vadd.f32 %v2740, %v2868
        %v2885 = vadd.f32 %v2741, %v2869
        %v2886 = vadd.f32 %v2742, %v2870
        %v2887 = vadd.f32 %v2743, %v2871
        %v2888 = vadd.f32 %v2744, %v2872
        %v2889 = vadd.f32 %v2745, %v2873
        %v2890 = vadd.f32 %v2746, %v2874
        %v2891 = vadd.f32 %v2747, %v2875
        %v2892 = vadd.f32 %v2748, %v2876
        %v2893 = vadd.f32 %v2749, %v2877
        %v2894 = vadd.f32 %v2750, %v2878
        %v2895 = vadd.f32 %v2751, %v2879
        %v2896 = vadd.f32 %v2752, %v2880
        %v2897 = vadd.f32 %v2753, %v2881
        %v2898 = vadd.f32 %v2754, %v2882
        %v2899 = vadd.f32 %v2755, %v2883
        %v2900 = vadd.f32 %v2277, %v2405
        %v2901 = vadd.f32 %v2279, %v2407
        %v2902 = vadd.f32 %v2281, %v2409
        %v2903 = vadd.f32 %v2283, %v2411
        %v2904 = vadd.f32 %v2285, %v2413
        %v2905 = vadd.f32 %v2287, %v2415
        %v2906 = vadd.f32 %v2289, %v2417
        %v2907 = vadd.f32 %v2291, %v2419
        %v2908 = vadd.f32 %v2293, %v2421
        %v2909 = vadd.f32 %v2295, %v2423
        %v2910 = vadd.f32 %v2297, %v2425
        %v2911 = vadd.f32 %v2299, %v2427
        %v2912 = vadd.f32 %v2301, %v2429
        %v2913 = vadd.f32 %v2303, %v2431
        %v2914 = vadd.f32 %v2305, %v2433
        %v2915 = vadd.f32 %v2307, %v2435
        %v2916 = vadd.f32 %v2900, %v2549
        %v2917 = vadd.f32 %v2901, %v2551
        %v2918 = vadd.f32 %v2902, %v2553
        %v2919 = vadd.f32 %v2903, %v2555
        %v2920 = vadd.f32 %v2904, %v2557
        %v2921 = vadd.f32 %v2905, %v2559
        %v2922 = vadd.f32 %v2906, %v2561
        %v2923 = vadd.f32 %v2907, %v2563
        %v2924 = vadd.f32 %v2908, %v2565
        %v2925 = vadd.f32 %v2909, %v2567
        %v2926 = vadd.f32 %v2910, %v2569
        %v2927 = vadd.f32 %v2911, %v2571
        %v2928 = vadd.f32 %v2912, %v2573
        %v2929 = vadd.f32 %v2913, %v2575
        %v2930 = vadd.f32 %v2914, %v2577
        %v2931 = vadd.f32 %v2915, %v2579
        %v2932 = vadd.f32 %v2916, %v2693
        %v2933 = vadd.f32 %v2917, %v2695
        %v2934 = vadd.f32 %v2918, %v2697
        %v2935 = vadd.f32 %v2919, %v2699
        %v2936 = vadd.f32 %v2920, %v2701
        %v2937 = vadd.f32 %v2921, %v2703
        %v2938 = vadd.f32 %v2922, %v2705
        %v2939 = vadd.f32 %v2923, %v2707
        %v2940 = vadd.f32 %v2924, %v2709
        %v2941 = vadd.f32 %v2925, %v2711
        %v2942 = vadd.f32 %v2926, %v2713
        %v2943 = vadd.f32 %v2927, %v2715
        %v2944 = vadd.f32 %v2928, %v2717
        %v2945 = vadd.f32 %v2929, %v2719
        %v2946 = vadd.f32 %v2930, %v2721
        %v2947 = vadd.f32 %v2931, %v2723
        %v2948 = vadd.f32 %v2932, %v2837
        %v2949 = vadd.f32 %v2933, %v2839
        %v2950 = vadd.f32 %v2934, %v2841
        %v2951 = vadd.f32 %v2935, %v2843
        %v2952 = vadd.f32 %v2936, %v2845
        %v2953 = vadd.f32 %v2937, %v2847
        %v2954 = vadd.f32 %v2938, %v2849
        %v2955 = vadd.f32 %v2939, %v2851
        %v2956 = vadd.f32 %v2940, %v2853
        %v2957 = vadd.f32 %v2941, %v2855
        %v2958 = vadd.f32 %v2942, %v2857
        %v2959 = vadd.f32 %v2943, %v2859
        %v2960 = vadd.f32 %v2944, %v2861
        %v2961 = vadd.f32 %v2945, %v2863
        %v2962 = vadd.f32 %v2946, %v2865
        %v2963 = vadd.f32 %v2947, %v2867
        %v2964 = vrcp.pop %v2948
        %v2965 = vrcp.pop %v2949
        %v2966 = vrcp.pop %v2950
        %v2967 = vrcp.pop %v2951
        %v2968 = vrcp.pop %v2952
        %v2969 = vrcp.pop %v2953
        %v2970 = vrcp.pop %v2954
        %v2971 = vrcp.pop %v2955
        %v2972 = vrcp.pop %v2956
        %v2973 = vrcp.pop %v2957
        %v2974 = vrcp.pop %v2958
        %v2975 = vrcp.pop %v2959
        %v2976 = vrcp.pop %v2960
        %v2977 = vrcp.pop %v2961
        %v2978 = vrcp.pop %v2962
        %v2979 = vrcp.pop %v2963
        %v2980 = vld [vmem:[%s6] sm:$0xff]
        %v2981 = vld [vmem:[%s6 + $0x8] sm:$0xff]
        %v2982 = vld [vmem:[%s6 + $0x10] sm:$0xff]
        %v2983 = vld [vmem:[%s6 + $0x18] sm:$0xff]
        %v2984 = vld [vmem:[%s6 + $0x20] sm:$0xff]
        %v2985 = vld [vmem:[%s6 + $0x28] sm:$0xff]
        %v2986 = vld [vmem:[%s6 + $0x30] sm:$0xff]
        %v2987 = vld [vmem:[%s6 + $0x38] sm:$0xff]
        %v2988 = vld [vmem:[%s6 + $0x40] sm:$0xff]
        %v2989 = vld [vmem:[%s6 + $0x48] sm:$0xff]
        %v2990 = vld [vmem:[%s6 + $0x50] sm:$0xff]
        %v2991 = vld [vmem:[%s6 + $0x58] sm:$0xff]
        %v2992 = vld [vmem:[%s6 + $0x60] sm:$0xff]
        %v2993 = vld [vmem:[%s6 + $0x68] sm:$0xff]
        %v2994 = vld [vmem:[%s6 + $0x70] sm:$0xff]
        %v2995 = vld [vmem:[%s6 + $0x78] sm:$0xff]
        %v2996 = vmul.f32 %v2964, %v2980
        %v2997 = vmul.f32 %v2965, %v2981
        %v2998 = vmul.f32 %v2966, %v2982
        %v2999 = vmul.f32 %v2967, %v2983
        %v3000 = vmul.f32 %v2968, %v2984
        %v3001 = vmul.f32 %v2969, %v2985
        %v3002 = vmul.f32 %v2970, %v2986
        %v3003 = vmul.f32 %v2971, %v2987
        %v3004 = vmul.f32 %v2972, %v2988
        %v3005 = vmul.f32 %v2973, %v2989
        %v3006 = vmul.f32 %v2974, %v2990
        %v3007 = vmul.f32 %v2975, %v2991
        %v3008 = vmul.f32 %v2976, %v2992
        %v3009 = vmul.f32 %v2977, %v2993
        %v3010 = vmul.f32 %v2978, %v2994
        %v3011 = vmul.f32 %v2979, %v2995
        %v3012 = vpack.c.bf16 %v2885, %v2884
        %v3013 = vpack.c.bf16 %v2887, %v2886
        %v3014 = vpack.c.bf16 %v2889, %v2888
        %v3015 = vpack.c.bf16 %v2891, %v2890
        %v3016 = vpack.c.bf16 %v2893, %v2892
        %v3017 = vpack.c.bf16 %v2895, %v2894
        %v3018 = vpack.c.bf16 %v2897, %v2896
        %v3019 = vpack.c.bf16 %v2899, %v2898
        %3020 = vrot.lane.b32.xlu0 %v2028, 96
        %v3021 = vpop.permute.xlu0 %3020
        %3022 = vrot.lane.b32.xlu0 %v2029, 96
        %v3023 = vpop.permute.xlu0 %3022
        %3024 = vrot.lane.b32.xlu0 %v2030, 96
        %v3025 = vpop.permute.xlu0 %3024
        %3026 = vrot.lane.b32.xlu0 %v2031, 96
        %v3027 = vpop.permute.xlu0 %3026
        %3028 = vrot.lane.b32.xlu0 %v2032, 96
        %v3029 = vpop.permute.xlu0 %3028
        %3030 = vrot.lane.b32.xlu0 %v2033, 96
        %v3031 = vpop.permute.xlu0 %3030
        %3032 = vrot.lane.b32.xlu0 %v2034, 96
        %v3033 = vpop.permute.xlu0 %3032
        %3034 = vrot.lane.b32.xlu0 %v2035, 96
        %v3035 = vpop.permute.xlu0 %3034
        %3044 = vmatprep.subr.bf16.mxu0 0
        %3045 = vmatpush1.bf16.msra.mxu0 %v3021
        %3046 = vmatprep.subr.bf16.mxu0 0
        %3047 = vmatpush1.bf16.msra.mxu0 %v3023
        %3048 = vmatprep.subr.bf16.mxu0 0
        %3049 = vmatpush1.bf16.msra.mxu0 %v3025
        %3050 = vmatprep.subr.bf16.mxu0 0
        %3051 = vmatpush1.bf16.msra.mxu0 %v3027
        %3052 = vmatprep.subr.bf16.mxu0 0
        %3053 = vmatpush1.bf16.msra.mxu0 %v3029
        %3054 = vmatprep.subr.bf16.mxu0 0
        %3055 = vmatpush1.bf16.msra.mxu0 %v3031
        %3056 = vmatprep.subr.bf16.mxu0 0
        %3057 = vmatpush1.bf16.msra.mxu0 %v3033
        %3058 = vmatprep.subr.bf16.mxu0 0
        %3059 = vmatpush1.bf16.msra.mxu0 %v3035
        %3060 = vmatprep.subr.bf16.mxu0 0
        %3061 = vmatpush1.bf16.msra.mxu0 0
        %3062 = vmatprep.subr.bf16.mxu0 0
        %3063 = vmatpush1.bf16.msra.mxu0 0
        %3064 = vmatprep.subr.bf16.mxu0 0
        %3065 = vmatpush1.bf16.msra.mxu0 0
        %3066 = vmatprep.subr.bf16.mxu0 0
        %3067 = vmatpush1.bf16.msra.mxu0 0
        %3068 = vmatprep.subr.bf16.mxu0 0
        %3069 = vmatpush1.bf16.msra.mxu0 0
        %3070 = vmatprep.subr.bf16.mxu0 0
        %3071 = vmatpush1.bf16.msra.mxu0 0
        %3072 = vmatprep.subr.bf16.mxu0 0
        %3073 = vmatpush1.bf16.msra.mxu0 0
        %3074 = vmatprep.subr.bf16.mxu0 0
        %3075 = vmatpush1.bf16.msra.mxu0 0
        %3076 = vmatprep.mubr.bf16.mxu0 0
        %3077 = vmatmul.mubr.bf16.gmra.mrb[0].mxu0 %v3012
        %v3078 = vpop.f32.mrb[0].mxu0
        %v3079 = vadd.f32 0.0, %v3078
        %v3080 = vpop.f32.mrb[0].mxu0
        %v3081 = vpop.f32.mrb[0].mxu0
        %v3082 = vadd.f32 0.0, %v3081
        %v3083 = vpop.f32.mrb[0].mxu0
        %3084 = vmatprep.mubr.bf16.mxu0 0
        %3085 = vmatmul.mubr.bf16.gmra.mrb[0].mxu0 %v3013
        %v3086 = vpop.f32.mrb[0].mxu0
        %v3087 = vadd.f32 0.0, %v3086
        %v3088 = vpop.f32.mrb[0].mxu0
        %v3089 = vpop.f32.mrb[0].mxu0
        %v3090 = vadd.f32 0.0, %v3089
        %v3091 = vpop.f32.mrb[0].mxu0
        %3092 = vmatprep.mubr.bf16.mxu0 0
        %3093 = vmatmul.mubr.bf16.gmra.mrb[0].mxu0 %v3014
        %v3094 = vpop.f32.mrb[0].mxu0
        %v3095 = vadd.f32 0.0, %v3094
        %v3096 = vpop.f32.mrb[0].mxu0
        %v3097 = vpop.f32.mrb[0].mxu0
        %v3098 = vadd.f32 0.0, %v3097
        %v3099 = vpop.f32.mrb[0].mxu0
        %3100 = vmatprep.mubr.bf16.mxu0 0
        %3101 = vmatmul.mubr.bf16.gmra.mrb[0].mxu0 %v3015
        %v3102 = vpop.f32.mrb[0].mxu0
        %v3103 = vadd.f32 0.0, %v3102
        %v3104 = vpop.f32.mrb[0].mxu0
        %v3105 = vpop.f32.mrb[0].mxu0
        %v3106 = vadd.f32 0.0, %v3105
        %v3107 = vpop.f32.mrb[0].mxu0
        %3108 = vmatprep.mubr.bf16.mxu0 0
        %3109 = vmatmul.mubr.bf16.gmra.mrb[0].mxu0 %v3016
        %v3110 = vpop.f32.mrb[0].mxu0
        %v3111 = vadd.f32 0.0, %v3110
        %v3112 = vpop.f32.mrb[0].mxu0
        %v3113 = vpop.f32.mrb[0].mxu0
        %v3114 = vadd.f32 0.0, %v3113
        %v3115 = vpop.f32.mrb[0].mxu0
        %3116 = vmatprep.mubr.bf16.mxu0 0
        %3117 = vmatmul.mubr.bf16.gmra.mrb[0].mxu0 %v3017
        %v3118 = vpop.f32.mrb[0].mxu0
        %v3119 = vadd.f32 0.0, %v3118
        %v3120 = vpop.f32.mrb[0].mxu0
        %v3121 = vpop.f32.mrb[0].mxu0
        %v3122 = vadd.f32 0.0, %v3121
        %v3123 = vpop.f32.mrb[0].mxu0
        %3124 = vmatprep.mubr.bf16.mxu0 0
        %3125 = vmatmul.mubr.bf16.gmra.mrb[0].mxu0 %v3018
        %v3126 = vpop.f32.mrb[0].mxu0
        %v3127 = vadd.f32 0.0, %v3126
        %v3128 = vpop.f32.mrb[0].mxu0
        %v3129 = vpop.f32.mrb[0].mxu0
        %v3130 = vadd.f32 0.0, %v3129
        %v3131 = vpop.f32.mrb[0].mxu0
        %3132 = vmatprep.mubr.bf16.mxu0 0
        %3133 = vmatmul.mubr.bf16.gmra.mrb[0].mxu0 %v3019
        %v3134 = vpop.f32.mrb[0].mxu0
        %v3135 = vadd.f32 0.0, %v3134
        %v3136 = vpop.f32.mrb[0].mxu0
        %v3137 = vpop.f32.mrb[0].mxu0
        %v3138 = vadd.f32 0.0, %v3137
        %v3139 = vpop.f32.mrb[0].mxu0
        %3140 = vdwg.mxu0
        %3142 = vset.pattern.permute.xlu0 0
        %3143 = vperm.xlu0 %3142, %v2996
        %v3144 = vpop.permute.xlu0 %3143
        %3147 = vset.pattern.permute.xlu0 0
        %3148 = vperm.xlu0 %3147, %v2997
        %v3149 = vpop.permute.xlu0 %3148
        %3152 = vset.pattern.permute.xlu0 0
        %3153 = vperm.xlu0 %3152, %v2998
        %v3154 = vpop.permute.xlu0 %3153
        %3157 = vset.pattern.permute.xlu0 0
        %3158 = vperm.xlu0 %3157, %v2999
        %v3159 = vpop.permute.xlu0 %3158
        %3162 = vset.pattern.permute.xlu0 0
        %3163 = vperm.xlu0 %3162, %v3000
        %v3164 = vpop.permute.xlu0 %3163
        %3167 = vset.pattern.permute.xlu0 0
        %3168 = vperm.xlu0 %3167, %v3001
        %v3169 = vpop.permute.xlu0 %3168
        %3172 = vset.pattern.permute.xlu0 0
        %3173 = vperm.xlu0 %3172, %v3002
        %v3174 = vpop.permute.xlu0 %3173
        %3177 = vset.pattern.permute.xlu0 0
        %3178 = vperm.xlu0 %3177, %v3003
        %v3179 = vpop.permute.xlu0 %3178
        %3182 = vset.pattern.permute.xlu0 0
        %3183 = vperm.xlu0 %3182, %v3004
        %v3184 = vpop.permute.xlu0 %3183
        %3187 = vset.pattern.permute.xlu0 0
        %3188 = vperm.xlu0 %3187, %v3005
        %v3189 = vpop.permute.xlu0 %3188
        %3192 = vset.pattern.permute.xlu0 0
        %3193 = vperm.xlu0 %3192, %v3006
        %v3194 = vpop.permute.xlu0 %3193
        %3197 = vset.pattern.permute.xlu0 0
        %3198 = vperm.xlu0 %3197, %v3007
        %v3199 = vpop.permute.xlu0 %3198
        %3202 = vset.pattern.permute.xlu0 0
        %3203 = vperm.xlu0 %3202, %v3008
        %v3204 = vpop.permute.xlu0 %3203
        %3207 = vset.pattern.permute.xlu0 0
        %3208 = vperm.xlu0 %3207, %v3009
        %v3209 = vpop.permute.xlu0 %3208
        %3212 = vset.pattern.permute.xlu0 0
        %3213 = vperm.xlu0 %3212, %v3010
        %v3214 = vpop.permute.xlu0 %3213
        %3217 = vset.pattern.permute.xlu0 0
        %3218 = vperm.xlu0 %3217, %v3011
        %v3219 = vpop.permute.xlu0 %3218
        %v3221 = vmul.f32 %v3079, %v3144
        %v3222 = vmul.f32 %v3082, %v3149
        %v3223 = vmul.f32 %v3087, %v3154
        %v3224 = vmul.f32 %v3090, %v3159
        %v3225 = vmul.f32 %v3095, %v3164
        %v3226 = vmul.f32 %v3098, %v3169
        %v3227 = vmul.f32 %v3103, %v3174
        %v3228 = vmul.f32 %v3106, %v3179
        %v3229 = vmul.f32 %v3111, %v3184
        %v3230 = vmul.f32 %v3114, %v3189
        %v3231 = vmul.f32 %v3119, %v3194
        %v3232 = vmul.f32 %v3122, %v3199
        %v3233 = vmul.f32 %v3127, %v3204
        %v3234 = vmul.f32 %v3130, %v3209
        %v3235 = vmul.f32 %v3135, %v3214
        %v3236 = vmul.f32 %v3138, %v3219
        %v3237 = vsel %vm1906, %v3221, 0.0
        %v3238 = vsel %vm1906, %v3222, 0.0
        %v3239 = vadd.f32 %v3237, %v3238
        %v3240 = vsel %vm1906, %v3223, 0.0
        %v3241 = vadd.f32 %v3239, %v3240
        %v3242 = vsel %vm1906, %v3224, 0.0
        %v3243 = vadd.f32 %v3241, %v3242
        %v3244 = vsel %vm1906, %v3225, 0.0
        %v3245 = vadd.f32 %v3243, %v3244
        %v3246 = vsel %vm1906, %v3226, 0.0
        %v3247 = vadd.f32 %v3245, %v3246
        %v3248 = vsel %vm1906, %v3227, 0.0
        %v3249 = vadd.f32 %v3247, %v3248
        %v3250 = vsel %vm1906, %v3228, 0.0
        %v3251 = vadd.f32 %v3249, %v3250
        %v3252 = vsel %vm1906, %v3229, 0.0
        %v3253 = vadd.f32 %v3251, %v3252
        %v3254 = vsel %vm1906, %v3230, 0.0
        %v3255 = vadd.f32 %v3253, %v3254
        %v3256 = vsel %vm1906, %v3231, 0.0
        %v3257 = vadd.f32 %v3255, %v3256
        %v3258 = vsel %vm1906, %v3232, 0.0
        %v3259 = vadd.f32 %v3257, %v3258
        %v3260 = vsel %vm1906, %v3233, 0.0
        %v3261 = vadd.f32 %v3259, %v3260
        %v3262 = vsel %vm1906, %v3234, 0.0
        %v3263 = vadd.f32 %v3261, %v3262
        %v3264 = vsel %vm1906, %v3235, 0.0
        %v3265 = vadd.f32 %v3263, %v3264
        %v3266 = vsel %vm1906, %v3236, 0.0
        %v3267 = vadd.f32 %v3265, %v3266
        %v3268 = vrot.slane %v3267, 4
        %v3269 = vadd.f32 %v3267, %v3268
        %v3270 = vrot.slane %v3269, 2
        %v3271 = vadd.f32 %v3269, %v3270
        %v3272 = vrot.slane %v3271, 1
        %v3273 = vadd.f32 %v3271, %v3272
        %v3274 = vld [vmem:[%s7] sm:$0xff]
        %v3275 = vld [vmem:[%s7 + $0x8] sm:$0xff]
        %v3277 = vsel %vm1906, %v3273, 0
        %3279 = vmatprep.subr.mxu0 0.0
        %3280 = vmatpush1.msra.mxu0 %v3274
        %3281 = vmatprep.subr.mxu0 0.0
        %3282 = vmatpush1.msra.mxu0 %v3275
        %3283 = vmatprep.subr.mxu0 0.0
        %3284 = vmatpush1.msra.mxu0 0.0
        %3285 = vmatprep.subr.mxu0 0.0
        %3286 = vmatpush1.msra.mxu0 0.0
        %3287 = vmatprep.subr.mxu0 0.0
        %3288 = vmatpush1.msra.mxu0 0.0
        %3289 = vmatprep.subr.mxu0 0.0
        %3290 = vmatpush1.msra.mxu0 0.0
        %3291 = vmatprep.subr.mxu0 0.0
        %3292 = vmatpush1.msra.mxu0 0.0
        %3293 = vmatprep.subr.mxu0 0.0
        %3294 = vmatpush1.msra.mxu0 0.0
        %3295 = vmatprep.subr.mxu0 0.0
        %3296 = vmatpush1.msra.mxu0 0.0
        %3297 = vmatprep.subr.mxu0 0.0
        %3298 = vmatpush1.msra.mxu0 0.0
        %3299 = vmatprep.subr.mxu0 0.0
        %3300 = vmatpush1.msra.mxu0 0.0
        %3301 = vmatprep.subr.mxu0 0.0
        %3302 = vmatpush1.msra.mxu0 0.0
        %3303 = vmatprep.subr.mxu0 0.0
        %3304 = vmatpush1.msra.mxu0 0.0
        %3305 = vmatprep.subr.mxu0 0.0
        %3306 = vmatpush1.msra.mxu0 0.0
        %3307 = vmatprep.subr.mxu0 0.0
        %3308 = vmatpush1.msra.mxu0 0.0
        %3309 = vmatprep.subr.mxu0 0.0
        %3310 = vmatpush1.msra.mxu0 0.0
        %3311 = vmatprep.subr.mxu0 0.0
        %3312 = vmatpush1.msra.mxu0 0.0
        %3313 = vmatprep.subr.mxu0 0.0
        %3314 = vmatpush1.msra.mxu0 0.0
        %3315 = vmatprep.subr.mxu0 0.0
        %3316 = vmatpush1.msra.mxu0 0.0
        %3317 = vmatprep.subr.mxu0 0.0
        %3318 = vmatpush1.msra.mxu0 0.0
        %3319 = vmatprep.subr.mxu0 0.0
        %3320 = vmatpush1.msra.mxu0 0.0
        %3321 = vmatprep.subr.mxu0 0.0
        %3322 = vmatpush1.msra.mxu0 0.0
        %3323 = vmatprep.subr.mxu0 0.0
        %3324 = vmatpush1.msra.mxu0 0.0
        %3325 = vmatprep.subr.mxu0 0.0
        %3326 = vmatpush1.msra.mxu0 0.0
        %3327 = vmatprep.subr.mxu0 0.0
        %3328 = vmatpush1.msra.mxu0 0.0
        %3329 = vmatprep.subr.mxu0 0.0
        %3330 = vmatpush1.msra.mxu0 0.0
        %3331 = vmatprep.subr.mxu0 0.0
        %3332 = vmatpush1.msra.mxu0 0.0
        %3333 = vmatprep.subr.mxu0 0.0
        %3334 = vmatpush1.msra.mxu0 0.0
        %3335 = vmatprep.subr.mxu0 0.0
        %3336 = vmatpush1.msra.mxu0 0.0
        %3337 = vmatprep.subr.mxu0 0.0
        %3338 = vmatpush1.msra.mxu0 0.0
        %3339 = vmatprep.subr.mxu0 0.0
        %3340 = vmatpush1.msra.mxu0 0.0
        %3341 = vmatprep.subr.mxu0 0.0
        %3342 = vmatpush1.msra.mxu0 0.0
        %3343 = vmatprep.mubr.f32.mxu0 0.0
        %3344 = vmatmul.mubr.f32.gmra.mrb[0].mxu0 %v3277
        %v3345 = vpop.f32.mrb[0].mxu0
        %v3346 = vadd.f32 0.0, %v3345
        %v3347 = vpop.f32.mrb[0].mxu0
        %3348 = vdwg.mxu0
        %v3349 = vmul.f32 %v3346, 0.01
        %v3350 = vld [vmem:[%s8] sm:$0x1]
        %v3351 = vadd.f32 %v3349, %v3350
        %vm3352 = vcmask 8192
        %3353 = vst.msk [vmem:[%s352] sm:$0x1] %vm3352, %v3351
        %vm3354 = vcmask 7168
        %v3355 = vsel %vm3354, %v2277, %v2405
        %v3356 = vsel %vm3354, %v2279, %v2407
        %v3357 = vsel %vm3354, %v2281, %v2409
        %v3358 = vsel %vm3354, %v2283, %v2411
        %v3359 = vsel %vm3354, %v2285, %v2413
        %v3360 = vsel %vm3354, %v2287, %v2415
        %v3361 = vsel %vm3354, %v2289, %v2417
        %v3362 = vsel %vm3354, %v2291, %v2419
        %v3363 = vsel %vm3354, %v2293, %v2421
        %v3364 = vsel %vm3354, %v2295, %v2423
        %v3365 = vsel %vm3354, %v2297, %v2425
        %v3366 = vsel %vm3354, %v2299, %v2427
        %v3367 = vsel %vm3354, %v2301, %v2429
        %v3368 = vsel %vm3354, %v2303, %v2431
        %v3369 = vsel %vm3354, %v2305, %v2433
        %v3370 = vsel %vm3354, %v2307, %v2435
        %vm3371 = vcmask 15360
        %v3372 = vsel %vm3371, %v3355, %v2549
        %v3373 = vsel %vm3371, %v3356, %v2551
        %v3374 = vsel %vm3371, %v3357, %v2553
        %v3375 = vsel %vm3371, %v3358, %v2555
        %v3376 = vsel %vm3371, %v3359, %v2557
        %v3377 = vsel %vm3371, %v3360, %v2559
        %v3378 = vsel %vm3371, %v3361, %v2561
        %v3379 = vsel %vm3371, %v3362, %v2563
        %v3380 = vsel %vm3371, %v3363, %v2565
        %v3381 = vsel %vm3371, %v3364, %v2567
        %v3382 = vsel %vm3371, %v3365, %v2569
        %v3383 = vsel %vm3371, %v3366, %v2571
        %v3384 = vsel %vm3371, %v3367, %v2573
        %v3385 = vsel %vm3371, %v3368, %v2575
        %v3386 = vsel %vm3371, %v3369, %v2577
        %v3387 = vsel %vm3371, %v3370, %v2579
        %vm3388 = vcmask 23552
        %v3389 = vsel %vm3388, %v3372, %v2693
        %v3390 = vsel %vm3388, %v3373, %v2695
        %v3391 = vsel %vm3388, %v3374, %v2697
        %v3392 = vsel %vm3388, %v3375, %v2699
        %v3393 = vsel %vm3388, %v3376, %v2701
        %v3394 = vsel %vm3388, %v3377, %v2703
        %v3395 = vsel %vm3388, %v3378, %v2705
        %v3396 = vsel %vm3388, %v3379, %v2707
        %v3397 = vsel %vm3388, %v3380, %v2709
        %v3398 = vsel %vm3388, %v3381, %v2711
        %v3399 = vsel %vm3388, %v3382, %v2713
        %v3400 = vsel %vm3388, %v3383, %v2715
        %v3401 = vsel %vm3388, %v3384, %v2717
        %v3402 = vsel %vm3388, %v3385, %v2719
        %v3403 = vsel %vm3388, %v3386, %v2721
        %v3404 = vsel %vm3388, %v3387, %v2723
        %vm3405 = vcmask 31744
        %v3406 = vsel %vm3405, %v3389, %v2837
        %v3407 = vsel %vm3405, %v3390, %v2839
        %v3408 = vsel %vm3405, %v3391, %v2841
        %v3409 = vsel %vm3405, %v3392, %v2843
        %v3410 = vsel %vm3405, %v3393, %v2845
        %v3411 = vsel %vm3405, %v3394, %v2847
        %v3412 = vsel %vm3405, %v3395, %v2849
        %v3413 = vsel %vm3405, %v3396, %v2851
        %v3414 = vsel %vm3405, %v3397, %v2853
        %v3415 = vsel %vm3405, %v3398, %v2855
        %v3416 = vsel %vm3405, %v3399, %v2857
        %v3417 = vsel %vm3405, %v3400, %v2859
        %v3418 = vsel %vm3405, %v3401, %v2861
        %v3419 = vsel %vm3405, %v3402, %v2863
        %v3420 = vsel %vm3405, %v3403, %v2865
        %v3421 = vsel %vm3405, %v3404, %v2867
        %v3422 = vmul.f32 %v3406, %v3144
        %v3423 = vmul.f32 %v3407, %v3149
        %v3424 = vmul.f32 %v3408, %v3154
        %v3425 = vmul.f32 %v3409, %v3159
        %v3426 = vmul.f32 %v3410, %v3164
        %v3427 = vmul.f32 %v3411, %v3169
        %v3428 = vmul.f32 %v3412, %v3174
        %v3429 = vmul.f32 %v3413, %v3179
        %v3430 = vmul.f32 %v3414, %v3184
        %v3431 = vmul.f32 %v3415, %v3189
        %v3432 = vmul.f32 %v3416, %v3194
        %v3433 = vmul.f32 %v3417, %v3199
        %v3434 = vmul.f32 %v3418, %v3204
        %v3435 = vmul.f32 %v3419, %v3209
        %v3436 = vmul.f32 %v3420, %v3214
        %v3437 = vmul.f32 %v3421, %v3219
        %3438 = vxpose.xlu0.b32.start [1/16] %v3422, 128
        %3439 = vxpose.xlu0.b32.cont [2/16] %v3423, 128
        %3440 = vxpose.xlu0.b32.cont [3/16] %v3424, 128
        %3441 = vxpose.xlu0.b32.cont [4/16] %v3425, 128
        %3442 = vxpose.xlu0.b32.cont [5/16] %v3426, 128
        %3443 = vxpose.xlu0.b32.cont [6/16] %v3427, 128
        %3444 = vxpose.xlu0.b32.cont [7/16] %v3428, 128
        %3445 = vxpose.xlu0.b32.cont [8/16] %v3429, 128
        %3446 = vxpose.xlu0.b32.cont [9/16] %v3430, 128
        %3447 = vxpose.xlu0.b32.cont [10/16] %v3431, 128
        %3448 = vxpose.xlu0.b32.cont [11/16] %v3432, 128
        %3449 = vxpose.xlu0.b32.cont [12/16] %v3433, 128
        %3450 = vxpose.xlu0.b32.cont [13/16] %v3434, 128
        %3451 = vxpose.xlu0.b32.cont [14/16] %v3435, 128
        %3452 = vxpose.xlu0.b32.cont [15/16] %v3436, 128
        %3453 = vxpose.xlu0.b32.end [16/16] %v3437, 128
        %v3454 = vpop.trf.xlu0
        %v3455 = vpop.trf.xlu0
        %v3456 = vpop.trf.xlu0
        %v3457 = vpop.trf.xlu0
        %v3458 = vpop.trf.xlu0
        %v3459 = vpop.trf.xlu0
        %v3460 = vpop.trf.xlu0
        %v3461 = vpop.trf.xlu0
        %v3462 = vpop.trf.xlu0
        %v3463 = vpop.trf.xlu0
        %v3464 = vpop.trf.xlu0
        %v3465 = vpop.trf.xlu0
        %v3466 = vpop.trf.xlu0
        %v3467 = vpop.trf.xlu0
        %v3468 = vpop.trf.xlu0
        %v3469 = vpop.trf.xlu0
        %3470 = vst [vmem:[%s367] sm:$0x1f] %v3454
        %s3471 = sand.u32 %s227, 1
        %s3472 = scalar_lea.sflag [#allocation3], %s3471
        %s3473 = sand.u32 %s227, 1
        %s3474 = scalar_lea.vmem [#allocation2], %s3473
        %p3475 = scmp.lt.s32.totalorder %s25, 1
        %s3476 = scalar_select %p3475, %s25, 1
        %s3477 = smul.addr %s3476, 8
        %s3478 = scalar_lea.vmem %s10, %s3477
        // Predicated region
        $region57: #{biformer_forward.1} parent=55 // pred_check
          %p3479 = pneg %p237
        $region58: #{biformer_forward.1} parent=55 // pred_check_branch
          %3481 = sbr.rel (%p3479) target = $region60
        $region59: #{biformer_forward.1} parent=55 // pred_region
          %s3483 = ssub.s32 16, 16
          %3484 = vsyncadd %s3472, %s3483
          %s3485 = smul.addr %s25, 16
          %s3486 = scalar_lea.hbm %s9, %s3485
          %s3488 = sshll.u32 %s3474, 4
          %s3489 = int_to_ptr.vmem [resolvable:$true] %s3488
          %3491 = dma.vmem_to_hbm [thread:$0]  %s3489, 16, %s3486, %s3472
        $region60: #{biformer_forward.1} parent=55 // pred_fallthru
          _
        // Predicated region
        $region61: #{biformer_forward.1} parent=55 // pred_check
          %p3492 = pneg %p263
        $region62: #{biformer_forward.1} parent=55 // pred_check_branch
          %3494 = sbr.rel (%p3492) target = $region64
        $region63: #{biformer_forward.1} parent=55 // pred_region
          _
        $region64: #{biformer_forward.1} parent=55 // pred_fallthru
          _
      $region56: #{biformer_forward.1} parent=5 // pred_fallthru
        _
      %p3495 = scmp.le.s32.totalorder 2, %s20
      // Predicated region
      $region65: #{biformer_forward.1} parent=5 // pred_check
        %p3496 = pneg %p3495
      $region66: #{biformer_forward.1} parent=5 // pred_check_branch
        %3498 = sbr.rel (%p3496) target = $region68
      $region67: #{biformer_forward.1} parent=5 // pred_region
        %s3499 = ssub.s32 %s20, 2
        // Predicated region
        $region69: #{biformer_forward.1} parent=67 // pred_check
          %p3500 = pneg %p243
        $region70: #{biformer_forward.1} parent=67 // pred_check_branch
          %3502 = sbr.rel (%p3500) target = $region72
        $region71: #{biformer_forward.1} parent=67 // pred_region
          %s3503 = sand.u32 %s228, 1
          %s3504 = scalar_lea.sflag [#allocation3], %s3503
          %s3505 = sand.u32 %s228, 1
          %s3506 = scalar_lea.vmem [#allocation2], %s3505
          %3507 = dma.done %s3504, 16
        $region72: #{biformer_forward.1} parent=67 // pred_fallthru
          _
        // Predicated region
        $region73: #{biformer_forward.1} parent=67 // pred_check
          %p3508 = pneg %p269
        $region74: #{biformer_forward.1} parent=67 // pred_check_branch
          %3510 = sbr.rel (%p3508) target = $region76
        $region75: #{biformer_forward.1} parent=67 // pred_region
          %p3511 = scmp.lt.s32.totalorder %s26, 1
          %s3512 = scalar_select %p3511, %s26, 1
          %s3513 = smul.addr %s3512, 8
          %s3514 = scalar_lea.vmem %s10, %s3513
        $region76: #{biformer_forward.1} parent=67 // pred_fallthru
          _
      $region68: #{biformer_forward.1} parent=5 // pred_fallthru
        _
    $region6: #{biformer_forward.1} parent=1 // loop_footer
      %s24 = sadd.s32 1, %s20
    $region7: #{biformer_forward.1} parent=1 // loop_footer_branch
      %19 = sbr.rel target = $region3
    $region8: #{biformer_forward.1} parent=1 // loop_exit
      _
    %3515 = vsyncpa [#allocation3], 1
    %s3516 = scalar_lea.sflag [#allocation3], 1
    %3517 = vsyncpa %s3516, 1

</llo_original>
